<compile_context>
chip_gen: v6e
topology: v6e:2x2x1
jax: 0.10.0
libtpu: 0.0.40
codegen_flags: <defaults>
</compile_context>

<pallas_src>
import jax
import jax.numpy as jnp
from jax.experimental import pallas as pl
from jax.experimental.pallas import tpu as pltpu


def _round_up(x, m):
    return ((x + m - 1) // m) * m


def _cdiv(a, b):
    return -(-a // b)


def _tensorcores_per_chip():
    """2 on v7x (two TensorCores per chip), 1 on v5e/v6e (and unknowns)."""
    try:
        kind = jax.devices()[0].device_kind.lower().replace(" ", "")
    except Exception:
        return 1
    return 2 if ("v7" in kind or "tpu7" in kind) else 1


def critic_kernel(x_ref, w1_ref, w2_ref, bias_ref, q_ref):
    f1 = w1_ref.shape[1]
    f2 = w2_ref.shape[1]

    bias = bias_ref[...]            # (4, max(F1, F2)) f32, resident block
    b1 = bias[0:1, :f1]             # fc1 bias
    b2 = bias[1:2, :f2]             # fc2 bias
    wq = bias[2:3, :f2]             # q-head weight row
    bq = bias[3:4, 0:1]             # q-head bias, (1, 1)

    # Layers 1 & 2: bf16 MXU matmuls with f32 accumulation; elementwise
    # (bias add, ReLU) stays f32 (v5e has no bf16 VPU).
    h1 = jnp.dot(x_ref[...], w1_ref[...],
                 preferred_element_type=jnp.float32) + b1
    h1 = jnp.maximum(h1, 0.0)

    h2 = jnp.dot(h1.astype(jnp.bfloat16), w2_ref[...],
                 preferred_element_type=jnp.float32) + b2
    h2 = jnp.maximum(h2, 0.0)

    # 256 -> 1 head: VPU multiply + XLU lane reduce (avoids an N=1 MXU
    # matmul); written lane-dense as a (1, tb) row of the (1, B_pad) output.
    q = jnp.sum(h2 * wq, axis=-1)                       # (tb,) f32
    q_ref[...] = (q[None, :] + bq).astype(q_ref.dtype)


def critic_forward(state, action, params, *, tile_b=512):
    """q = W_q @ relu(W2 @ relu(W1 @ [state, action] + b1) + b2) + b_q."""
    assert tile_b % 128 == 0, "tile_b must be a multiple of 128"
    w1, b1, w2, b2, wq, bq = params

    B, Ds = state.shape
    Da = action.shape[1]
    D = Ds + Da
    F1 = w1.shape[1]
    F2 = w2.shape[1]
    assert w1.shape[0] == D

    # ---- generation-aware batch tiling ----------------------------------
    n_tc = _tensorcores_per_chip()
    B128 = _round_up(B, 128)        # keep the (1, B_pad) output lane-dense
    if B128 <= 128 or (n_tc == 1 and B128 <= tile_b):
        # Single TensorCore (or tiny batch): the grid is a serial loop, so
        # one grid step is strictly cheaper than splitting.
        nsteps = 1
        tb = B128
    else:
        # Keep step count a multiple of the TC count (even split on v7x),
        # with per-step tiles of at most tile_b rows.
        nsteps = n_tc * _cdiv(B128, n_tc * tile_b)
        tb = _round_up(_cdiv(B, nsteps), 128)
    B_pad = nsteps * tb

    # ---- wrapper-side operand packing (tiny, one-time per call) ---------
    # Fused concat: x = [state, action], zero-padded in both dims; zero
    # padding keeps the math exact. bf16 cast happens here, not in-kernel.
    D_pad = _round_up(D, 16)        # bf16 sublane alignment for W1's K dim
    x = jnp.concatenate([state, action], axis=1)
    x = jnp.pad(x, ((0, B_pad - B), (0, D_pad - D))).astype(jnp.bfloat16)
    w1_b = jnp.pad(w1, ((0, D_pad - D), (0, 0))).astype(jnp.bfloat16)
    w2_b = w2.astype(jnp.bfloat16)

    # Pack all small f32 params into one (4, Fm) block: rows = b1, b2, wq,
    # and bq stored at [3, 0].
    Fm = max(F1, F2)
    bias_pack = jnp.zeros((4, Fm), jnp.float32)
    bias_pack = bias_pack.at[0, :F1].set(b1.reshape(F1))
    bias_pack = bias_pack.at[1, :F2].set(b2.reshape(F2))
    bias_pack = bias_pack.at[2, :F2].set(wq.reshape(F2))
    bias_pack = bias_pack.at[3, 0].set(jnp.reshape(bq, ()))

    flops = 2 * B_pad * (D_pad * F1 + F1 * F2 + F2)
    bytes_accessed = int(x.size * 2 + w1_b.size * 2 + w2_b.size * 2
                         + bias_pack.size * 4 + B_pad * 4)

    out = pl.pallas_call(
        critic_kernel,
        out_shape=jax.ShapeDtypeStruct((1, B_pad), jnp.float32),
        grid_spec=pltpu.PrefetchScalarGridSpec(
            num_scalar_prefetch=0,
            grid=(nsteps,),
            in_specs=[
                # Batch-tiled activations.
                pl.BlockSpec((tb, D_pad), lambda i: (i, 0)),
                # Weights / packed biases: constant block index -> fetched
                # once and held resident across the grid (footprint << VMEM).
                pl.BlockSpec((D_pad, F1), lambda i: (0, 0)),   # W1 (bf16)
                pl.BlockSpec((F1, F2), lambda i: (0, 0)),      # W2 (bf16)
                pl.BlockSpec((4, Fm), lambda i: (0, 0)),       # b1/b2/wq/bq
            ],
            # Lane-dense output: each grid step writes its own (1, tb) slice
            # of the (1, B_pad) row.
            out_specs=pl.BlockSpec((1, tb), lambda i: (0, i)),
        ),
        compiler_params=pltpu.CompilerParams(
            dimension_semantics=("parallel",)),
        cost_estimate=pl.CostEstimate(
            flops=flops, transcendentals=0, bytes_accessed=bytes_accessed),
    )(x, w1_b, w2_b, bias_pack)

    # Padded tail rows hold garbage (relu(b1) propagated) - slice them off.
    return out[0, :B].reshape(B, 1)


def init_params(key, in_dim, n_actions, fc1_dims=256, fc2_dims=256):
    """Synthetic params matching nn.Linear fan-in uniform init. Weights are
    stored (in, out) = transpose of PyTorch's (out, in); wq is the (fc2,)
    q-head row, bq a scalar."""
    d = in_dim + n_actions
    ks = jax.random.split(key, 6)
    s1 = 1.0 / jnp.sqrt(d)
    s2 = 1.0 / jnp.sqrt(fc1_dims)
    s3 = 1.0 / jnp.sqrt(fc2_dims)
    w1 = jax.random.uniform(ks[0], (d, fc1_dims), jnp.float32, -s1, s1)
    b1 = jax.random.uniform(ks[1], (fc1_dims,), jnp.float32, -s1, s1)
    w2 = jax.random.uniform(ks[2], (fc1_dims, fc2_dims), jnp.float32, -s2, s2)
    b2 = jax.random.uniform(ks[3], (fc2_dims,), jnp.float32, -s2, s2)
    wq = jax.random.uniform(ks[4], (fc2_dims,), jnp.float32, -s3, s3)
    bq = jax.random.uniform(ks[5], (), jnp.float32, -s3, s3)
    return (w1, b1, w2, b2, wq, bq)


if __name__ == "__main__":
    # NOTE: optimizer / checkpoint save-load / device placement from the
    # PyTorch module are training-state & I/O, not part of forward().
    key = jax.random.PRNGKey(0)
    k_state, k_action, k_param = jax.random.split(key, 3)

    batch = 200          # ragged on purpose: exercises padding
    input_dims = (8,)    # state feature dim
    n_actions = 4
    fc1_dims = 256
    fc2_dims = 256

    state = jax.random.normal(k_state, (batch, input_dims[0]), jnp.float32)
    action = jax.random.normal(k_action, (batch, n_actions), jnp.float32)
    params = init_params(k_param, input_dims[0], n_actions, fc1_dims, fc2_dims)

    # Pure-JAX f32 reference (same math as the PyTorch forward). The kernel
    # uses bf16 MXU inputs with f32 accumulation -> relaxed tolerance.
    w1, b1, w2, b2, wq, bq = params
    x = jnp.concatenate([state, action], axis=1)
    h1 = jnp.maximum(x @ w1 + b1, 0.0)
    h2 = jnp.maximum(h1 @ w2 + b2, 0.0)
    q_ref = (h2 @ wq + bq)[:, None]

    # Medium batch (single grid step on v5e/v6e, even 2-way split on v7x).
    q = jax.block_until_ready(critic_forward(state, action, params))
    assert q.shape == (batch, 1)
    assert jnp.allclose(q, q_ref, atol=5e-2, rtol=5e-2), (
        float(jnp.max(jnp.abs(q - q_ref))))

    # Tiny batch path (pads to 128 output lanes, single grid step).
    q_small = jax.block_until_ready(
        critic_forward(state[:5], action[:5], params))
    assert q_small.shape == (5, 1)
    assert jnp.allclose(q_small, q_ref[:5], atol=5e-2, rtol=5e-2), (
        float(jnp.max(jnp.abs(q_small - q_ref[:5]))))

    print("KERNEL_OK")
</pallas_src>

<mosaic_0001>
module attributes {stable_mosaic.version = 11 : i64} {
  func.func @critic_kernel(%arg0: i32, %arg1: memref<256x16xbf16, #tpu.memory_space<vmem>>, %arg2: memref<16x256xbf16, #tpu.memory_space<vmem>>, %arg3: memref<256x256xbf16, #tpu.memory_space<vmem>>, %arg4: memref<4x256xf32, #tpu.memory_space<vmem>>, %arg5: memref<1x256xf32, #tpu.memory_space<vmem>>) attributes {dimension_semantics = [#tpu.dimension_semantics<parallel>], iteration_bounds = array<i64: 1>, scalar_prefetch = 0 : i64, scratch_operands = 0 : i64, tpu.core_type = #tpu.core_type<tc>, window_params = [{transform_indices = @transform_0, window_bounds = array<i64: 256, 16>}, {pipeline_mode = #tpu.pipeline_mode<synchronous>, transform_indices = @transform_1, window_bounds = array<i64: 16, 256>}, {pipeline_mode = #tpu.pipeline_mode<synchronous>, transform_indices = @transform_2, window_bounds = array<i64: 256, 256>}, {pipeline_mode = #tpu.pipeline_mode<synchronous>, transform_indices = @transform_3, window_bounds = array<i64: 4, 256>}, {transform_indices = @transform_4, window_bounds = array<i64: 1, 256>}]} {
    %c0 = arith.constant 0 : index
    %c0_0 = arith.constant 0 : index
    %0 = vector.load %arg4[%c0, %c0_0] : memref<4x256xf32, #tpu.memory_space<vmem>>, vector<4x256xf32>
    %1 = vector.extract_strided_slice %0 {offsets = [0, 0], sizes = [1, 256], strides = [1, 1]} : vector<4x256xf32> to vector<1x256xf32>
    %2 = vector.extract_strided_slice %0 {offsets = [1, 0], sizes = [1, 256], strides = [1, 1]} : vector<4x256xf32> to vector<1x256xf32>
    %3 = vector.extract_strided_slice %0 {offsets = [2, 0], sizes = [1, 256], strides = [1, 1]} : vector<4x256xf32> to vector<1x256xf32>
    %4 = vector.extract_strided_slice %0 {offsets = [3, 0], sizes = [1, 1], strides = [1, 1]} : vector<4x256xf32> to vector<1x1xf32>
    %c0_1 = arith.constant 0 : index
    %c0_2 = arith.constant 0 : index
    %5 = vector.load %arg1[%c0_1, %c0_2] : memref<256x16xbf16, #tpu.memory_space<vmem>>, vector<256x16xbf16>
    %c0_3 = arith.constant 0 : index
    %c0_4 = arith.constant 0 : index
    %6 = vector.load %arg2[%c0_3, %c0_4] : memref<16x256xbf16, #tpu.memory_space<vmem>>, vector<16x256xbf16>
    %cst = arith.constant dense<0.000000e+00> : vector<256x256xf32>
    %7 = tpu.matmul %5, %6, %cst {dimension_numbers = #tpu.dot_dimension_numbers<[1], [0], [0], [1], [0, 0, 1, 1], [], []>} : vector<256x16xbf16>, vector<16x256xbf16>, vector<256x256xf32> -> vector<256x256xf32>
    %8 = vector.broadcast %1 : vector<1x256xf32> to vector<256x256xf32>
    %9 = arith.addf %7, %8 : vector<256x256xf32>
    %cst_5 = arith.constant 0.000000e+00 : f32
    %10 = vector.broadcast %cst_5 : f32 to vector<256x256xf32>
    %11 = arith.maximumf %9, %10 : vector<256x256xf32>
    %12 = arith.truncf %11 : vector<256x256xf32> to vector<256x256xbf16>
    %c0_6 = arith.constant 0 : index
    %c0_7 = arith.constant 0 : index
    %13 = vector.load %arg3[%c0_6, %c0_7] : memref<256x256xbf16, #tpu.memory_space<vmem>>, vector<256x256xbf16>
    %cst_8 = arith.constant dense<0.000000e+00> : vector<256x256xf32>
    %14 = tpu.matmul %12, %13, %cst_8 {dimension_numbers = #tpu.dot_dimension_numbers<[1], [0], [0], [1], [0, 0, 1, 1], [], []>} : vector<256x256xbf16>, vector<256x256xbf16>, vector<256x256xf32> -> vector<256x256xf32>
    %15 = vector.broadcast %2 : vector<1x256xf32> to vector<256x256xf32>
    %16 = arith.addf %14, %15 : vector<256x256xf32>
    %cst_9 = arith.constant 0.000000e+00 : f32
    %17 = vector.broadcast %cst_9 : f32 to vector<256x256xf32>
    %18 = arith.maximumf %16, %17 : vector<256x256xf32>
    %19 = vector.broadcast %3 : vector<1x256xf32> to vector<256x256xf32>
    %20 = arith.mulf %18, %19 : vector<256x256xf32>
    %cst_10 = arith.constant dense<0.000000e+00> : vector<256xf32>
    %21 = vector.multi_reduction <add>, %20, %cst_10 [1] : vector<256x256xf32> to vector<256xf32>
    %22 = vector.shape_cast %21 : vector<256xf32> to vector<1x256xf32>
    %23 = vector.broadcast %4 : vector<1x1xf32> to vector<1x256xf32>
    %24 = arith.addf %22, %23 : vector<1x256xf32>
    %c0_11 = arith.constant 0 : index
    %c0_12 = arith.constant 0 : index
    %25 = vector.load %arg5[%c0_11, %c0_12] : memref<1x256xf32, #tpu.memory_space<vmem>>, vector<1x256xf32>
    tpu.vector_store %arg5[%c0_11, %c0_12], %24 {strides = array<i32>} : memref<1x256xf32, #tpu.memory_space<vmem>>, vector<1x256xf32>,
    return
  }
  func.func @transform_0(%arg0: i32) -> (i32, i32) {
    %c0_i32 = arith.constant 0 : i32
    %c0_i32_0 = arith.constant 0 : i32
    return %arg0, %c0_i32 : i32, i32
  }
  func.func @transform_1(%arg0: i32) -> (i32, i32) {
    %c0_i32 = arith.constant 0 : i32
    %c0_i32_0 = arith.constant 0 : i32
    %c0_i32_1 = arith.constant 0 : i32
    return %c0_i32, %c0_i32_0 : i32, i32
  }
  func.func @transform_2(%arg0: i32) -> (i32, i32) {
    %c0_i32 = arith.constant 0 : i32
    %c0_i32_0 = arith.constant 0 : i32
    %c0_i32_1 = arith.constant 0 : i32
    return %c0_i32, %c0_i32_0 : i32, i32
  }
  func.func @transform_3(%arg0: i32) -> (i32, i32) {
    %c0_i32 = arith.constant 0 : i32
    %c0_i32_0 = arith.constant 0 : i32
    %c0_i32_1 = arith.constant 0 : i32
    return %c0_i32, %c0_i32_0 : i32, i32
  }
  func.func @transform_4(%arg0: i32) -> (i32, i32) {
    %c0_i32 = arith.constant 0 : i32
    %c0_i32_0 = arith.constant 0 : i32
    return %c0_i32, %arg0 : i32, i32
  }
}

</mosaic_0001>

<llo_original>
// kernel: tpu_custom_call.1
$region0: #{tpu_custom_call.1}
  #allocation0 [shape = 'u32[]', space=smem, size = 0x4, offset = 0x4, fixed_abs, tag = 'smem constant byte address 0x4 - core index']
  #allocation1 [shape = 'u32[144,128]{1,0:T(1,128)}', space=vmem, size = 0x12000, scoped, tag = 'internal scratch']
  %s0 = inlined_call_operand.vmem [shape: bf16[256,16], index: 0, kind: input, shape index: {}]
  %s1 = inlined_call_operand.vmem [shape: bf16[16,256], index: 1, kind: input, shape index: {}]
  %s2 = inlined_call_operand.hbm [shape: bf16[256,256], index: 2, kind: input, shape index: {}]
  %s3 = inlined_call_operand.vmem [shape: f32[4,256], index: 3, kind: input, shape index: {}]
  %s4 = inlined_call_operand.hbm [shape: f32[1,256], index: 4, kind: output, shape index: {}]
  %s5 = sld [smem:[#allocation0]]
  $region30: #{tpu_custom_call.1} parent=0
    _
  %s7 = ssub.s32 1, %s5
  %s8 = scalar_select 0, %s7, %s5
  $region1: #{tpu_custom_call.1} parent=0
    #allocation2 [shape = 'u8[131072]{0}', space=vmem, size = 0x20000, scoped, tag = 'input window, operand 2, single buffered']
    #allocation3 [shape = 's32[1]{0}', space=sflag, size = 0x4, scoped, tag = 'scoped memory for tpu_custom_call.1']
    #allocation4 [shape = 's32[1]{0}', space=sflag, size = 0x4, scoped, tag = 'scoped memory for tpu_custom_call.1']
    #allocation5 [shape = 'u8[1024]{0}', space=vmem, size = 0x400, scoped, tag = 'output window, operand 0, single buffered']
    %9 = vsyncpa [#allocation3], 0
    %10 = vsyncpa [#allocation4], 0
    // Predicated region
    $region2: #{tpu_custom_call.1} parent=1 // pred_check
      _
    $region3: #{tpu_custom_call.1} parent=1 // pred_check_branch
      %12 = sbr.rel (0) target = $region5
    $region4: #{tpu_custom_call.1} parent=1 // pred_region
      _
    $region5: #{tpu_custom_call.1} parent=1 // pred_fallthru
      _
    // Predicated region
    $region6: #{tpu_custom_call.1} parent=1 // pred_check
      _
    $region7: #{tpu_custom_call.1} parent=1 // pred_check_branch
      %14 = sbr.rel (0) target = $region9
    $region8: #{tpu_custom_call.1} parent=1 // pred_region
      _
    $region9: #{tpu_custom_call.1} parent=1 // pred_fallthru
      _
    // Predicated region
    $region10: #{tpu_custom_call.1} parent=1 // pred_check
      _
    $region11: #{tpu_custom_call.1} parent=1 // pred_check_branch
      %16 = sbr.rel (0) target = $region13
    $region12: #{tpu_custom_call.1} parent=1 // pred_region
      %s18 = ssub.s32 4096, 4096
      %19 = vsyncadd [#allocation3], %s18
      %s20 = sshll.u32 [#allocation2], 4
      %s21 = int_to_ptr.vmem [resolvable:$true] %s20
      %26 = dma.hbm_to_vmem [thread:$0]  %s2, 4096, %s21, [#allocation3], 128, 128, 8
    $region13: #{tpu_custom_call.1} parent=1 // pred_fallthru
      _
    // Predicated region
    $region14: #{tpu_custom_call.1} parent=1 // pred_check
      _
    $region15: #{tpu_custom_call.1} parent=1 // pred_check_branch
      %28 = sbr.rel (0) target = $region17
    $region16: #{tpu_custom_call.1} parent=1 // pred_region
      _
    $region17: #{tpu_custom_call.1} parent=1 // pred_fallthru
      _
    // Predicated region
    $region18: #{tpu_custom_call.1} parent=1 // pred_check
      _
    $region19: #{tpu_custom_call.1} parent=1 // pred_check_branch
      %30 = sbr.rel (0) target = $region21
    $region20: #{tpu_custom_call.1} parent=1 // pred_region
      %31 = dma.done [#allocation3], 4096
    $region21: #{tpu_custom_call.1} parent=1 // pred_fallthru
      _
    %v33 = vld [vmem:[%s3] sm:$0xff]
    %v34 = vld [vmem:[%s0] sm:$0xf]
    %v35 = vld [vmem:[%s0 + $0x4] sm:$0xf]
    %v36 = vld [vmem:[%s0 + $0x8] sm:$0xf]
    %v37 = vld [vmem:[%s0 + $0xc] sm:$0xf]
    %v38 = vld [vmem:[%s0 + $0x10] sm:$0xf]
    %v39 = vld [vmem:[%s0 + $0x14] sm:$0xf]
    %v40 = vld [vmem:[%s0 + $0x18] sm:$0xf]
    %v41 = vld [vmem:[%s0 + $0x1c] sm:$0xf]
    %v42 = vld [vmem:[%s0 + $0x20] sm:$0xf]
    %v43 = vld [vmem:[%s0 + $0x24] sm:$0xf]
    %v44 = vld [vmem:[%s0 + $0x28] sm:$0xf]
    %v45 = vld [vmem:[%s0 + $0x2c] sm:$0xf]
    %v46 = vld [vmem:[%s0 + $0x30] sm:$0xf]
    %v47 = vld [vmem:[%s0 + $0x34] sm:$0xf]
    %v48 = vld [vmem:[%s0 + $0x38] sm:$0xf]
    %v49 = vld [vmem:[%s0 + $0x3c] sm:$0xf]
    %v50 = vld [vmem:[%s0 + $0x40] sm:$0xf]
    %v51 = vld [vmem:[%s0 + $0x44] sm:$0xf]
    %v52 = vld [vmem:[%s0 + $0x48] sm:$0xf]
    %v53 = vld [vmem:[%s0 + $0x4c] sm:$0xf]
    %v54 = vld [vmem:[%s0 + $0x50] sm:$0xf]
    %v55 = vld [vmem:[%s0 + $0x54] sm:$0xf]
    %v56 = vld [vmem:[%s0 + $0x58] sm:$0xf]
    %v57 = vld [vmem:[%s0 + $0x5c] sm:$0xf]
    %v58 = vld [vmem:[%s0 + $0x60] sm:$0xf]
    %v59 = vld [vmem:[%s0 + $0x64] sm:$0xf]
    %v60 = vld [vmem:[%s0 + $0x68] sm:$0xf]
    %v61 = vld [vmem:[%s0 + $0x6c] sm:$0xf]
    %v62 = vld [vmem:[%s0 + $0x70] sm:$0xf]
    %v63 = vld [vmem:[%s0 + $0x74] sm:$0xf]
    %v64 = vld [vmem:[%s0 + $0x78] sm:$0xf]
    %v65 = vld [vmem:[%s0 + $0x7c] sm:$0xf]
    %v66 = vld [vmem:[%s1] sm:$0xff]
    %v67 = vld [vmem:[%s1 + $0x8] sm:$0xff]
    %v69 = vlaneseq
    %v70 = vshrl.u32 %v69, 7
    %v71 = vsub.s32 0, %v70
    %v72 = vrot.slane %v33, %v71
    %v73 = vlaneseq
    %v74 = vshrl.u32 %v73, 7
    %v75 = vsub.s32 4, %v74
    %v76 = vrot.slane %v33, %v75
    %v79 = vlaneseq
    %v80 = vshrl.u32 %v79, 7
    %v81 = vsub.s32 0, %v80
    %v82 = vrot.slane %v72, %v81
    %v83 = vlaneseq
    %v84 = vshrl.u32 %v83, 7
    %v85 = vsub.s32 0, %v84
    %v86 = vrot.slane %v76, %v85
    %v119 = vunpack.c.l.b16 %v34
    %v120 = vunpack.c.l.b16 %v35
    %v121 = vunpack.c.l.b16 %v36
    %v122 = vunpack.c.l.b16 %v37
    %v123 = vunpack.c.l.b16 %v38
    %v124 = vunpack.c.l.b16 %v39
    %v125 = vunpack.c.l.b16 %v40
    %v126 = vunpack.c.l.b16 %v41
    %v127 = vunpack.c.l.b16 %v42
    %v128 = vunpack.c.l.b16 %v43
    %v129 = vunpack.c.l.b16 %v44
    %v130 = vunpack.c.l.b16 %v45
    %v131 = vunpack.c.l.b16 %v46
    %v132 = vunpack.c.l.b16 %v47
    %v133 = vunpack.c.l.b16 %v48
    %v134 = vunpack.c.l.b16 %v49
    %v135 = vunpack.c.l.b16 %v50
    %v136 = vunpack.c.l.b16 %v51
    %v137 = vunpack.c.l.b16 %v52
    %v138 = vunpack.c.l.b16 %v53
    %v139 = vunpack.c.l.b16 %v54
    %v140 = vunpack.c.l.b16 %v55
    %v141 = vunpack.c.l.b16 %v56
    %v142 = vunpack.c.l.b16 %v57
    %v143 = vunpack.c.l.b16 %v58
    %v144 = vunpack.c.l.b16 %v59
    %v145 = vunpack.c.l.b16 %v60
    %v146 = vunpack.c.l.b16 %v61
    %v147 = vunpack.c.l.b16 %v62
    %v148 = vunpack.c.l.b16 %v63
    %v149 = vunpack.c.l.b16 %v64
    %v150 = vunpack.c.l.b16 %v65
    %v151 = vpack.c.b16 %v120, %v119
    %v152 = vpack.c.b16 %v122, %v121
    %v153 = vpack.c.b16 %v124, %v123
    %v154 = vpack.c.b16 %v126, %v125
    %v155 = vpack.c.b16 %v128, %v127
    %v156 = vpack.c.b16 %v130, %v129
    %v157 = vpack.c.b16 %v132, %v131
    %v158 = vpack.c.b16 %v134, %v133
    %v159 = vpack.c.b16 %v136, %v135
    %v160 = vpack.c.b16 %v138, %v137
    %v161 = vpack.c.b16 %v140, %v139
    %v162 = vpack.c.b16 %v142, %v141
    %v163 = vpack.c.b16 %v144, %v143
    %v164 = vpack.c.b16 %v146, %v145
    %v165 = vpack.c.b16 %v148, %v147
    %v166 = vpack.c.b16 %v150, %v149
    %v169 = vunpack.c.l.b16 %v66
    %v170 = vunpack.c.h.b16 %v66
    %v171 = vunpack.c.l.b16 %v67
    %v172 = vunpack.c.h.b16 %v67
    %v173 = vpack.c.b16 %v171, %v169
    %v174 = vpack.c.b16 %v172, %v170
    %vm177 = vcmask 130048
    %v179 = vsel %vm177, %v151, 0
    %v182 = vsel %vm177, %v152, 0
    %v185 = vsel %vm177, %v153, 0
    %v188 = vsel %vm177, %v154, 0
    %v191 = vsel %vm177, %v155, 0
    %v194 = vsel %vm177, %v156, 0
    %v197 = vsel %vm177, %v157, 0
    %v200 = vsel %vm177, %v158, 0
    %v203 = vsel %vm177, %v159, 0
    %v206 = vsel %vm177, %v160, 0
    %v209 = vsel %vm177, %v161, 0
    %v212 = vsel %vm177, %v162, 0
    %v215 = vsel %vm177, %v163, 0
    %v218 = vsel %vm177, %v164, 0
    %v221 = vsel %vm177, %v165, 0
    %v224 = vsel %vm177, %v166, 0
    %226 = vmatprep.subr.bf16.mxu0 0
    %227 = vmatpush1.bf16.msra.mxu0 0
    %228 = vmatprep.subr.bf16.mxu0 0
    %229 = vmatpush1.bf16.msra.mxu0 0
    %230 = vmatprep.subr.bf16.mxu0 0
    %231 = vmatpush1.bf16.msra.mxu0 0
    %232 = vmatprep.subr.bf16.mxu0 0
    %233 = vmatpush1.bf16.msra.mxu0 0
    %234 = vmatprep.subr.bf16.mxu0 0
    %235 = vmatpush1.bf16.msra.mxu0 0
    %236 = vmatprep.subr.bf16.mxu0 0
    %237 = vmatpush1.bf16.msra.mxu0 0
    %238 = vmatprep.subr.bf16.mxu0 0
    %239 = vmatpush1.bf16.msra.mxu0 0
    %240 = vmatprep.subr.bf16.mxu0 %v174
    %241 = vmatpush1.bf16.msra.mxu0 %v173
    %242 = vmatprep.subr.bf16.mxu0 0
    %243 = vmatpush2.bf16.msra.mxu0 0
    %244 = vmatprep.subr.bf16.mxu0 0
    %245 = vmatpush2.bf16.msra.mxu0 0
    %246 = vmatprep.subr.bf16.mxu0 0
    %247 = vmatpush2.bf16.msra.mxu0 0
    %248 = vmatprep.subr.bf16.mxu0 0
    %249 = vmatpush2.bf16.msra.mxu0 0
    %250 = vmatprep.subr.bf16.mxu0 0
    %251 = vmatpush2.bf16.msra.mxu0 0
    %252 = vmatprep.subr.bf16.mxu0 0
    %253 = vmatpush2.bf16.msra.mxu0 0
    %254 = vmatprep.subr.bf16.mxu0 0
    %255 = vmatpush2.bf16.msra.mxu0 0
    %256 = vmatprep.subr.bf16.mxu0 0
    %257 = vmatpush2.bf16.msra.mxu0 0
    %258 = vmatprep.mubr.bf16.mxu0 0
    %259 = vmatmul.mubr.bf16.gmra.mxu0 %v179
    %v260 = vpop.f32.mrf.mxu0
    %v261 = vadd.f32 %v82, %v260
    %v262 = vpop.f32.mrf.mxu0
    %v263 = vadd.f32 %v86, %v262
    %v264 = vpop.f32.mrf.mxu0
    %v265 = vadd.f32 %v82, %v264
    %v266 = vpop.f32.mrf.mxu0
    %v267 = vadd.f32 %v86, %v266
    %268 = vmatprep.mubr.bf16.mxu0 0
    %269 = vmatmul.mubr.bf16.gmra.mxu0 %v182
    %v270 = vpop.f32.mrf.mxu0
    %v271 = vadd.f32 %v82, %v270
    %v272 = vpop.f32.mrf.mxu0
    %v273 = vadd.f32 %v86, %v272
    %v274 = vpop.f32.mrf.mxu0
    %v275 = vadd.f32 %v82, %v274
    %v276 = vpop.f32.mrf.mxu0
    %v277 = vadd.f32 %v86, %v276
    %278 = vmatprep.mubr.bf16.mxu0 0
    %279 = vmatmul.mubr.bf16.gmra.mxu0 %v185
    %v280 = vpop.f32.mrf.mxu0
    %v281 = vadd.f32 %v82, %v280
    %v282 = vpop.f32.mrf.mxu0
    %v283 = vadd.f32 %v86, %v282
    %v284 = vpop.f32.mrf.mxu0
    %v285 = vadd.f32 %v82, %v284
    %v286 = vpop.f32.mrf.mxu0
    %v287 = vadd.f32 %v86, %v286
    %288 = vmatprep.mubr.bf16.mxu0 0
    %289 = vmatmul.mubr.bf16.gmra.mxu0 %v188
    %v290 = vpop.f32.mrf.mxu0
    %v291 = vadd.f32 %v82, %v290
    %v292 = vpop.f32.mrf.mxu0
    %v293 = vadd.f32 %v86, %v292
    %v294 = vpop.f32.mrf.mxu0
    %v295 = vadd.f32 %v82, %v294
    %v296 = vpop.f32.mrf.mxu0
    %v297 = vadd.f32 %v86, %v296
    %298 = vmatprep.mubr.bf16.mxu0 0
    %299 = vmatmul.mubr.bf16.gmra.mxu0 %v191
    %v300 = vpop.f32.mrf.mxu0
    %v301 = vadd.f32 %v82, %v300
    %v302 = vpop.f32.mrf.mxu0
    %v303 = vadd.f32 %v86, %v302
    %v304 = vpop.f32.mrf.mxu0
    %v305 = vadd.f32 %v82, %v304
    %v306 = vpop.f32.mrf.mxu0
    %v307 = vadd.f32 %v86, %v306
    %308 = vmatprep.mubr.bf16.mxu0 0
    %309 = vmatmul.mubr.bf16.gmra.mxu0 %v194
    %v310 = vpop.f32.mrf.mxu0
    %v311 = vadd.f32 %v82, %v310
    %v312 = vpop.f32.mrf.mxu0
    %v313 = vadd.f32 %v86, %v312
    %v314 = vpop.f32.mrf.mxu0
    %v315 = vadd.f32 %v82, %v314
    %v316 = vpop.f32.mrf.mxu0
    %v317 = vadd.f32 %v86, %v316
    %318 = vmatprep.mubr.bf16.mxu0 0
    %319 = vmatmul.mubr.bf16.gmra.mxu0 %v197
    %v320 = vpop.f32.mrf.mxu0
    %v321 = vadd.f32 %v82, %v320
    %v322 = vpop.f32.mrf.mxu0
    %v323 = vadd.f32 %v86, %v322
    %v324 = vpop.f32.mrf.mxu0
    %v325 = vadd.f32 %v82, %v324
    %v326 = vpop.f32.mrf.mxu0
    %v327 = vadd.f32 %v86, %v326
    %328 = vmatprep.mubr.bf16.mxu0 0
    %329 = vmatmul.mubr.bf16.gmra.mxu0 %v200
    %v330 = vpop.f32.mrf.mxu0
    %v331 = vadd.f32 %v82, %v330
    %v332 = vpop.f32.mrf.mxu0
    %v333 = vadd.f32 %v86, %v332
    %v334 = vpop.f32.mrf.mxu0
    %v335 = vadd.f32 %v82, %v334
    %v336 = vpop.f32.mrf.mxu0
    %v337 = vadd.f32 %v86, %v336
    %338 = vmatprep.mubr.bf16.mxu0 0
    %339 = vmatmul.mubr.bf16.gmra.mxu0 %v203
    %v340 = vpop.f32.mrf.mxu0
    %v341 = vadd.f32 %v82, %v340
    %v342 = vpop.f32.mrf.mxu0
    %v343 = vadd.f32 %v86, %v342
    %v344 = vpop.f32.mrf.mxu0
    %v345 = vadd.f32 %v82, %v344
    %v346 = vpop.f32.mrf.mxu0
    %v347 = vadd.f32 %v86, %v346
    %348 = vmatprep.mubr.bf16.mxu0 0
    %349 = vmatmul.mubr.bf16.gmra.mxu0 %v206
    %v350 = vpop.f32.mrf.mxu0
    %v351 = vadd.f32 %v82, %v350
    %v352 = vpop.f32.mrf.mxu0
    %v353 = vadd.f32 %v86, %v352
    %v354 = vpop.f32.mrf.mxu0
    %v355 = vadd.f32 %v82, %v354
    %v356 = vpop.f32.mrf.mxu0
    %v357 = vadd.f32 %v86, %v356
    %358 = vmatprep.mubr.bf16.mxu0 0
    %359 = vmatmul.mubr.bf16.gmra.mxu0 %v209
    %v360 = vpop.f32.mrf.mxu0
    %v361 = vadd.f32 %v82, %v360
    %v362 = vpop.f32.mrf.mxu0
    %v363 = vadd.f32 %v86, %v362
    %v364 = vpop.f32.mrf.mxu0
    %v365 = vadd.f32 %v82, %v364
    %v366 = vpop.f32.mrf.mxu0
    %v367 = vadd.f32 %v86, %v366
    %368 = vmatprep.mubr.bf16.mxu0 0
    %369 = vmatmul.mubr.bf16.gmra.mxu0 %v212
    %v370 = vpop.f32.mrf.mxu0
    %v371 = vadd.f32 %v82, %v370
    %v372 = vpop.f32.mrf.mxu0
    %v373 = vadd.f32 %v86, %v372
    %v374 = vpop.f32.mrf.mxu0
    %v375 = vadd.f32 %v82, %v374
    %v376 = vpop.f32.mrf.mxu0
    %v377 = vadd.f32 %v86, %v376
    %378 = vmatprep.mubr.bf16.mxu0 0
    %379 = vmatmul.mubr.bf16.gmra.mxu0 %v215
    %v380 = vpop.f32.mrf.mxu0
    %v381 = vadd.f32 %v82, %v380
    %v382 = vpop.f32.mrf.mxu0
    %v383 = vadd.f32 %v86, %v382
    %v384 = vpop.f32.mrf.mxu0
    %v385 = vadd.f32 %v82, %v384
    %v386 = vpop.f32.mrf.mxu0
    %v387 = vadd.f32 %v86, %v386
    %388 = vmatprep.mubr.bf16.mxu0 0
    %389 = vmatmul.mubr.bf16.gmra.mxu0 %v218
    %v390 = vpop.f32.mrf.mxu0
    %v391 = vadd.f32 %v82, %v390
    %v392 = vpop.f32.mrf.mxu0
    %v393 = vadd.f32 %v86, %v392
    %v394 = vpop.f32.mrf.mxu0
    %v395 = vadd.f32 %v82, %v394
    %v396 = vpop.f32.mrf.mxu0
    %v397 = vadd.f32 %v86, %v396
    %398 = vmatprep.mubr.bf16.mxu0 0
    %399 = vmatmul.mubr.bf16.gmra.mxu0 %v221
    %v400 = vpop.f32.mrf.mxu0
    %v401 = vadd.f32 %v82, %v400
    %v402 = vpop.f32.mrf.mxu0
    %v403 = vadd.f32 %v86, %v402
    %v404 = vpop.f32.mrf.mxu0
    %v405 = vadd.f32 %v82, %v404
    %v406 = vpop.f32.mrf.mxu0
    %v407 = vadd.f32 %v86, %v406
    %408 = vmatprep.mubr.bf16.mxu0 0
    %409 = vmatmul.mubr.bf16.gmra.mxu0 %v224
    %v410 = vpop.f32.mrf.mxu0
    %v411 = vadd.f32 %v82, %v410
    %v412 = vpop.f32.mrf.mxu0
    %v413 = vadd.f32 %v86, %v412
    %v414 = vpop.f32.mrf.mxu0
    %v415 = vadd.f32 %v82, %v414
    %v416 = vpop.f32.mrf.mxu0
    %v417 = vadd.f32 %v86, %v416
    %418 = vdwg.mxu0
    %v419 = vmax.f32 %v261, 0.0
    %v420 = vmax.f32 %v263, 0.0
    %v421 = vmax.f32 %v265, 0.0
    %v422 = vmax.f32 %v267, 0.0
    %v423 = vmax.f32 %v271, 0.0
    %v424 = vmax.f32 %v273, 0.0
    %v425 = vmax.f32 %v275, 0.0
    %v426 = vmax.f32 %v277, 0.0
    %v427 = vmax.f32 %v281, 0.0
    %v428 = vmax.f32 %v283, 0.0
    %v429 = vmax.f32 %v285, 0.0
    %v430 = vmax.f32 %v287, 0.0
    %v431 = vmax.f32 %v291, 0.0
    %v432 = vmax.f32 %v293, 0.0
    %v433 = vmax.f32 %v295, 0.0
    %v434 = vmax.f32 %v297, 0.0
    %v435 = vmax.f32 %v301, 0.0
    %v436 = vmax.f32 %v303, 0.0
    %v437 = vmax.f32 %v305, 0.0
    %v438 = vmax.f32 %v307, 0.0
    %v439 = vmax.f32 %v311, 0.0
    %v440 = vmax.f32 %v313, 0.0
    %v441 = vmax.f32 %v315, 0.0
    %v442 = vmax.f32 %v317, 0.0
    %v443 = vmax.f32 %v321, 0.0
    %v444 = vmax.f32 %v323, 0.0
    %v445 = vmax.f32 %v325, 0.0
    %v446 = vmax.f32 %v327, 0.0
    %v447 = vmax.f32 %v331, 0.0
    %v448 = vmax.f32 %v333, 0.0
    %v449 = vmax.f32 %v335, 0.0
    %v450 = vmax.f32 %v337, 0.0
    %v451 = vmax.f32 %v341, 0.0
    %v452 = vmax.f32 %v343, 0.0
    %v453 = vmax.f32 %v345, 0.0
    %v454 = vmax.f32 %v347, 0.0
    %v455 = vmax.f32 %v351, 0.0
    %v456 = vmax.f32 %v353, 0.0
    %v457 = vmax.f32 %v355, 0.0
    %v458 = vmax.f32 %v357, 0.0
    %v459 = vmax.f32 %v361, 0.0
    %v460 = vmax.f32 %v363, 0.0
    %v461 = vmax.f32 %v365, 0.0
    %v462 = vmax.f32 %v367, 0.0
    %v463 = vmax.f32 %v371, 0.0
    %v464 = vmax.f32 %v373, 0.0
    %v465 = vmax.f32 %v375, 0.0
    %v466 = vmax.f32 %v377, 0.0
    %v467 = vmax.f32 %v381, 0.0
    %v468 = vmax.f32 %v383, 0.0
    %v469 = vmax.f32 %v385, 0.0
    %v470 = vmax.f32 %v387, 0.0
    %v471 = vmax.f32 %v391, 0.0
    %v472 = vmax.f32 %v393, 0.0
    %v473 = vmax.f32 %v395, 0.0
    %v474 = vmax.f32 %v397, 0.0
    %v475 = vmax.f32 %v401, 0.0
    %v476 = vmax.f32 %v403, 0.0
    %v477 = vmax.f32 %v405, 0.0
    %v478 = vmax.f32 %v407, 0.0
    %v479 = vmax.f32 %v411, 0.0
    %v480 = vmax.f32 %v413, 0.0
    %v481 = vmax.f32 %v415, 0.0
    %v482 = vmax.f32 %v417, 0.0
    %v483 = vpack.c.bf16 %v421, %v419
    %v484 = vpack.c.bf16 %v422, %v420
    %v485 = vpack.c.bf16 %v425, %v423
    %v486 = vpack.c.bf16 %v426, %v424
    %v487 = vpack.c.bf16 %v429, %v427
    %v488 = vpack.c.bf16 %v430, %v428
    %v489 = vpack.c.bf16 %v433, %v431
    %v490 = vpack.c.bf16 %v434, %v432
    %v491 = vpack.c.bf16 %v437, %v435
    %v492 = vpack.c.bf16 %v438, %v436
    %v493 = vpack.c.bf16 %v441, %v439
    %v494 = vpack.c.bf16 %v442, %v440
    %v495 = vpack.c.bf16 %v445, %v443
    %v496 = vpack.c.bf16 %v446, %v444
    %v497 = vpack.c.bf16 %v449, %v447
    %v498 = vpack.c.bf16 %v450, %v448
    %v499 = vpack.c.bf16 %v453, %v451
    %v500 = vpack.c.bf16 %v454, %v452
    %v501 = vpack.c.bf16 %v457, %v455
    %v502 = vpack.c.bf16 %v458, %v456
    %v503 = vpack.c.bf16 %v461, %v459
    %v504 = vpack.c.bf16 %v462, %v460
    %v505 = vpack.c.bf16 %v465, %v463
    %v506 = vpack.c.bf16 %v466, %v464
    %v507 = vpack.c.bf16 %v469, %v467
    %v508 = vpack.c.bf16 %v470, %v468
    %v509 = vpack.c.bf16 %v473, %v471
    %v510 = vpack.c.bf16 %v474, %v472
    %v511 = vpack.c.bf16 %v477, %v475
    %v512 = vpack.c.bf16 %v478, %v476
    %v513 = vpack.c.bf16 %v481, %v479
    %v514 = vpack.c.bf16 %v482, %v480
    %v515 = vld [vmem:[#allocation2] sm:$0xff]
    %v516 = vld [vmem:[#allocation2 + $0x8] sm:$0xff]
    %v517 = vld [vmem:[#allocation2 + $0x10] sm:$0xff]
    %v518 = vld [vmem:[#allocation2 + $0x18] sm:$0xff]
    %v519 = vld [vmem:[#allocation2 + $0x20] sm:$0xff]
    %v520 = vld [vmem:[#allocation2 + $0x28] sm:$0xff]
    %v521 = vld [vmem:[#allocation2 + $0x30] sm:$0xff]
    %v522 = vld [vmem:[#allocation2 + $0x38] sm:$0xff]
    %v523 = vld [vmem:[#allocation2 + $0x40] sm:$0xff]
    %v524 = vld [vmem:[#allocation2 + $0x48] sm:$0xff]
    %v525 = vld [vmem:[#allocation2 + $0x50] sm:$0xff]
    %v526 = vld [vmem:[#allocation2 + $0x58] sm:$0xff]
    %v527 = vld [vmem:[#allocation2 + $0x60] sm:$0xff]
    %v528 = vld [vmem:[#allocation2 + $0x68] sm:$0xff]
    %v529 = vld [vmem:[#allocation2 + $0x70] sm:$0xff]
    %v530 = vld [vmem:[#allocation2 + $0x78] sm:$0xff]
    %v531 = vld [vmem:[#allocation2 + $0x80] sm:$0xff]
    %v532 = vld [vmem:[#allocation2 + $0x88] sm:$0xff]
    %v533 = vld [vmem:[#allocation2 + $0x90] sm:$0xff]
    %v534 = vld [vmem:[#allocation2 + $0x98] sm:$0xff]
    %v535 = vld [vmem:[#allocation2 + $0xa0] sm:$0xff]
    %v536 = vld [vmem:[#allocation2 + $0xa8] sm:$0xff]
    %v537 = vld [vmem:[#allocation2 + $0xb0] sm:$0xff]
    %v538 = vld [vmem:[#allocation2 + $0xb8] sm:$0xff]
    %v539 = vld [vmem:[#allocation2 + $0xc0] sm:$0xff]
    %v540 = vld [vmem:[#allocation2 + $0xc8] sm:$0xff]
    %v541 = vld [vmem:[#allocation2 + $0xd0] sm:$0xff]
    %v542 = vld [vmem:[#allocation2 + $0xd8] sm:$0xff]
    %v543 = vld [vmem:[#allocation2 + $0xe0] sm:$0xff]
    %v544 = vld [vmem:[#allocation2 + $0xe8] sm:$0xff]
    %v545 = vld [vmem:[#allocation2 + $0xf0] sm:$0xff]
    %v546 = vld [vmem:[#allocation2 + $0xf8] sm:$0xff]
    %v547 = vlaneseq
    %v548 = vshrl.u32 %v547, 7
    %v549 = vsub.s32 1, %v548
    %v550 = vrot.slane %v33, %v549
    %v551 = vlaneseq
    %v552 = vshrl.u32 %v551, 7
    %v553 = vsub.s32 5, %v552
    %v554 = vrot.slane %v33, %v553
    %v557 = vlaneseq
    %v558 = vshrl.u32 %v557, 7
    %v559 = vsub.s32 1, %v558
    %v560 = vrot.slane %v550, %v559
    %v561 = vlaneseq
    %v562 = vshrl.u32 %v561, 7
    %v563 = vsub.s32 1, %v562
    %v564 = vrot.slane %v554, %v563
    %v597 = vunpack.c.l.b16 %v515
    %v598 = vunpack.c.h.b16 %v515
    %v599 = vunpack.c.l.b16 %v516
    %v600 = vunpack.c.h.b16 %v516
    %v601 = vunpack.c.l.b16 %v517
    %v602 = vunpack.c.h.b16 %v517
    %v603 = vunpack.c.l.b16 %v518
    %v604 = vunpack.c.h.b16 %v518
    %v605 = vunpack.c.l.b16 %v519
    %v606 = vunpack.c.h.b16 %v519
    %v607 = vunpack.c.l.b16 %v520
    %v608 = vunpack.c.h.b16 %v520
    %v609 = vunpack.c.l.b16 %v521
    %v610 = vunpack.c.h.b16 %v521
    %v611 = vunpack.c.l.b16 %v522
    %v612 = vunpack.c.h.b16 %v522
    %v613 = vunpack.c.l.b16 %v523
    %v614 = vunpack.c.h.b16 %v523
    %v615 = vunpack.c.l.b16 %v524
    %v616 = vunpack.c.h.b16 %v524
    %v617 = vunpack.c.l.b16 %v525
    %v618 = vunpack.c.h.b16 %v525
    %v619 = vunpack.c.l.b16 %v526
    %v620 = vunpack.c.h.b16 %v526
    %v621 = vunpack.c.l.b16 %v527
    %v622 = vunpack.c.h.b16 %v527
    %v623 = vunpack.c.l.b16 %v528
    %v624 = vunpack.c.h.b16 %v528
    %v625 = vunpack.c.l.b16 %v529
    %v626 = vunpack.c.h.b16 %v529
    %v627 = vunpack.c.l.b16 %v530
    %v628 = vunpack.c.h.b16 %v530
    %v629 = vunpack.c.l.b16 %v531
    %v630 = vunpack.c.h.b16 %v531
    %v631 = vunpack.c.l.b16 %v532
    %v632 = vunpack.c.h.b16 %v532
    %v633 = vunpack.c.l.b16 %v533
    %v634 = vunpack.c.h.b16 %v533
    %v635 = vunpack.c.l.b16 %v534
    %v636 = vunpack.c.h.b16 %v534
    %v637 = vunpack.c.l.b16 %v535
    %v638 = vunpack.c.h.b16 %v535
    %v639 = vunpack.c.l.b16 %v536
    %v640 = vunpack.c.h.b16 %v536
    %v641 = vunpack.c.l.b16 %v537
    %v642 = vunpack.c.h.b16 %v537
    %v643 = vunpack.c.l.b16 %v538
    %v644 = vunpack.c.h.b16 %v538
    %v645 = vunpack.c.l.b16 %v539
    %v646 = vunpack.c.h.b16 %v539
    %v647 = vunpack.c.l.b16 %v540
    %v648 = vunpack.c.h.b16 %v540
    %v649 = vunpack.c.l.b16 %v541
    %v650 = vunpack.c.h.b16 %v541
    %v651 = vunpack.c.l.b16 %v542
    %v652 = vunpack.c.h.b16 %v542
    %v653 = vunpack.c.l.b16 %v543
    %v654 = vunpack.c.h.b16 %v543
    %v655 = vunpack.c.l.b16 %v544
    %v656 = vunpack.c.h.b16 %v544
    %v657 = vunpack.c.l.b16 %v545
    %v658 = vunpack.c.h.b16 %v545
    %v659 = vunpack.c.l.b16 %v546
    %v660 = vunpack.c.h.b16 %v546
    %v661 = vpack.c.b16 %v599, %v597
    %v662 = vpack.c.b16 %v600, %v598
    %v663 = vpack.c.b16 %v603, %v601
    %v664 = vpack.c.b16 %v604, %v602
    %v665 = vpack.c.b16 %v607, %v605
    %v666 = vpack.c.b16 %v608, %v606
    %v667 = vpack.c.b16 %v611, %v609
    %v668 = vpack.c.b16 %v612, %v610
    %v669 = vpack.c.b16 %v615, %v613
    %v670 = vpack.c.b16 %v616, %v614
    %v671 = vpack.c.b16 %v619, %v617
    %v672 = vpack.c.b16 %v620, %v618
    %v673 = vpack.c.b16 %v623, %v621
    %v674 = vpack.c.b16 %v624, %v622
    %v675 = vpack.c.b16 %v627, %v625
    %v676 = vpack.c.b16 %v628, %v626
    %v677 = vpack.c.b16 %v631, %v629
    %v678 = vpack.c.b16 %v632, %v630
    %v679 = vpack.c.b16 %v635, %v633
    %v680 = vpack.c.b16 %v636, %v634
    %v681 = vpack.c.b16 %v639, %v637
    %v682 = vpack.c.b16 %v640, %v638
    %v683 = vpack.c.b16 %v643, %v641
    %v684 = vpack.c.b16 %v644, %v642
    %v685 = vpack.c.b16 %v647, %v645
    %v686 = vpack.c.b16 %v648, %v646
    %v687 = vpack.c.b16 %v651, %v649
    %v688 = vpack.c.b16 %v652, %v650
    %v689 = vpack.c.b16 %v655, %v653
    %v690 = vpack.c.b16 %v656, %v654
    %v691 = vpack.c.b16 %v659, %v657
    %v692 = vpack.c.b16 %v660, %v658
    %725 = vmatprep.subr.bf16.mxu0 %v676
    %726 = vmatpush1.bf16.msra.mxu0 %v675
    %727 = vmatprep.subr.bf16.mxu0 %v674
    %728 = vmatpush1.bf16.msra.mxu0 %v673
    %729 = vmatprep.subr.bf16.mxu0 %v672
    %730 = vmatpush1.bf16.msra.mxu0 %v671
    %731 = vmatprep.subr.bf16.mxu0 %v670
    %732 = vmatpush1.bf16.msra.mxu0 %v669
    %733 = vmatprep.subr.bf16.mxu0 %v668
    %734 = vmatpush1.bf16.msra.mxu0 %v667
    %735 = vmatprep.subr.bf16.mxu0 %v666
    %736 = vmatpush1.bf16.msra.mxu0 %v665
    %737 = vmatprep.subr.bf16.mxu0 %v664
    %738 = vmatpush1.bf16.msra.mxu0 %v663
    %739 = vmatprep.subr.bf16.mxu0 %v662
    %740 = vmatpush1.bf16.msra.mxu0 %v661
    %741 = vmatprep.subr.bf16.mxu0 %v692
    %742 = vmatpush2.bf16.msra.mxu0 %v691
    %743 = vmatprep.subr.bf16.mxu0 %v690
    %744 = vmatpush2.bf16.msra.mxu0 %v689
    %745 = vmatprep.subr.bf16.mxu0 %v688
    %746 = vmatpush2.bf16.msra.mxu0 %v687
    %747 = vmatprep.subr.bf16.mxu0 %v686
    %748 = vmatpush2.bf16.msra.mxu0 %v685
    %749 = vmatprep.subr.bf16.mxu0 %v684
    %750 = vmatpush2.bf16.msra.mxu0 %v683
    %751 = vmatprep.subr.bf16.mxu0 %v682
    %752 = vmatpush2.bf16.msra.mxu0 %v681
    %753 = vmatprep.subr.bf16.mxu0 %v680
    %754 = vmatpush2.bf16.msra.mxu0 %v679
    %755 = vmatprep.subr.bf16.mxu0 %v678
    %756 = vmatpush2.bf16.msra.mxu0 %v677
    %757 = vmatprep.mubr.bf16.mxu0 %v484
    %758 = vmatmul.mubr.bf16.gmra.mxu0 %v483
    %v759 = vpop.f32.mrf.mxu0
    %v760 = vadd.f32 %v560, %v759
    %v761 = vpop.f32.mrf.mxu0
    %v762 = vadd.f32 %v564, %v761
    %v763 = vpop.f32.mrf.mxu0
    %v764 = vadd.f32 %v560, %v763
    %v765 = vpop.f32.mrf.mxu0
    %v766 = vadd.f32 %v564, %v765
    %767 = vmatprep.mubr.bf16.mxu0 %v486
    %768 = vmatmul.mubr.bf16.gmra.mxu0 %v485
    %v769 = vpop.f32.mrf.mxu0
    %v770 = vadd.f32 %v560, %v769
    %v771 = vpop.f32.mrf.mxu0
    %v772 = vadd.f32 %v564, %v771
    %v773 = vpop.f32.mrf.mxu0
    %v774 = vadd.f32 %v560, %v773
    %v775 = vpop.f32.mrf.mxu0
    %v776 = vadd.f32 %v564, %v775
    %777 = vmatprep.mubr.bf16.mxu0 %v488
    %778 = vmatmul.mubr.bf16.gmra.mxu0 %v487
    %v779 = vpop.f32.mrf.mxu0
    %v780 = vadd.f32 %v560, %v779
    %v781 = vpop.f32.mrf.mxu0
    %v782 = vadd.f32 %v564, %v781
    %v783 = vpop.f32.mrf.mxu0
    %v784 = vadd.f32 %v560, %v783
    %v785 = vpop.f32.mrf.mxu0
    %v786 = vadd.f32 %v564, %v785
    %787 = vmatprep.mubr.bf16.mxu0 %v490
    %788 = vmatmul.mubr.bf16.gmra.mxu0 %v489
    %v789 = vpop.f32.mrf.mxu0
    %v790 = vadd.f32 %v560, %v789
    %v791 = vpop.f32.mrf.mxu0
    %v792 = vadd.f32 %v564, %v791
    %v793 = vpop.f32.mrf.mxu0
    %v794 = vadd.f32 %v560, %v793
    %v795 = vpop.f32.mrf.mxu0
    %v796 = vadd.f32 %v564, %v795
    %797 = vmatprep.mubr.bf16.mxu0 %v492
    %798 = vmatmul.mubr.bf16.gmra.mxu0 %v491
    %v799 = vpop.f32.mrf.mxu0
    %v800 = vadd.f32 %v560, %v799
    %v801 = vpop.f32.mrf.mxu0
    %v802 = vadd.f32 %v564, %v801
    %v803 = vpop.f32.mrf.mxu0
    %v804 = vadd.f32 %v560, %v803
    %v805 = vpop.f32.mrf.mxu0
    %v806 = vadd.f32 %v564, %v805
    %807 = vmatprep.mubr.bf16.mxu0 %v494
    %808 = vmatmul.mubr.bf16.gmra.mxu0 %v493
    %v809 = vpop.f32.mrf.mxu0
    %v810 = vadd.f32 %v560, %v809
    %v811 = vpop.f32.mrf.mxu0
    %v812 = vadd.f32 %v564, %v811
    %v813 = vpop.f32.mrf.mxu0
    %v814 = vadd.f32 %v560, %v813
    %v815 = vpop.f32.mrf.mxu0
    %v816 = vadd.f32 %v564, %v815
    %817 = vmatprep.mubr.bf16.mxu0 %v496
    %818 = vmatmul.mubr.bf16.gmra.mxu0 %v495
    %v819 = vpop.f32.mrf.mxu0
    %v820 = vadd.f32 %v560, %v819
    %v821 = vpop.f32.mrf.mxu0
    %v822 = vadd.f32 %v564, %v821
    %v823 = vpop.f32.mrf.mxu0
    %v824 = vadd.f32 %v560, %v823
    %v825 = vpop.f32.mrf.mxu0
    %v826 = vadd.f32 %v564, %v825
    %827 = vmatprep.mubr.bf16.mxu0 %v498
    %828 = vmatmul.mubr.bf16.gmra.mxu0 %v497
    %v829 = vpop.f32.mrf.mxu0
    %v830 = vadd.f32 %v560, %v829
    %v831 = vpop.f32.mrf.mxu0
    %v832 = vadd.f32 %v564, %v831
    %v833 = vpop.f32.mrf.mxu0
    %v834 = vadd.f32 %v560, %v833
    %v835 = vpop.f32.mrf.mxu0
    %v836 = vadd.f32 %v564, %v835
    %837 = vmatprep.mubr.bf16.mxu0 %v500
    %838 = vmatmul.mubr.bf16.gmra.mxu0 %v499
    %v839 = vpop.f32.mrf.mxu0
    %v840 = vadd.f32 %v560, %v839
    %v841 = vpop.f32.mrf.mxu0
    %v842 = vadd.f32 %v564, %v841
    %v843 = vpop.f32.mrf.mxu0
    %v844 = vadd.f32 %v560, %v843
    %v845 = vpop.f32.mrf.mxu0
    %v846 = vadd.f32 %v564, %v845
    %847 = vmatprep.mubr.bf16.mxu0 %v502
    %848 = vmatmul.mubr.bf16.gmra.mxu0 %v501
    %v849 = vpop.f32.mrf.mxu0
    %v850 = vadd.f32 %v560, %v849
    %v851 = vpop.f32.mrf.mxu0
    %v852 = vadd.f32 %v564, %v851
    %v853 = vpop.f32.mrf.mxu0
    %v854 = vadd.f32 %v560, %v853
    %v855 = vpop.f32.mrf.mxu0
    %v856 = vadd.f32 %v564, %v855
    %857 = vmatprep.mubr.bf16.mxu0 %v504
    %858 = vmatmul.mubr.bf16.gmra.mxu0 %v503
    %v859 = vpop.f32.mrf.mxu0
    %v860 = vadd.f32 %v560, %v859
    %v861 = vpop.f32.mrf.mxu0
    %v862 = vadd.f32 %v564, %v861
    %v863 = vpop.f32.mrf.mxu0
    %v864 = vadd.f32 %v560, %v863
    %v865 = vpop.f32.mrf.mxu0
    %v866 = vadd.f32 %v564, %v865
    %867 = vmatprep.mubr.bf16.mxu0 %v506
    %868 = vmatmul.mubr.bf16.gmra.mxu0 %v505
    %v869 = vpop.f32.mrf.mxu0
    %v870 = vadd.f32 %v560, %v869
    %v871 = vpop.f32.mrf.mxu0
    %v872 = vadd.f32 %v564, %v871
    %v873 = vpop.f32.mrf.mxu0
    %v874 = vadd.f32 %v560, %v873
    %v875 = vpop.f32.mrf.mxu0
    %v876 = vadd.f32 %v564, %v875
    %877 = vmatprep.mubr.bf16.mxu0 %v508
    %878 = vmatmul.mubr.bf16.gmra.mxu0 %v507
    %v879 = vpop.f32.mrf.mxu0
    %v880 = vadd.f32 %v560, %v879
    %v881 = vpop.f32.mrf.mxu0
    %v882 = vadd.f32 %v564, %v881
    %v883 = vpop.f32.mrf.mxu0
    %v884 = vadd.f32 %v560, %v883
    %v885 = vpop.f32.mrf.mxu0
    %v886 = vadd.f32 %v564, %v885
    %887 = vmatprep.mubr.bf16.mxu0 %v510
    %888 = vmatmul.mubr.bf16.gmra.mxu0 %v509
    %v889 = vpop.f32.mrf.mxu0
    %v890 = vadd.f32 %v560, %v889
    %v891 = vpop.f32.mrf.mxu0
    %v892 = vadd.f32 %v564, %v891
    %v893 = vpop.f32.mrf.mxu0
    %v894 = vadd.f32 %v560, %v893
    %v895 = vpop.f32.mrf.mxu0
    %v896 = vadd.f32 %v564, %v895
    %897 = vmatprep.mubr.bf16.mxu0 %v512
    %898 = vmatmul.mubr.bf16.gmra.mxu0 %v511
    %v899 = vpop.f32.mrf.mxu0
    %v900 = vadd.f32 %v560, %v899
    %v901 = vpop.f32.mrf.mxu0
    %v902 = vadd.f32 %v564, %v901
    %v903 = vpop.f32.mrf.mxu0
    %v904 = vadd.f32 %v560, %v903
    %v905 = vpop.f32.mrf.mxu0
    %v906 = vadd.f32 %v564, %v905
    %907 = vmatprep.mubr.bf16.mxu0 %v514
    %908 = vmatmul.mubr.bf16.gmra.mxu0 %v513
    %v909 = vpop.f32.mrf.mxu0
    %v910 = vadd.f32 %v560, %v909
    %v911 = vpop.f32.mrf.mxu0
    %v912 = vadd.f32 %v564, %v911
    %v913 = vpop.f32.mrf.mxu0
    %v914 = vadd.f32 %v560, %v913
    %v915 = vpop.f32.mrf.mxu0
    %v916 = vadd.f32 %v564, %v915
    %917 = vdwg.mxu0
    %v918 = vmax.f32 %v760, 0.0
    %v919 = vmax.f32 %v762, 0.0
    %v920 = vmax.f32 %v764, 0.0
    %v921 = vmax.f32 %v766, 0.0
    %v922 = vmax.f32 %v770, 0.0
    %v923 = vmax.f32 %v772, 0.0
    %v924 = vmax.f32 %v774, 0.0
    %v925 = vmax.f32 %v776, 0.0
    %v926 = vmax.f32 %v780, 0.0
    %v927 = vmax.f32 %v782, 0.0
    %v928 = vmax.f32 %v784, 0.0
    %v929 = vmax.f32 %v786, 0.0
    %v930 = vmax.f32 %v790, 0.0
    %v931 = vmax.f32 %v792, 0.0
    %v932 = vmax.f32 %v794, 0.0
    %v933 = vmax.f32 %v796, 0.0
    %v934 = vmax.f32 %v800, 0.0
    %v935 = vmax.f32 %v802, 0.0
    %v936 = vmax.f32 %v804, 0.0
    %v937 = vmax.f32 %v806, 0.0
    %v938 = vmax.f32 %v810, 0.0
    %v939 = vmax.f32 %v812, 0.0
    %v940 = vmax.f32 %v814, 0.0
    %v941 = vmax.f32 %v816, 0.0
    %v942 = vmax.f32 %v820, 0.0
    %v943 = vmax.f32 %v822, 0.0
    %v944 = vmax.f32 %v824, 0.0
    %v945 = vmax.f32 %v826, 0.0
    %v946 = vmax.f32 %v830, 0.0
    %v947 = vmax.f32 %v832, 0.0
    %v948 = vmax.f32 %v834, 0.0
    %v949 = vmax.f32 %v836, 0.0
    %v950 = vmax.f32 %v840, 0.0
    %v951 = vmax.f32 %v842, 0.0
    %v952 = vmax.f32 %v844, 0.0
    %v953 = vmax.f32 %v846, 0.0
    %v954 = vmax.f32 %v850, 0.0
    %v955 = vmax.f32 %v852, 0.0
    %v956 = vmax.f32 %v854, 0.0
    %v957 = vmax.f32 %v856, 0.0
    %v958 = vmax.f32 %v860, 0.0
    %v959 = vmax.f32 %v862, 0.0
    %v960 = vmax.f32 %v864, 0.0
    %v961 = vmax.f32 %v866, 0.0
    %v962 = vmax.f32 %v870, 0.0
    %v963 = vmax.f32 %v872, 0.0
    %v964 = vmax.f32 %v874, 0.0
    %v965 = vmax.f32 %v876, 0.0
    %v966 = vmax.f32 %v880, 0.0
    %v967 = vmax.f32 %v882, 0.0
    %v968 = vmax.f32 %v884, 0.0
    %v969 = vmax.f32 %v886, 0.0
    %v970 = vmax.f32 %v890, 0.0
    %v971 = vmax.f32 %v892, 0.0
    %v972 = vmax.f32 %v894, 0.0
    %v973 = vmax.f32 %v896, 0.0
    %v974 = vmax.f32 %v900, 0.0
    %v975 = vmax.f32 %v902, 0.0
    %v976 = vmax.f32 %v904, 0.0
    %v977 = vmax.f32 %v906, 0.0
    %v978 = vmax.f32 %v910, 0.0
    %v979 = vmax.f32 %v912, 0.0
    %v980 = vmax.f32 %v914, 0.0
    %v981 = vmax.f32 %v916, 0.0
    %v982 = vlaneseq
    %v983 = vshrl.u32 %v982, 7
    %v984 = vsub.s32 2, %v983
    %v985 = vrot.slane %v33, %v984
    %v986 = vlaneseq
    %v987 = vshrl.u32 %v986, 7
    %v988 = vsub.s32 6, %v987
    %v989 = vrot.slane %v33, %v988
    %v992 = vlaneseq
    %v993 = vshrl.u32 %v992, 7
    %v994 = vsub.s32 2, %v993
    %v995 = vrot.slane %v985, %v994
    %v996 = vlaneseq
    %v997 = vshrl.u32 %v996, 7
    %v998 = vsub.s32 2, %v997
    %v999 = vrot.slane %v989, %v998
    %v1000 = vmul.f32 %v918, %v995
    %v1001 = vmul.f32 %v919, %v999
    %v1002 = vmul.f32 %v920, %v995
    %v1003 = vmul.f32 %v921, %v999
    %v1004 = vmul.f32 %v922, %v995
    %v1005 = vmul.f32 %v923, %v999
    %v1006 = vmul.f32 %v924, %v995
    %v1007 = vmul.f32 %v925, %v999
    %v1008 = vmul.f32 %v926, %v995
    %v1009 = vmul.f32 %v927, %v999
    %v1010 = vmul.f32 %v928, %v995
    %v1011 = vmul.f32 %v929, %v999
    %v1012 = vmul.f32 %v930, %v995
    %v1013 = vmul.f32 %v931, %v999
    %v1014 = vmul.f32 %v932, %v995
    %v1015 = vmul.f32 %v933, %v999
    %v1016 = vmul.f32 %v934, %v995
    %v1017 = vmul.f32 %v935, %v999
    %v1018 = vmul.f32 %v936, %v995
    %v1019 = vmul.f32 %v937, %v999
    %v1020 = vmul.f32 %v938, %v995
    %v1021 = vmul.f32 %v939, %v999
    %v1022 = vmul.f32 %v940, %v995
    %v1023 = vmul.f32 %v941, %v999
    %v1024 = vmul.f32 %v942, %v995
    %v1025 = vmul.f32 %v943, %v999
    %v1026 = vmul.f32 %v944, %v995
    %v1027 = vmul.f32 %v945, %v999
    %v1028 = vmul.f32 %v946, %v995
    %v1029 = vmul.f32 %v947, %v999
    %v1030 = vmul.f32 %v948, %v995
    %v1031 = vmul.f32 %v949, %v999
    %v1032 = vmul.f32 %v950, %v995
    %v1033 = vmul.f32 %v951, %v999
    %v1034 = vmul.f32 %v952, %v995
    %v1035 = vmul.f32 %v953, %v999
    %v1036 = vmul.f32 %v954, %v995
    %v1037 = vmul.f32 %v955, %v999
    %v1038 = vmul.f32 %v956, %v995
    %v1039 = vmul.f32 %v957, %v999
    %v1040 = vmul.f32 %v958, %v995
    %v1041 = vmul.f32 %v959, %v999
    %v1042 = vmul.f32 %v960, %v995
    %v1043 = vmul.f32 %v961, %v999
    %v1044 = vmul.f32 %v962, %v995
    %v1045 = vmul.f32 %v963, %v999
    %v1046 = vmul.f32 %v964, %v995
    %v1047 = vmul.f32 %v965, %v999
    %v1048 = vmul.f32 %v966, %v995
    %v1049 = vmul.f32 %v967, %v999
    %v1050 = vmul.f32 %v968, %v995
    %v1051 = vmul.f32 %v969, %v999
    %v1052 = vmul.f32 %v970, %v995
    %v1053 = vmul.f32 %v971, %v999
    %v1054 = vmul.f32 %v972, %v995
    %v1055 = vmul.f32 %v973, %v999
    %v1056 = vmul.f32 %v974, %v995
    %v1057 = vmul.f32 %v975, %v999
    %v1058 = vmul.f32 %v976, %v995
    %v1059 = vmul.f32 %v977, %v999
    %v1060 = vmul.f32 %v978, %v995
    %v1061 = vmul.f32 %v979, %v999
    %v1062 = vmul.f32 %v980, %v995
    %v1063 = vmul.f32 %v981, %v999
    %v1064 = vadd.f32 %v1000, %v1001
    %1065 = vadd.xlane.f32.xlu0 %v1064
    %v1066 = vpop.xlane.xlu0 %1065
    %v1067 = vadd.f32 %v1002, %v1003
    %1068 = vadd.xlane.f32.xlu0 %v1067
    %v1069 = vpop.xlane.xlu0 %1068
    %v1070 = vadd.f32 %v1004, %v1005
    %1071 = vadd.xlane.f32.xlu0 %v1070
    %v1072 = vpop.xlane.xlu0 %1071
    %v1073 = vadd.f32 %v1006, %v1007
    %1074 = vadd.xlane.f32.xlu0 %v1073
    %v1075 = vpop.xlane.xlu0 %1074
    %v1076 = vadd.f32 %v1008, %v1009
    %1077 = vadd.xlane.f32.xlu0 %v1076
    %v1078 = vpop.xlane.xlu0 %1077
    %v1079 = vadd.f32 %v1010, %v1011
    %1080 = vadd.xlane.f32.xlu0 %v1079
    %v1081 = vpop.xlane.xlu0 %1080
    %v1082 = vadd.f32 %v1012, %v1013
    %1083 = vadd.xlane.f32.xlu0 %v1082
    %v1084 = vpop.xlane.xlu0 %1083
    %v1085 = vadd.f32 %v1014, %v1015
    %1086 = vadd.xlane.f32.xlu0 %v1085
    %v1087 = vpop.xlane.xlu0 %1086
    %v1088 = vadd.f32 %v1016, %v1017
    %1089 = vadd.xlane.f32.xlu0 %v1088
    %v1090 = vpop.xlane.xlu0 %1089
    %v1091 = vadd.f32 %v1018, %v1019
    %1092 = vadd.xlane.f32.xlu0 %v1091
    %v1093 = vpop.xlane.xlu0 %1092
    %v1094 = vadd.f32 %v1020, %v1021
    %1095 = vadd.xlane.f32.xlu0 %v1094
    %v1096 = vpop.xlane.xlu0 %1095
    %v1097 = vadd.f32 %v1022, %v1023
    %1098 = vadd.xlane.f32.xlu0 %v1097
    %v1099 = vpop.xlane.xlu0 %1098
    %v1100 = vadd.f32 %v1024, %v1025
    %1101 = vadd.xlane.f32.xlu0 %v1100
    %v1102 = vpop.xlane.xlu0 %1101
    %v1103 = vadd.f32 %v1026, %v1027
    %1104 = vadd.xlane.f32.xlu0 %v1103
    %v1105 = vpop.xlane.xlu0 %1104
    %v1106 = vadd.f32 %v1028, %v1029
    %1107 = vadd.xlane.f32.xlu0 %v1106
    %v1108 = vpop.xlane.xlu0 %1107
    %v1109 = vadd.f32 %v1030, %v1031
    %1110 = vadd.xlane.f32.xlu0 %v1109
    %v1111 = vpop.xlane.xlu0 %1110
    %v1112 = vadd.f32 %v1032, %v1033
    %1113 = vadd.xlane.f32.xlu0 %v1112
    %v1114 = vpop.xlane.xlu0 %1113
    %v1115 = vadd.f32 %v1034, %v1035
    %1116 = vadd.xlane.f32.xlu0 %v1115
    %v1117 = vpop.xlane.xlu0 %1116
    %v1118 = vadd.f32 %v1036, %v1037
    %1119 = vadd.xlane.f32.xlu0 %v1118
    %v1120 = vpop.xlane.xlu0 %1119
    %v1121 = vadd.f32 %v1038, %v1039
    %1122 = vadd.xlane.f32.xlu0 %v1121
    %v1123 = vpop.xlane.xlu0 %1122
    %v1124 = vadd.f32 %v1040, %v1041
    %1125 = vadd.xlane.f32.xlu0 %v1124
    %v1126 = vpop.xlane.xlu0 %1125
    %v1127 = vadd.f32 %v1042, %v1043
    %1128 = vadd.xlane.f32.xlu0 %v1127
    %v1129 = vpop.xlane.xlu0 %1128
    %v1130 = vadd.f32 %v1044, %v1045
    %1131 = vadd.xlane.f32.xlu0 %v1130
    %v1132 = vpop.xlane.xlu0 %1131
    %v1133 = vadd.f32 %v1046, %v1047
    %1134 = vadd.xlane.f32.xlu0 %v1133
    %v1135 = vpop.xlane.xlu0 %1134
    %v1136 = vadd.f32 %v1048, %v1049
    %1137 = vadd.xlane.f32.xlu0 %v1136
    %v1138 = vpop.xlane.xlu0 %1137
    %v1139 = vadd.f32 %v1050, %v1051
    %1140 = vadd.xlane.f32.xlu0 %v1139
    %v1141 = vpop.xlane.xlu0 %1140
    %v1142 = vadd.f32 %v1052, %v1053
    %1143 = vadd.xlane.f32.xlu0 %v1142
    %v1144 = vpop.xlane.xlu0 %1143
    %v1145 = vadd.f32 %v1054, %v1055
    %1146 = vadd.xlane.f32.xlu0 %v1145
    %v1147 = vpop.xlane.xlu0 %1146
    %v1148 = vadd.f32 %v1056, %v1057
    %1149 = vadd.xlane.f32.xlu0 %v1148
    %v1150 = vpop.xlane.xlu0 %1149
    %v1151 = vadd.f32 %v1058, %v1059
    %1152 = vadd.xlane.f32.xlu0 %v1151
    %v1153 = vpop.xlane.xlu0 %1152
    %v1154 = vadd.f32 %v1060, %v1061
    %1155 = vadd.xlane.f32.xlu0 %v1154
    %v1156 = vpop.xlane.xlu0 %1155
    %v1157 = vadd.f32 %v1062, %v1063
    %1158 = vadd.xlane.f32.xlu0 %v1157
    %v1159 = vpop.xlane.xlu0 %1158
    %1160 = vset.pattern.permute.xlu0 0
    %1161 = vperm.xlu0 %1160, %v33
    %v1162 = vpop.permute.xlu0 %1161
    %v1165 = vunpack.c.l.s4 839922192
    %v1166 = vunpack.c.0.s8 %v1165
    %v1167 = vlaneseq
    %v1168 = vshrl.u32 %v1167, 7
    %v1169 = vsub.s32 %v1166, %v1168
    %v1170 = vrot.slane %v1162, %v1169
    %v1172 = vlaneseq
    %v1173 = vshrl.u32 %v1172, 7
    %v1174 = vsub.s32 3, %v1173
    %v1175 = vrot.slane %v1170, %v1174
    %v1177 = vadd.f32 %v1066, %v1175
    %v1178 = vadd.f32 %v1069, %v1175
    %v1179 = vadd.f32 %v1072, %v1175
    %v1180 = vadd.f32 %v1075, %v1175
    %v1181 = vadd.f32 %v1078, %v1175
    %v1182 = vadd.f32 %v1081, %v1175
    %v1183 = vadd.f32 %v1084, %v1175
    %v1184 = vadd.f32 %v1087, %v1175
    %v1185 = vadd.f32 %v1090, %v1175
    %v1186 = vadd.f32 %v1093, %v1175
    %v1187 = vadd.f32 %v1096, %v1175
    %v1188 = vadd.f32 %v1099, %v1175
    %v1189 = vadd.f32 %v1102, %v1175
    %v1190 = vadd.f32 %v1105, %v1175
    %v1191 = vadd.f32 %v1108, %v1175
    %v1192 = vadd.f32 %v1111, %v1175
    %v1193 = vadd.f32 %v1114, %v1175
    %v1194 = vadd.f32 %v1117, %v1175
    %v1195 = vadd.f32 %v1120, %v1175
    %v1196 = vadd.f32 %v1123, %v1175
    %v1197 = vadd.f32 %v1126, %v1175
    %v1198 = vadd.f32 %v1129, %v1175
    %v1199 = vadd.f32 %v1132, %v1175
    %v1200 = vadd.f32 %v1135, %v1175
    %v1201 = vadd.f32 %v1138, %v1175
    %v1202 = vadd.f32 %v1141, %v1175
    %v1203 = vadd.f32 %v1144, %v1175
    %v1204 = vadd.f32 %v1147, %v1175
    %v1205 = vadd.f32 %v1150, %v1175
    %v1206 = vadd.f32 %v1153, %v1175
    %v1207 = vadd.f32 %v1156, %v1175
    %v1208 = vadd.f32 %v1159, %v1175
    %v1241 = vcombine.high %v1177, %v1177
    %v1243 = vunpack.c.l.s4 1966171168
    %v1244 = vunpack.c.0.s8 %v1243
    %v1245 = vlaneseq
    %v1246 = vshrl.u32 %v1245, 7
    %v1247 = vsub.s32 %v1244, %v1246
    %v1248 = vrot.slane %v1177, %v1247
    %v1250 = vunpack.c.l.s4 1966171168
    %v1251 = vunpack.c.0.s8 %v1250
    %v1252 = vlaneseq
    %v1253 = vshrl.u32 %v1252, 7
    %v1254 = vsub.s32 %v1251, %v1253
    %v1255 = vrot.slane %v1241, %v1254
    %v1256 = vcombine.high %v1248, %v1248
    %v1257 = vcombine.high %v1255, %v1255
    %v1259 = vunpack.c.l.s4 1966171168
    %v1260 = vunpack.c.0.s8 %v1259
    %v1261 = vlaneseq
    %v1262 = vshrl.u32 %v1261, 7
    %v1263 = vsub.s32 %v1260, %v1262
    %v1264 = vrot.slane %v1248, %v1263
    %v1266 = vunpack.c.l.s4 1966171168
    %v1267 = vunpack.c.0.s8 %v1266
    %v1268 = vlaneseq
    %v1269 = vshrl.u32 %v1268, 7
    %v1270 = vsub.s32 %v1267, %v1269
    %v1271 = vrot.slane %v1255, %v1270
    %v1273 = vunpack.c.l.s4 1966171168
    %v1274 = vunpack.c.0.s8 %v1273
    %v1275 = vlaneseq
    %v1276 = vshrl.u32 %v1275, 7
    %v1277 = vsub.s32 %v1274, %v1276
    %v1278 = vrot.slane %v1256, %v1277
    %v1280 = vunpack.c.l.s4 1966171168
    %v1281 = vunpack.c.0.s8 %v1280
    %v1282 = vlaneseq
    %v1283 = vshrl.u32 %v1282, 7
    %v1284 = vsub.s32 %v1281, %v1283
    %v1285 = vrot.slane %v1257, %v1284
    %v1286 = vcombine.high %v1264, %v1264
    %v1287 = vcombine.high %v1271, %v1271
    %v1288 = vcombine.high %v1278, %v1278
    %v1289 = vcombine.high %v1285, %v1285
    %v1290 = vcombine.high %v1178, %v1178
    %v1292 = vunpack.c.l.s4 1966171168
    %v1293 = vunpack.c.0.s8 %v1292
    %v1294 = vlaneseq
    %v1295 = vshrl.u32 %v1294, 7
    %v1296 = vsub.s32 %v1293, %v1295
    %v1297 = vrot.slane %v1178, %v1296
    %v1299 = vunpack.c.l.s4 1966171168
    %v1300 = vunpack.c.0.s8 %v1299
    %v1301 = vlaneseq
    %v1302 = vshrl.u32 %v1301, 7
    %v1303 = vsub.s32 %v1300, %v1302
    %v1304 = vrot.slane %v1290, %v1303
    %v1305 = vcombine.high %v1297, %v1297
    %v1306 = vcombine.high %v1304, %v1304
    %v1308 = vunpack.c.l.s4 1966171168
    %v1309 = vunpack.c.0.s8 %v1308
    %v1310 = vlaneseq
    %v1311 = vshrl.u32 %v1310, 7
    %v1312 = vsub.s32 %v1309, %v1311
    %v1313 = vrot.slane %v1297, %v1312
    %v1315 = vunpack.c.l.s4 1966171168
    %v1316 = vunpack.c.0.s8 %v1315
    %v1317 = vlaneseq
    %v1318 = vshrl.u32 %v1317, 7
    %v1319 = vsub.s32 %v1316, %v1318
    %v1320 = vrot.slane %v1304, %v1319
    %v1322 = vunpack.c.l.s4 1966171168
    %v1323 = vunpack.c.0.s8 %v1322
    %v1324 = vlaneseq
    %v1325 = vshrl.u32 %v1324, 7
    %v1326 = vsub.s32 %v1323, %v1325
    %v1327 = vrot.slane %v1305, %v1326
    %v1329 = vunpack.c.l.s4 1966171168
    %v1330 = vunpack.c.0.s8 %v1329
    %v1331 = vlaneseq
    %v1332 = vshrl.u32 %v1331, 7
    %v1333 = vsub.s32 %v1330, %v1332
    %v1334 = vrot.slane %v1306, %v1333
    %v1335 = vcombine.high %v1313, %v1313
    %v1336 = vcombine.high %v1320, %v1320
    %v1337 = vcombine.high %v1327, %v1327
    %v1338 = vcombine.high %v1334, %v1334
    %v1339 = vcombine.high %v1179, %v1179
    %v1341 = vunpack.c.l.s4 1966171168
    %v1342 = vunpack.c.0.s8 %v1341
    %v1343 = vlaneseq
    %v1344 = vshrl.u32 %v1343, 7
    %v1345 = vsub.s32 %v1342, %v1344
    %v1346 = vrot.slane %v1179, %v1345
    %v1348 = vunpack.c.l.s4 1966171168
    %v1349 = vunpack.c.0.s8 %v1348
    %v1350 = vlaneseq
    %v1351 = vshrl.u32 %v1350, 7
    %v1352 = vsub.s32 %v1349, %v1351
    %v1353 = vrot.slane %v1339, %v1352
    %v1354 = vcombine.high %v1346, %v1346
    %v1355 = vcombine.high %v1353, %v1353
    %v1357 = vunpack.c.l.s4 1966171168
    %v1358 = vunpack.c.0.s8 %v1357
    %v1359 = vlaneseq
    %v1360 = vshrl.u32 %v1359, 7
    %v1361 = vsub.s32 %v1358, %v1360
    %v1362 = vrot.slane %v1346, %v1361
    %v1364 = vunpack.c.l.s4 1966171168
    %v1365 = vunpack.c.0.s8 %v1364
    %v1366 = vlaneseq
    %v1367 = vshrl.u32 %v1366, 7
    %v1368 = vsub.s32 %v1365, %v1367
    %v1369 = vrot.slane %v1353, %v1368
    %v1371 = vunpack.c.l.s4 1966171168
    %v1372 = vunpack.c.0.s8 %v1371
    %v1373 = vlaneseq
    %v1374 = vshrl.u32 %v1373, 7
    %v1375 = vsub.s32 %v1372, %v1374
    %v1376 = vrot.slane %v1354, %v1375
    %v1378 = vunpack.c.l.s4 1966171168
    %v1379 = vunpack.c.0.s8 %v1378
    %v1380 = vlaneseq
    %v1381 = vshrl.u32 %v1380, 7
    %v1382 = vsub.s32 %v1379, %v1381
    %v1383 = vrot.slane %v1355, %v1382
    %v1384 = vcombine.high %v1362, %v1362
    %v1385 = vcombine.high %v1369, %v1369
    %v1386 = vcombine.high %v1376, %v1376
    %v1387 = vcombine.high %v1383, %v1383
    %v1388 = vcombine.high %v1180, %v1180
    %v1390 = vunpack.c.l.s4 1966171168
    %v1391 = vunpack.c.0.s8 %v1390
    %v1392 = vlaneseq
    %v1393 = vshrl.u32 %v1392, 7
    %v1394 = vsub.s32 %v1391, %v1393
    %v1395 = vrot.slane %v1180, %v1394
    %v1397 = vunpack.c.l.s4 1966171168
    %v1398 = vunpack.c.0.s8 %v1397
    %v1399 = vlaneseq
    %v1400 = vshrl.u32 %v1399, 7
    %v1401 = vsub.s32 %v1398, %v1400
    %v1402 = vrot.slane %v1388, %v1401
    %v1403 = vcombine.high %v1395, %v1395
    %v1404 = vcombine.high %v1402, %v1402
    %v1406 = vunpack.c.l.s4 1966171168
    %v1407 = vunpack.c.0.s8 %v1406
    %v1408 = vlaneseq
    %v1409 = vshrl.u32 %v1408, 7
    %v1410 = vsub.s32 %v1407, %v1409
    %v1411 = vrot.slane %v1395, %v1410
    %v1413 = vunpack.c.l.s4 1966171168
    %v1414 = vunpack.c.0.s8 %v1413
    %v1415 = vlaneseq
    %v1416 = vshrl.u32 %v1415, 7
    %v1417 = vsub.s32 %v1414, %v1416
    %v1418 = vrot.slane %v1402, %v1417
    %v1420 = vunpack.c.l.s4 1966171168
    %v1421 = vunpack.c.0.s8 %v1420
    %v1422 = vlaneseq
    %v1423 = vshrl.u32 %v1422, 7
    %v1424 = vsub.s32 %v1421, %v1423
    %v1425 = vrot.slane %v1403, %v1424
    %v1427 = vunpack.c.l.s4 1966171168
    %v1428 = vunpack.c.0.s8 %v1427
    %v1429 = vlaneseq
    %v1430 = vshrl.u32 %v1429, 7
    %v1431 = vsub.s32 %v1428, %v1430
    %v1432 = vrot.slane %v1404, %v1431
    %v1433 = vcombine.high %v1411, %v1411
    %v1434 = vcombine.high %v1418, %v1418
    %v1435 = vcombine.high %v1425, %v1425
    %v1436 = vcombine.high %v1432, %v1432
    %v1437 = vcombine.high %v1181, %v1181
    %v1439 = vunpack.c.l.s4 1966171168
    %v1440 = vunpack.c.0.s8 %v1439
    %v1441 = vlaneseq
    %v1442 = vshrl.u32 %v1441, 7
    %v1443 = vsub.s32 %v1440, %v1442
    %v1444 = vrot.slane %v1181, %v1443
    %v1446 = vunpack.c.l.s4 1966171168
    %v1447 = vunpack.c.0.s8 %v1446
    %v1448 = vlaneseq
    %v1449 = vshrl.u32 %v1448, 7
    %v1450 = vsub.s32 %v1447, %v1449
    %v1451 = vrot.slane %v1437, %v1450
    %v1452 = vcombine.high %v1444, %v1444
    %v1453 = vcombine.high %v1451, %v1451
    %v1455 = vunpack.c.l.s4 1966171168
    %v1456 = vunpack.c.0.s8 %v1455
    %v1457 = vlaneseq
    %v1458 = vshrl.u32 %v1457, 7
    %v1459 = vsub.s32 %v1456, %v1458
    %v1460 = vrot.slane %v1444, %v1459
    %v1462 = vunpack.c.l.s4 1966171168
    %v1463 = vunpack.c.0.s8 %v1462
    %v1464 = vlaneseq
    %v1465 = vshrl.u32 %v1464, 7
    %v1466 = vsub.s32 %v1463, %v1465
    %v1467 = vrot.slane %v1451, %v1466
    %v1469 = vunpack.c.l.s4 1966171168
    %v1470 = vunpack.c.0.s8 %v1469
    %v1471 = vlaneseq
    %v1472 = vshrl.u32 %v1471, 7
    %v1473 = vsub.s32 %v1470, %v1472
    %v1474 = vrot.slane %v1452, %v1473
    %v1476 = vunpack.c.l.s4 1966171168
    %v1477 = vunpack.c.0.s8 %v1476
    %v1478 = vlaneseq
    %v1479 = vshrl.u32 %v1478, 7
    %v1480 = vsub.s32 %v1477, %v1479
    %v1481 = vrot.slane %v1453, %v1480
    %v1482 = vcombine.high %v1460, %v1460
    %v1483 = vcombine.high %v1467, %v1467
    %v1484 = vcombine.high %v1474, %v1474
    %v1485 = vcombine.high %v1481, %v1481
    %v1486 = vcombine.high %v1182, %v1182
    %v1488 = vunpack.c.l.s4 1966171168
    %v1489 = vunpack.c.0.s8 %v1488
    %v1490 = vlaneseq
    %v1491 = vshrl.u32 %v1490, 7
    %v1492 = vsub.s32 %v1489, %v1491
    %v1493 = vrot.slane %v1182, %v1492
    %v1495 = vunpack.c.l.s4 1966171168
    %v1496 = vunpack.c.0.s8 %v1495
    %v1497 = vlaneseq
    %v1498 = vshrl.u32 %v1497, 7
    %v1499 = vsub.s32 %v1496, %v1498
    %v1500 = vrot.slane %v1486, %v1499
    %v1501 = vcombine.high %v1493, %v1493
    %v1502 = vcombine.high %v1500, %v1500
    %v1504 = vunpack.c.l.s4 1966171168
    %v1505 = vunpack.c.0.s8 %v1504
    %v1506 = vlaneseq
    %v1507 = vshrl.u32 %v1506, 7
    %v1508 = vsub.s32 %v1505, %v1507
    %v1509 = vrot.slane %v1493, %v1508
    %v1511 = vunpack.c.l.s4 1966171168
    %v1512 = vunpack.c.0.s8 %v1511
    %v1513 = vlaneseq
    %v1514 = vshrl.u32 %v1513, 7
    %v1515 = vsub.s32 %v1512, %v1514
    %v1516 = vrot.slane %v1500, %v1515
    %v1518 = vunpack.c.l.s4 1966171168
    %v1519 = vunpack.c.0.s8 %v1518
    %v1520 = vlaneseq
    %v1521 = vshrl.u32 %v1520, 7
    %v1522 = vsub.s32 %v1519, %v1521
    %v1523 = vrot.slane %v1501, %v1522
    %v1525 = vunpack.c.l.s4 1966171168
    %v1526 = vunpack.c.0.s8 %v1525
    %v1527 = vlaneseq
    %v1528 = vshrl.u32 %v1527, 7
    %v1529 = vsub.s32 %v1526, %v1528
    %v1530 = vrot.slane %v1502, %v1529
    %v1531 = vcombine.high %v1509, %v1509
    %v1532 = vcombine.high %v1516, %v1516
    %v1533 = vcombine.high %v1523, %v1523
    %v1534 = vcombine.high %v1530, %v1530
    %v1535 = vcombine.high %v1183, %v1183
    %v1537 = vunpack.c.l.s4 1966171168
    %v1538 = vunpack.c.0.s8 %v1537
    %v1539 = vlaneseq
    %v1540 = vshrl.u32 %v1539, 7
    %v1541 = vsub.s32 %v1538, %v1540
    %v1542 = vrot.slane %v1183, %v1541
    %v1544 = vunpack.c.l.s4 1966171168
    %v1545 = vunpack.c.0.s8 %v1544
    %v1546 = vlaneseq
    %v1547 = vshrl.u32 %v1546, 7
    %v1548 = vsub.s32 %v1545, %v1547
    %v1549 = vrot.slane %v1535, %v1548
    %v1550 = vcombine.high %v1542, %v1542
    %v1551 = vcombine.high %v1549, %v1549
    %v1553 = vunpack.c.l.s4 1966171168
    %v1554 = vunpack.c.0.s8 %v1553
    %v1555 = vlaneseq
    %v1556 = vshrl.u32 %v1555, 7
    %v1557 = vsub.s32 %v1554, %v1556
    %v1558 = vrot.slane %v1542, %v1557
    %v1560 = vunpack.c.l.s4 1966171168
    %v1561 = vunpack.c.0.s8 %v1560
    %v1562 = vlaneseq
    %v1563 = vshrl.u32 %v1562, 7
    %v1564 = vsub.s32 %v1561, %v1563
    %v1565 = vrot.slane %v1549, %v1564
    %v1567 = vunpack.c.l.s4 1966171168
    %v1568 = vunpack.c.0.s8 %v1567
    %v1569 = vlaneseq
    %v1570 = vshrl.u32 %v1569, 7
    %v1571 = vsub.s32 %v1568, %v1570
    %v1572 = vrot.slane %v1550, %v1571
    %v1574 = vunpack.c.l.s4 1966171168
    %v1575 = vunpack.c.0.s8 %v1574
    %v1576 = vlaneseq
    %v1577 = vshrl.u32 %v1576, 7
    %v1578 = vsub.s32 %v1575, %v1577
    %v1579 = vrot.slane %v1551, %v1578
    %v1580 = vcombine.high %v1558, %v1558
    %v1581 = vcombine.high %v1565, %v1565
    %v1582 = vcombine.high %v1572, %v1572
    %v1583 = vcombine.high %v1579, %v1579
    %v1584 = vcombine.high %v1184, %v1184
    %v1586 = vunpack.c.l.s4 1966171168
    %v1587 = vunpack.c.0.s8 %v1586
    %v1588 = vlaneseq
    %v1589 = vshrl.u32 %v1588, 7
    %v1590 = vsub.s32 %v1587, %v1589
    %v1591 = vrot.slane %v1184, %v1590
    %v1593 = vunpack.c.l.s4 1966171168
    %v1594 = vunpack.c.0.s8 %v1593
    %v1595 = vlaneseq
    %v1596 = vshrl.u32 %v1595, 7
    %v1597 = vsub.s32 %v1594, %v1596
    %v1598 = vrot.slane %v1584, %v1597
    %v1599 = vcombine.high %v1591, %v1591
    %v1600 = vcombine.high %v1598, %v1598
    %v1602 = vunpack.c.l.s4 1966171168
    %v1603 = vunpack.c.0.s8 %v1602
    %v1604 = vlaneseq
    %v1605 = vshrl.u32 %v1604, 7
    %v1606 = vsub.s32 %v1603, %v1605
    %v1607 = vrot.slane %v1591, %v1606
    %v1609 = vunpack.c.l.s4 1966171168
    %v1610 = vunpack.c.0.s8 %v1609
    %v1611 = vlaneseq
    %v1612 = vshrl.u32 %v1611, 7
    %v1613 = vsub.s32 %v1610, %v1612
    %v1614 = vrot.slane %v1598, %v1613
    %v1616 = vunpack.c.l.s4 1966171168
    %v1617 = vunpack.c.0.s8 %v1616
    %v1618 = vlaneseq
    %v1619 = vshrl.u32 %v1618, 7
    %v1620 = vsub.s32 %v1617, %v1619
    %v1621 = vrot.slane %v1599, %v1620
    %v1623 = vunpack.c.l.s4 1966171168
    %v1624 = vunpack.c.0.s8 %v1623
    %v1625 = vlaneseq
    %v1626 = vshrl.u32 %v1625, 7
    %v1627 = vsub.s32 %v1624, %v1626
    %v1628 = vrot.slane %v1600, %v1627
    %v1629 = vcombine.high %v1607, %v1607
    %v1630 = vcombine.high %v1614, %v1614
    %v1631 = vcombine.high %v1621, %v1621
    %v1632 = vcombine.high %v1628, %v1628
    %v1633 = vcombine.high %v1185, %v1185
    %v1635 = vunpack.c.l.s4 1966171168
    %v1636 = vunpack.c.0.s8 %v1635
    %v1637 = vlaneseq
    %v1638 = vshrl.u32 %v1637, 7
    %v1639 = vsub.s32 %v1636, %v1638
    %v1640 = vrot.slane %v1185, %v1639
    %v1642 = vunpack.c.l.s4 1966171168
    %v1643 = vunpack.c.0.s8 %v1642
    %v1644 = vlaneseq
    %v1645 = vshrl.u32 %v1644, 7
    %v1646 = vsub.s32 %v1643, %v1645
    %v1647 = vrot.slane %v1633, %v1646
    %v1648 = vcombine.high %v1640, %v1640
    %v1649 = vcombine.high %v1647, %v1647
    %v1651 = vunpack.c.l.s4 1966171168
    %v1652 = vunpack.c.0.s8 %v1651
    %v1653 = vlaneseq
    %v1654 = vshrl.u32 %v1653, 7
    %v1655 = vsub.s32 %v1652, %v1654
    %v1656 = vrot.slane %v1640, %v1655
    %v1658 = vunpack.c.l.s4 1966171168
    %v1659 = vunpack.c.0.s8 %v1658
    %v1660 = vlaneseq
    %v1661 = vshrl.u32 %v1660, 7
    %v1662 = vsub.s32 %v1659, %v1661
    %v1663 = vrot.slane %v1647, %v1662
    %v1665 = vunpack.c.l.s4 1966171168
    %v1666 = vunpack.c.0.s8 %v1665
    %v1667 = vlaneseq
    %v1668 = vshrl.u32 %v1667, 7
    %v1669 = vsub.s32 %v1666, %v1668
    %v1670 = vrot.slane %v1648, %v1669
    %v1672 = vunpack.c.l.s4 1966171168
    %v1673 = vunpack.c.0.s8 %v1672
    %v1674 = vlaneseq
    %v1675 = vshrl.u32 %v1674, 7
    %v1676 = vsub.s32 %v1673, %v1675
    %v1677 = vrot.slane %v1649, %v1676
    %v1678 = vcombine.high %v1656, %v1656
    %v1679 = vcombine.high %v1663, %v1663
    %v1680 = vcombine.high %v1670, %v1670
    %v1681 = vcombine.high %v1677, %v1677
    %v1682 = vcombine.high %v1186, %v1186
    %v1684 = vunpack.c.l.s4 1966171168
    %v1685 = vunpack.c.0.s8 %v1684
    %v1686 = vlaneseq
    %v1687 = vshrl.u32 %v1686, 7
    %v1688 = vsub.s32 %v1685, %v1687
    %v1689 = vrot.slane %v1186, %v1688
    %v1691 = vunpack.c.l.s4 1966171168
    %v1692 = vunpack.c.0.s8 %v1691
    %v1693 = vlaneseq
    %v1694 = vshrl.u32 %v1693, 7
    %v1695 = vsub.s32 %v1692, %v1694
    %v1696 = vrot.slane %v1682, %v1695
    %v1697 = vcombine.high %v1689, %v1689
    %v1698 = vcombine.high %v1696, %v1696
    %v1700 = vunpack.c.l.s4 1966171168
    %v1701 = vunpack.c.0.s8 %v1700
    %v1702 = vlaneseq
    %v1703 = vshrl.u32 %v1702, 7
    %v1704 = vsub.s32 %v1701, %v1703
    %v1705 = vrot.slane %v1689, %v1704
    %v1707 = vunpack.c.l.s4 1966171168
    %v1708 = vunpack.c.0.s8 %v1707
    %v1709 = vlaneseq
    %v1710 = vshrl.u32 %v1709, 7
    %v1711 = vsub.s32 %v1708, %v1710
    %v1712 = vrot.slane %v1696, %v1711
    %v1714 = vunpack.c.l.s4 1966171168
    %v1715 = vunpack.c.0.s8 %v1714
    %v1716 = vlaneseq
    %v1717 = vshrl.u32 %v1716, 7
    %v1718 = vsub.s32 %v1715, %v1717
    %v1719 = vrot.slane %v1697, %v1718
    %v1721 = vunpack.c.l.s4 1966171168
    %v1722 = vunpack.c.0.s8 %v1721
    %v1723 = vlaneseq
    %v1724 = vshrl.u32 %v1723, 7
    %v1725 = vsub.s32 %v1722, %v1724
    %v1726 = vrot.slane %v1698, %v1725
    %v1727 = vcombine.high %v1705, %v1705
    %v1728 = vcombine.high %v1712, %v1712
    %v1729 = vcombine.high %v1719, %v1719
    %v1730 = vcombine.high %v1726, %v1726
    %v1731 = vcombine.high %v1187, %v1187
    %v1733 = vunpack.c.l.s4 1966171168
    %v1734 = vunpack.c.0.s8 %v1733
    %v1735 = vlaneseq
    %v1736 = vshrl.u32 %v1735, 7
    %v1737 = vsub.s32 %v1734, %v1736
    %v1738 = vrot.slane %v1187, %v1737
    %v1740 = vunpack.c.l.s4 1966171168
    %v1741 = vunpack.c.0.s8 %v1740
    %v1742 = vlaneseq
    %v1743 = vshrl.u32 %v1742, 7
    %v1744 = vsub.s32 %v1741, %v1743
    %v1745 = vrot.slane %v1731, %v1744
    %v1746 = vcombine.high %v1738, %v1738
    %v1747 = vcombine.high %v1745, %v1745
    %v1749 = vunpack.c.l.s4 1966171168
    %v1750 = vunpack.c.0.s8 %v1749
    %v1751 = vlaneseq
    %v1752 = vshrl.u32 %v1751, 7
    %v1753 = vsub.s32 %v1750, %v1752
    %v1754 = vrot.slane %v1738, %v1753
    %v1756 = vunpack.c.l.s4 1966171168
    %v1757 = vunpack.c.0.s8 %v1756
    %v1758 = vlaneseq
    %v1759 = vshrl.u32 %v1758, 7
    %v1760 = vsub.s32 %v1757, %v1759
    %v1761 = vrot.slane %v1745, %v1760
    %v1763 = vunpack.c.l.s4 1966171168
    %v1764 = vunpack.c.0.s8 %v1763
    %v1765 = vlaneseq
    %v1766 = vshrl.u32 %v1765, 7
    %v1767 = vsub.s32 %v1764, %v1766
    %v1768 = vrot.slane %v1746, %v1767
    %v1770 = vunpack.c.l.s4 1966171168
    %v1771 = vunpack.c.0.s8 %v1770
    %v1772 = vlaneseq
    %v1773 = vshrl.u32 %v1772, 7
    %v1774 = vsub.s32 %v1771, %v1773
    %v1775 = vrot.slane %v1747, %v1774
    %v1776 = vcombine.high %v1754, %v1754
    %v1777 = vcombine.high %v1761, %v1761
    %v1778 = vcombine.high %v1768, %v1768
    %v1779 = vcombine.high %v1775, %v1775
    %v1780 = vcombine.high %v1188, %v1188
    %v1782 = vunpack.c.l.s4 1966171168
    %v1783 = vunpack.c.0.s8 %v1782
    %v1784 = vlaneseq
    %v1785 = vshrl.u32 %v1784, 7
    %v1786 = vsub.s32 %v1783, %v1785
    %v1787 = vrot.slane %v1188, %v1786
    %v1789 = vunpack.c.l.s4 1966171168
    %v1790 = vunpack.c.0.s8 %v1789
    %v1791 = vlaneseq
    %v1792 = vshrl.u32 %v1791, 7
    %v1793 = vsub.s32 %v1790, %v1792
    %v1794 = vrot.slane %v1780, %v1793
    %v1795 = vcombine.high %v1787, %v1787
    %v1796 = vcombine.high %v1794, %v1794
    %v1798 = vunpack.c.l.s4 1966171168
    %v1799 = vunpack.c.0.s8 %v1798
    %v1800 = vlaneseq
    %v1801 = vshrl.u32 %v1800, 7
    %v1802 = vsub.s32 %v1799, %v1801
    %v1803 = vrot.slane %v1787, %v1802
    %v1805 = vunpack.c.l.s4 1966171168
    %v1806 = vunpack.c.0.s8 %v1805
    %v1807 = vlaneseq
    %v1808 = vshrl.u32 %v1807, 7
    %v1809 = vsub.s32 %v1806, %v1808
    %v1810 = vrot.slane %v1794, %v1809
    %v1812 = vunpack.c.l.s4 1966171168
    %v1813 = vunpack.c.0.s8 %v1812
    %v1814 = vlaneseq
    %v1815 = vshrl.u32 %v1814, 7
    %v1816 = vsub.s32 %v1813, %v1815
    %v1817 = vrot.slane %v1795, %v1816
    %v1819 = vunpack.c.l.s4 1966171168
    %v1820 = vunpack.c.0.s8 %v1819
    %v1821 = vlaneseq
    %v1822 = vshrl.u32 %v1821, 7
    %v1823 = vsub.s32 %v1820, %v1822
    %v1824 = vrot.slane %v1796, %v1823
    %v1825 = vcombine.high %v1803, %v1803
    %v1826 = vcombine.high %v1810, %v1810
    %v1827 = vcombine.high %v1817, %v1817
    %v1828 = vcombine.high %v1824, %v1824
    %v1829 = vcombine.high %v1189, %v1189
    %v1831 = vunpack.c.l.s4 1966171168
    %v1832 = vunpack.c.0.s8 %v1831
    %v1833 = vlaneseq
    %v1834 = vshrl.u32 %v1833, 7
    %v1835 = vsub.s32 %v1832, %v1834
    %v1836 = vrot.slane %v1189, %v1835
    %v1838 = vunpack.c.l.s4 1966171168
    %v1839 = vunpack.c.0.s8 %v1838
    %v1840 = vlaneseq
    %v1841 = vshrl.u32 %v1840, 7
    %v1842 = vsub.s32 %v1839, %v1841
    %v1843 = vrot.slane %v1829, %v1842
    %v1844 = vcombine.high %v1836, %v1836
    %v1845 = vcombine.high %v1843, %v1843
    %v1847 = vunpack.c.l.s4 1966171168
    %v1848 = vunpack.c.0.s8 %v1847
    %v1849 = vlaneseq
    %v1850 = vshrl.u32 %v1849, 7
    %v1851 = vsub.s32 %v1848, %v1850
    %v1852 = vrot.slane %v1836, %v1851
    %v1854 = vunpack.c.l.s4 1966171168
    %v1855 = vunpack.c.0.s8 %v1854
    %v1856 = vlaneseq
    %v1857 = vshrl.u32 %v1856, 7
    %v1858 = vsub.s32 %v1855, %v1857
    %v1859 = vrot.slane %v1843, %v1858
    %v1861 = vunpack.c.l.s4 1966171168
    %v1862 = vunpack.c.0.s8 %v1861
    %v1863 = vlaneseq
    %v1864 = vshrl.u32 %v1863, 7
    %v1865 = vsub.s32 %v1862, %v1864
    %v1866 = vrot.slane %v1844, %v1865
    %v1868 = vunpack.c.l.s4 1966171168
    %v1869 = vunpack.c.0.s8 %v1868
    %v1870 = vlaneseq
    %v1871 = vshrl.u32 %v1870, 7
    %v1872 = vsub.s32 %v1869, %v1871
    %v1873 = vrot.slane %v1845, %v1872
    %v1874 = vcombine.high %v1852, %v1852
    %v1875 = vcombine.high %v1859, %v1859
    %v1876 = vcombine.high %v1866, %v1866
    %v1877 = vcombine.high %v1873, %v1873
    %v1878 = vcombine.high %v1190, %v1190
    %v1880 = vunpack.c.l.s4 1966171168
    %v1881 = vunpack.c.0.s8 %v1880
    %v1882 = vlaneseq
    %v1883 = vshrl.u32 %v1882, 7
    %v1884 = vsub.s32 %v1881, %v1883
    %v1885 = vrot.slane %v1190, %v1884
    %v1887 = vunpack.c.l.s4 1966171168
    %v1888 = vunpack.c.0.s8 %v1887
    %v1889 = vlaneseq
    %v1890 = vshrl.u32 %v1889, 7
    %v1891 = vsub.s32 %v1888, %v1890
    %v1892 = vrot.slane %v1878, %v1891
    %v1893 = vcombine.high %v1885, %v1885
    %v1894 = vcombine.high %v1892, %v1892
    %v1896 = vunpack.c.l.s4 1966171168
    %v1897 = vunpack.c.0.s8 %v1896
    %v1898 = vlaneseq
    %v1899 = vshrl.u32 %v1898, 7
    %v1900 = vsub.s32 %v1897, %v1899
    %v1901 = vrot.slane %v1885, %v1900
    %v1903 = vunpack.c.l.s4 1966171168
    %v1904 = vunpack.c.0.s8 %v1903
    %v1905 = vlaneseq
    %v1906 = vshrl.u32 %v1905, 7
    %v1907 = vsub.s32 %v1904, %v1906
    %v1908 = vrot.slane %v1892, %v1907
    %v1910 = vunpack.c.l.s4 1966171168
    %v1911 = vunpack.c.0.s8 %v1910
    %v1912 = vlaneseq
    %v1913 = vshrl.u32 %v1912, 7
    %v1914 = vsub.s32 %v1911, %v1913
    %v1915 = vrot.slane %v1893, %v1914
    %v1917 = vunpack.c.l.s4 1966171168
    %v1918 = vunpack.c.0.s8 %v1917
    %v1919 = vlaneseq
    %v1920 = vshrl.u32 %v1919, 7
    %v1921 = vsub.s32 %v1918, %v1920
    %v1922 = vrot.slane %v1894, %v1921
    %v1923 = vcombine.high %v1901, %v1901
    %v1924 = vcombine.high %v1908, %v1908
    %v1925 = vcombine.high %v1915, %v1915
    %v1926 = vcombine.high %v1922, %v1922
    %v1927 = vcombine.high %v1191, %v1191
    %v1929 = vunpack.c.l.s4 1966171168
    %v1930 = vunpack.c.0.s8 %v1929
    %v1931 = vlaneseq
    %v1932 = vshrl.u32 %v1931, 7
    %v1933 = vsub.s32 %v1930, %v1932
    %v1934 = vrot.slane %v1191, %v1933
    %v1936 = vunpack.c.l.s4 1966171168
    %v1937 = vunpack.c.0.s8 %v1936
    %v1938 = vlaneseq
    %v1939 = vshrl.u32 %v1938, 7
    %v1940 = vsub.s32 %v1937, %v1939
    %v1941 = vrot.slane %v1927, %v1940
    %v1942 = vcombine.high %v1934, %v1934
    %v1943 = vcombine.high %v1941, %v1941
    %v1945 = vunpack.c.l.s4 1966171168
    %v1946 = vunpack.c.0.s8 %v1945
    %v1947 = vlaneseq
    %v1948 = vshrl.u32 %v1947, 7
    %v1949 = vsub.s32 %v1946, %v1948
    %v1950 = vrot.slane %v1934, %v1949
    %v1952 = vunpack.c.l.s4 1966171168
    %v1953 = vunpack.c.0.s8 %v1952
    %v1954 = vlaneseq
    %v1955 = vshrl.u32 %v1954, 7
    %v1956 = vsub.s32 %v1953, %v1955
    %v1957 = vrot.slane %v1941, %v1956
    %v1959 = vunpack.c.l.s4 1966171168
    %v1960 = vunpack.c.0.s8 %v1959
    %v1961 = vlaneseq
    %v1962 = vshrl.u32 %v1961, 7
    %v1963 = vsub.s32 %v1960, %v1962
    %v1964 = vrot.slane %v1942, %v1963
    %v1966 = vunpack.c.l.s4 1966171168
    %v1967 = vunpack.c.0.s8 %v1966
    %v1968 = vlaneseq
    %v1969 = vshrl.u32 %v1968, 7
    %v1970 = vsub.s32 %v1967, %v1969
    %v1971 = vrot.slane %v1943, %v1970
    %v1972 = vcombine.high %v1950, %v1950
    %v1973 = vcombine.high %v1957, %v1957
    %v1974 = vcombine.high %v1964, %v1964
    %v1975 = vcombine.high %v1971, %v1971
    %v1976 = vcombine.high %v1192, %v1192
    %v1978 = vunpack.c.l.s4 1966171168
    %v1979 = vunpack.c.0.s8 %v1978
    %v1980 = vlaneseq
    %v1981 = vshrl.u32 %v1980, 7
    %v1982 = vsub.s32 %v1979, %v1981
    %v1983 = vrot.slane %v1192, %v1982
    %v1985 = vunpack.c.l.s4 1966171168
    %v1986 = vunpack.c.0.s8 %v1985
    %v1987 = vlaneseq
    %v1988 = vshrl.u32 %v1987, 7
    %v1989 = vsub.s32 %v1986, %v1988
    %v1990 = vrot.slane %v1976, %v1989
    %v1991 = vcombine.high %v1983, %v1983
    %v1992 = vcombine.high %v1990, %v1990
    %v1994 = vunpack.c.l.s4 1966171168
    %v1995 = vunpack.c.0.s8 %v1994
    %v1996 = vlaneseq
    %v1997 = vshrl.u32 %v1996, 7
    %v1998 = vsub.s32 %v1995, %v1997
    %v1999 = vrot.slane %v1983, %v1998
    %v2001 = vunpack.c.l.s4 1966171168
    %v2002 = vunpack.c.0.s8 %v2001
    %v2003 = vlaneseq
    %v2004 = vshrl.u32 %v2003, 7
    %v2005 = vsub.s32 %v2002, %v2004
    %v2006 = vrot.slane %v1990, %v2005
    %v2008 = vunpack.c.l.s4 1966171168
    %v2009 = vunpack.c.0.s8 %v2008
    %v2010 = vlaneseq
    %v2011 = vshrl.u32 %v2010, 7
    %v2012 = vsub.s32 %v2009, %v2011
    %v2013 = vrot.slane %v1991, %v2012
    %v2015 = vunpack.c.l.s4 1966171168
    %v2016 = vunpack.c.0.s8 %v2015
    %v2017 = vlaneseq
    %v2018 = vshrl.u32 %v2017, 7
    %v2019 = vsub.s32 %v2016, %v2018
    %v2020 = vrot.slane %v1992, %v2019
    %v2021 = vcombine.high %v1999, %v1999
    %v2022 = vcombine.high %v2006, %v2006
    %v2023 = vcombine.high %v2013, %v2013
    %v2024 = vcombine.high %v2020, %v2020
    %v2025 = vcombine.high %v1193, %v1193
    %v2027 = vunpack.c.l.s4 1966171168
    %v2028 = vunpack.c.0.s8 %v2027
    %v2029 = vlaneseq
    %v2030 = vshrl.u32 %v2029, 7
    %v2031 = vsub.s32 %v2028, %v2030
    %v2032 = vrot.slane %v1193, %v2031
    %v2034 = vunpack.c.l.s4 1966171168
    %v2035 = vunpack.c.0.s8 %v2034
    %v2036 = vlaneseq
    %v2037 = vshrl.u32 %v2036, 7
    %v2038 = vsub.s32 %v2035, %v2037
    %v2039 = vrot.slane %v2025, %v2038
    %v2040 = vcombine.high %v2032, %v2032
    %v2041 = vcombine.high %v2039, %v2039
    %v2043 = vunpack.c.l.s4 1966171168
    %v2044 = vunpack.c.0.s8 %v2043
    %v2045 = vlaneseq
    %v2046 = vshrl.u32 %v2045, 7
    %v2047 = vsub.s32 %v2044, %v2046
    %v2048 = vrot.slane %v2032, %v2047
    %v2050 = vunpack.c.l.s4 1966171168
    %v2051 = vunpack.c.0.s8 %v2050
    %v2052 = vlaneseq
    %v2053 = vshrl.u32 %v2052, 7
    %v2054 = vsub.s32 %v2051, %v2053
    %v2055 = vrot.slane %v2039, %v2054
    %v2057 = vunpack.c.l.s4 1966171168
    %v2058 = vunpack.c.0.s8 %v2057
    %v2059 = vlaneseq
    %v2060 = vshrl.u32 %v2059, 7
    %v2061 = vsub.s32 %v2058, %v2060
    %v2062 = vrot.slane %v2040, %v2061
    %v2064 = vunpack.c.l.s4 1966171168
    %v2065 = vunpack.c.0.s8 %v2064
    %v2066 = vlaneseq
    %v2067 = vshrl.u32 %v2066, 7
    %v2068 = vsub.s32 %v2065, %v2067
    %v2069 = vrot.slane %v2041, %v2068
    %v2070 = vcombine.high %v2048, %v2048
    %v2071 = vcombine.high %v2055, %v2055
    %v2072 = vcombine.high %v2062, %v2062
    %v2073 = vcombine.high %v2069, %v2069
    %v2074 = vcombine.high %v1194, %v1194
    %v2076 = vunpack.c.l.s4 1966171168
    %v2077 = vunpack.c.0.s8 %v2076
    %v2078 = vlaneseq
    %v2079 = vshrl.u32 %v2078, 7
    %v2080 = vsub.s32 %v2077, %v2079
    %v2081 = vrot.slane %v1194, %v2080
    %v2083 = vunpack.c.l.s4 1966171168
    %v2084 = vunpack.c.0.s8 %v2083
    %v2085 = vlaneseq
    %v2086 = vshrl.u32 %v2085, 7
    %v2087 = vsub.s32 %v2084, %v2086
    %v2088 = vrot.slane %v2074, %v2087
    %v2089 = vcombine.high %v2081, %v2081
    %v2090 = vcombine.high %v2088, %v2088
    %v2092 = vunpack.c.l.s4 1966171168
    %v2093 = vunpack.c.0.s8 %v2092
    %v2094 = vlaneseq
    %v2095 = vshrl.u32 %v2094, 7
    %v2096 = vsub.s32 %v2093, %v2095
    %v2097 = vrot.slane %v2081, %v2096
    %v2099 = vunpack.c.l.s4 1966171168
    %v2100 = vunpack.c.0.s8 %v2099
    %v2101 = vlaneseq
    %v2102 = vshrl.u32 %v2101, 7
    %v2103 = vsub.s32 %v2100, %v2102
    %v2104 = vrot.slane %v2088, %v2103
    %v2106 = vunpack.c.l.s4 1966171168
    %v2107 = vunpack.c.0.s8 %v2106
    %v2108 = vlaneseq
    %v2109 = vshrl.u32 %v2108, 7
    %v2110 = vsub.s32 %v2107, %v2109
    %v2111 = vrot.slane %v2089, %v2110
    %v2113 = vunpack.c.l.s4 1966171168
    %v2114 = vunpack.c.0.s8 %v2113
    %v2115 = vlaneseq
    %v2116 = vshrl.u32 %v2115, 7
    %v2117 = vsub.s32 %v2114, %v2116
    %v2118 = vrot.slane %v2090, %v2117
    %v2119 = vcombine.high %v2097, %v2097
    %v2120 = vcombine.high %v2104, %v2104
    %v2121 = vcombine.high %v2111, %v2111
    %v2122 = vcombine.high %v2118, %v2118
    %v2123 = vcombine.high %v1195, %v1195
    %v2125 = vunpack.c.l.s4 1966171168
    %v2126 = vunpack.c.0.s8 %v2125
    %v2127 = vlaneseq
    %v2128 = vshrl.u32 %v2127, 7
    %v2129 = vsub.s32 %v2126, %v2128
    %v2130 = vrot.slane %v1195, %v2129
    %v2132 = vunpack.c.l.s4 1966171168
    %v2133 = vunpack.c.0.s8 %v2132
    %v2134 = vlaneseq
    %v2135 = vshrl.u32 %v2134, 7
    %v2136 = vsub.s32 %v2133, %v2135
    %v2137 = vrot.slane %v2123, %v2136
    %v2138 = vcombine.high %v2130, %v2130
    %v2139 = vcombine.high %v2137, %v2137
    %v2141 = vunpack.c.l.s4 1966171168
    %v2142 = vunpack.c.0.s8 %v2141
    %v2143 = vlaneseq
    %v2144 = vshrl.u32 %v2143, 7
    %v2145 = vsub.s32 %v2142, %v2144
    %v2146 = vrot.slane %v2130, %v2145
    %v2148 = vunpack.c.l.s4 1966171168
    %v2149 = vunpack.c.0.s8 %v2148
    %v2150 = vlaneseq
    %v2151 = vshrl.u32 %v2150, 7
    %v2152 = vsub.s32 %v2149, %v2151
    %v2153 = vrot.slane %v2137, %v2152
    %v2155 = vunpack.c.l.s4 1966171168
    %v2156 = vunpack.c.0.s8 %v2155
    %v2157 = vlaneseq
    %v2158 = vshrl.u32 %v2157, 7
    %v2159 = vsub.s32 %v2156, %v2158
    %v2160 = vrot.slane %v2138, %v2159
    %v2162 = vunpack.c.l.s4 1966171168
    %v2163 = vunpack.c.0.s8 %v2162
    %v2164 = vlaneseq
    %v2165 = vshrl.u32 %v2164, 7
    %v2166 = vsub.s32 %v2163, %v2165
    %v2167 = vrot.slane %v2139, %v2166
    %v2168 = vcombine.high %v2146, %v2146
    %v2169 = vcombine.high %v2153, %v2153
    %v2170 = vcombine.high %v2160, %v2160
    %v2171 = vcombine.high %v2167, %v2167
    %v2172 = vcombine.high %v1196, %v1196
    %v2174 = vunpack.c.l.s4 1966171168
    %v2175 = vunpack.c.0.s8 %v2174
    %v2176 = vlaneseq
    %v2177 = vshrl.u32 %v2176, 7
    %v2178 = vsub.s32 %v2175, %v2177
    %v2179 = vrot.slane %v1196, %v2178
    %v2181 = vunpack.c.l.s4 1966171168
    %v2182 = vunpack.c.0.s8 %v2181
    %v2183 = vlaneseq
    %v2184 = vshrl.u32 %v2183, 7
    %v2185 = vsub.s32 %v2182, %v2184
    %v2186 = vrot.slane %v2172, %v2185
    %v2187 = vcombine.high %v2179, %v2179
    %v2188 = vcombine.high %v2186, %v2186
    %v2190 = vunpack.c.l.s4 1966171168
    %v2191 = vunpack.c.0.s8 %v2190
    %v2192 = vlaneseq
    %v2193 = vshrl.u32 %v2192, 7
    %v2194 = vsub.s32 %v2191, %v2193
    %v2195 = vrot.slane %v2179, %v2194
    %v2197 = vunpack.c.l.s4 1966171168
    %v2198 = vunpack.c.0.s8 %v2197
    %v2199 = vlaneseq
    %v2200 = vshrl.u32 %v2199, 7
    %v2201 = vsub.s32 %v2198, %v2200
    %v2202 = vrot.slane %v2186, %v2201
    %v2204 = vunpack.c.l.s4 1966171168
    %v2205 = vunpack.c.0.s8 %v2204
    %v2206 = vlaneseq
    %v2207 = vshrl.u32 %v2206, 7
    %v2208 = vsub.s32 %v2205, %v2207
    %v2209 = vrot.slane %v2187, %v2208
    %v2211 = vunpack.c.l.s4 1966171168
    %v2212 = vunpack.c.0.s8 %v2211
    %v2213 = vlaneseq
    %v2214 = vshrl.u32 %v2213, 7
    %v2215 = vsub.s32 %v2212, %v2214
    %v2216 = vrot.slane %v2188, %v2215
    %v2217 = vcombine.high %v2195, %v2195
    %v2218 = vcombine.high %v2202, %v2202
    %v2219 = vcombine.high %v2209, %v2209
    %v2220 = vcombine.high %v2216, %v2216
    %v2221 = vcombine.high %v1197, %v1197
    %v2223 = vunpack.c.l.s4 1966171168
    %v2224 = vunpack.c.0.s8 %v2223
    %v2225 = vlaneseq
    %v2226 = vshrl.u32 %v2225, 7
    %v2227 = vsub.s32 %v2224, %v2226
    %v2228 = vrot.slane %v1197, %v2227
    %v2230 = vunpack.c.l.s4 1966171168
    %v2231 = vunpack.c.0.s8 %v2230
    %v2232 = vlaneseq
    %v2233 = vshrl.u32 %v2232, 7
    %v2234 = vsub.s32 %v2231, %v2233
    %v2235 = vrot.slane %v2221, %v2234
    %v2236 = vcombine.high %v2228, %v2228
    %v2237 = vcombine.high %v2235, %v2235
    %v2239 = vunpack.c.l.s4 1966171168
    %v2240 = vunpack.c.0.s8 %v2239
    %v2241 = vlaneseq
    %v2242 = vshrl.u32 %v2241, 7
    %v2243 = vsub.s32 %v2240, %v2242
    %v2244 = vrot.slane %v2228, %v2243
    %v2246 = vunpack.c.l.s4 1966171168
    %v2247 = vunpack.c.0.s8 %v2246
    %v2248 = vlaneseq
    %v2249 = vshrl.u32 %v2248, 7
    %v2250 = vsub.s32 %v2247, %v2249
    %v2251 = vrot.slane %v2235, %v2250
    %v2253 = vunpack.c.l.s4 1966171168
    %v2254 = vunpack.c.0.s8 %v2253
    %v2255 = vlaneseq
    %v2256 = vshrl.u32 %v2255, 7
    %v2257 = vsub.s32 %v2254, %v2256
    %v2258 = vrot.slane %v2236, %v2257
    %v2260 = vunpack.c.l.s4 1966171168
    %v2261 = vunpack.c.0.s8 %v2260
    %v2262 = vlaneseq
    %v2263 = vshrl.u32 %v2262, 7
    %v2264 = vsub.s32 %v2261, %v2263
    %v2265 = vrot.slane %v2237, %v2264
    %v2266 = vcombine.high %v2244, %v2244
    %v2267 = vcombine.high %v2251, %v2251
    %v2268 = vcombine.high %v2258, %v2258
    %v2269 = vcombine.high %v2265, %v2265
    %v2270 = vcombine.high %v1198, %v1198
    %v2272 = vunpack.c.l.s4 1966171168
    %v2273 = vunpack.c.0.s8 %v2272
    %v2274 = vlaneseq
    %v2275 = vshrl.u32 %v2274, 7
    %v2276 = vsub.s32 %v2273, %v2275
    %v2277 = vrot.slane %v1198, %v2276
    %v2279 = vunpack.c.l.s4 1966171168
    %v2280 = vunpack.c.0.s8 %v2279
    %v2281 = vlaneseq
    %v2282 = vshrl.u32 %v2281, 7
    %v2283 = vsub.s32 %v2280, %v2282
    %v2284 = vrot.slane %v2270, %v2283
    %v2285 = vcombine.high %v2277, %v2277
    %v2286 = vcombine.high %v2284, %v2284
    %v2288 = vunpack.c.l.s4 1966171168
    %v2289 = vunpack.c.0.s8 %v2288
    %v2290 = vlaneseq
    %v2291 = vshrl.u32 %v2290, 7
    %v2292 = vsub.s32 %v2289, %v2291
    %v2293 = vrot.slane %v2277, %v2292
    %v2295 = vunpack.c.l.s4 1966171168
    %v2296 = vunpack.c.0.s8 %v2295
    %v2297 = vlaneseq
    %v2298 = vshrl.u32 %v2297, 7
    %v2299 = vsub.s32 %v2296, %v2298
    %v2300 = vrot.slane %v2284, %v2299
    %v2302 = vunpack.c.l.s4 1966171168
    %v2303 = vunpack.c.0.s8 %v2302
    %v2304 = vlaneseq
    %v2305 = vshrl.u32 %v2304, 7
    %v2306 = vsub.s32 %v2303, %v2305
    %v2307 = vrot.slane %v2285, %v2306
    %v2309 = vunpack.c.l.s4 1966171168
    %v2310 = vunpack.c.0.s8 %v2309
    %v2311 = vlaneseq
    %v2312 = vshrl.u32 %v2311, 7
    %v2313 = vsub.s32 %v2310, %v2312
    %v2314 = vrot.slane %v2286, %v2313
    %v2315 = vcombine.high %v2293, %v2293
    %v2316 = vcombine.high %v2300, %v2300
    %v2317 = vcombine.high %v2307, %v2307
    %v2318 = vcombine.high %v2314, %v2314
    %v2319 = vcombine.high %v1199, %v1199
    %v2321 = vunpack.c.l.s4 1966171168
    %v2322 = vunpack.c.0.s8 %v2321
    %v2323 = vlaneseq
    %v2324 = vshrl.u32 %v2323, 7
    %v2325 = vsub.s32 %v2322, %v2324
    %v2326 = vrot.slane %v1199, %v2325
    %v2328 = vunpack.c.l.s4 1966171168
    %v2329 = vunpack.c.0.s8 %v2328
    %v2330 = vlaneseq
    %v2331 = vshrl.u32 %v2330, 7
    %v2332 = vsub.s32 %v2329, %v2331
    %v2333 = vrot.slane %v2319, %v2332
    %v2334 = vcombine.high %v2326, %v2326
    %v2335 = vcombine.high %v2333, %v2333
    %v2337 = vunpack.c.l.s4 1966171168
    %v2338 = vunpack.c.0.s8 %v2337
    %v2339 = vlaneseq
    %v2340 = vshrl.u32 %v2339, 7
    %v2341 = vsub.s32 %v2338, %v2340
    %v2342 = vrot.slane %v2326, %v2341
    %v2344 = vunpack.c.l.s4 1966171168
    %v2345 = vunpack.c.0.s8 %v2344
    %v2346 = vlaneseq
    %v2347 = vshrl.u32 %v2346, 7
    %v2348 = vsub.s32 %v2345, %v2347
    %v2349 = vrot.slane %v2333, %v2348
    %v2351 = vunpack.c.l.s4 1966171168
    %v2352 = vunpack.c.0.s8 %v2351
    %v2353 = vlaneseq
    %v2354 = vshrl.u32 %v2353, 7
    %v2355 = vsub.s32 %v2352, %v2354
    %v2356 = vrot.slane %v2334, %v2355
    %v2358 = vunpack.c.l.s4 1966171168
    %v2359 = vunpack.c.0.s8 %v2358
    %v2360 = vlaneseq
    %v2361 = vshrl.u32 %v2360, 7
    %v2362 = vsub.s32 %v2359, %v2361
    %v2363 = vrot.slane %v2335, %v2362
    %v2364 = vcombine.high %v2342, %v2342
    %v2365 = vcombine.high %v2349, %v2349
    %v2366 = vcombine.high %v2356, %v2356
    %v2367 = vcombine.high %v2363, %v2363
    %v2368 = vcombine.high %v1200, %v1200
    %v2370 = vunpack.c.l.s4 1966171168
    %v2371 = vunpack.c.0.s8 %v2370
    %v2372 = vlaneseq
    %v2373 = vshrl.u32 %v2372, 7
    %v2374 = vsub.s32 %v2371, %v2373
    %v2375 = vrot.slane %v1200, %v2374
    %v2377 = vunpack.c.l.s4 1966171168
    %v2378 = vunpack.c.0.s8 %v2377
    %v2379 = vlaneseq
    %v2380 = vshrl.u32 %v2379, 7
    %v2381 = vsub.s32 %v2378, %v2380
    %v2382 = vrot.slane %v2368, %v2381
    %v2383 = vcombine.high %v2375, %v2375
    %v2384 = vcombine.high %v2382, %v2382
    %v2386 = vunpack.c.l.s4 1966171168
    %v2387 = vunpack.c.0.s8 %v2386
    %v2388 = vlaneseq
    %v2389 = vshrl.u32 %v2388, 7
    %v2390 = vsub.s32 %v2387, %v2389
    %v2391 = vrot.slane %v2375, %v2390
    %v2393 = vunpack.c.l.s4 1966171168
    %v2394 = vunpack.c.0.s8 %v2393
    %v2395 = vlaneseq
    %v2396 = vshrl.u32 %v2395, 7
    %v2397 = vsub.s32 %v2394, %v2396
    %v2398 = vrot.slane %v2382, %v2397
    %v2400 = vunpack.c.l.s4 1966171168
    %v2401 = vunpack.c.0.s8 %v2400
    %v2402 = vlaneseq
    %v2403 = vshrl.u32 %v2402, 7
    %v2404 = vsub.s32 %v2401, %v2403
    %v2405 = vrot.slane %v2383, %v2404
    %v2407 = vunpack.c.l.s4 1966171168
    %v2408 = vunpack.c.0.s8 %v2407
    %v2409 = vlaneseq
    %v2410 = vshrl.u32 %v2409, 7
    %v2411 = vsub.s32 %v2408, %v2410
    %v2412 = vrot.slane %v2384, %v2411
    %v2413 = vcombine.high %v2391, %v2391
    %v2414 = vcombine.high %v2398, %v2398
    %v2415 = vcombine.high %v2405, %v2405
    %v2416 = vcombine.high %v2412, %v2412
    %v2417 = vcombine.high %v1201, %v1201
    %v2419 = vunpack.c.l.s4 1966171168
    %v2420 = vunpack.c.0.s8 %v2419
    %v2421 = vlaneseq
    %v2422 = vshrl.u32 %v2421, 7
    %v2423 = vsub.s32 %v2420, %v2422
    %v2424 = vrot.slane %v1201, %v2423
    %v2426 = vunpack.c.l.s4 1966171168
    %v2427 = vunpack.c.0.s8 %v2426
    %v2428 = vlaneseq
    %v2429 = vshrl.u32 %v2428, 7
    %v2430 = vsub.s32 %v2427, %v2429
    %v2431 = vrot.slane %v2417, %v2430
    %v2432 = vcombine.high %v2424, %v2424
    %v2433 = vcombine.high %v2431, %v2431
    %v2435 = vunpack.c.l.s4 1966171168
    %v2436 = vunpack.c.0.s8 %v2435
    %v2437 = vlaneseq
    %v2438 = vshrl.u32 %v2437, 7
    %v2439 = vsub.s32 %v2436, %v2438
    %v2440 = vrot.slane %v2424, %v2439
    %v2442 = vunpack.c.l.s4 1966171168
    %v2443 = vunpack.c.0.s8 %v2442
    %v2444 = vlaneseq
    %v2445 = vshrl.u32 %v2444, 7
    %v2446 = vsub.s32 %v2443, %v2445
    %v2447 = vrot.slane %v2431, %v2446
    %v2449 = vunpack.c.l.s4 1966171168
    %v2450 = vunpack.c.0.s8 %v2449
    %v2451 = vlaneseq
    %v2452 = vshrl.u32 %v2451, 7
    %v2453 = vsub.s32 %v2450, %v2452
    %v2454 = vrot.slane %v2432, %v2453
    %v2456 = vunpack.c.l.s4 1966171168
    %v2457 = vunpack.c.0.s8 %v2456
    %v2458 = vlaneseq
    %v2459 = vshrl.u32 %v2458, 7
    %v2460 = vsub.s32 %v2457, %v2459
    %v2461 = vrot.slane %v2433, %v2460
    %v2462 = vcombine.high %v2440, %v2440
    %v2463 = vcombine.high %v2447, %v2447
    %v2464 = vcombine.high %v2454, %v2454
    %v2465 = vcombine.high %v2461, %v2461
    %v2466 = vcombine.high %v1202, %v1202
    %v2468 = vunpack.c.l.s4 1966171168
    %v2469 = vunpack.c.0.s8 %v2468
    %v2470 = vlaneseq
    %v2471 = vshrl.u32 %v2470, 7
    %v2472 = vsub.s32 %v2469, %v2471
    %v2473 = vrot.slane %v1202, %v2472
    %v2475 = vunpack.c.l.s4 1966171168
    %v2476 = vunpack.c.0.s8 %v2475
    %v2477 = vlaneseq
    %v2478 = vshrl.u32 %v2477, 7
    %v2479 = vsub.s32 %v2476, %v2478
    %v2480 = vrot.slane %v2466, %v2479
    %v2481 = vcombine.high %v2473, %v2473
    %v2482 = vcombine.high %v2480, %v2480
    %v2484 = vunpack.c.l.s4 1966171168
    %v2485 = vunpack.c.0.s8 %v2484
    %v2486 = vlaneseq
    %v2487 = vshrl.u32 %v2486, 7
    %v2488 = vsub.s32 %v2485, %v2487
    %v2489 = vrot.slane %v2473, %v2488
    %v2491 = vunpack.c.l.s4 1966171168
    %v2492 = vunpack.c.0.s8 %v2491
    %v2493 = vlaneseq
    %v2494 = vshrl.u32 %v2493, 7
    %v2495 = vsub.s32 %v2492, %v2494
    %v2496 = vrot.slane %v2480, %v2495
    %v2498 = vunpack.c.l.s4 1966171168
    %v2499 = vunpack.c.0.s8 %v2498
    %v2500 = vlaneseq
    %v2501 = vshrl.u32 %v2500, 7
    %v2502 = vsub.s32 %v2499, %v2501
    %v2503 = vrot.slane %v2481, %v2502
    %v2505 = vunpack.c.l.s4 1966171168
    %v2506 = vunpack.c.0.s8 %v2505
    %v2507 = vlaneseq
    %v2508 = vshrl.u32 %v2507, 7
    %v2509 = vsub.s32 %v2506, %v2508
    %v2510 = vrot.slane %v2482, %v2509
    %v2511 = vcombine.high %v2489, %v2489
    %v2512 = vcombine.high %v2496, %v2496
    %v2513 = vcombine.high %v2503, %v2503
    %v2514 = vcombine.high %v2510, %v2510
    %v2515 = vcombine.high %v1203, %v1203
    %v2517 = vunpack.c.l.s4 1966171168
    %v2518 = vunpack.c.0.s8 %v2517
    %v2519 = vlaneseq
    %v2520 = vshrl.u32 %v2519, 7
    %v2521 = vsub.s32 %v2518, %v2520
    %v2522 = vrot.slane %v1203, %v2521
    %v2524 = vunpack.c.l.s4 1966171168
    %v2525 = vunpack.c.0.s8 %v2524
    %v2526 = vlaneseq
    %v2527 = vshrl.u32 %v2526, 7
    %v2528 = vsub.s32 %v2525, %v2527
    %v2529 = vrot.slane %v2515, %v2528
    %v2530 = vcombine.high %v2522, %v2522
    %v2531 = vcombine.high %v2529, %v2529
    %v2533 = vunpack.c.l.s4 1966171168
    %v2534 = vunpack.c.0.s8 %v2533
    %v2535 = vlaneseq
    %v2536 = vshrl.u32 %v2535, 7
    %v2537 = vsub.s32 %v2534, %v2536
    %v2538 = vrot.slane %v2522, %v2537
    %v2540 = vunpack.c.l.s4 1966171168
    %v2541 = vunpack.c.0.s8 %v2540
    %v2542 = vlaneseq
    %v2543 = vshrl.u32 %v2542, 7
    %v2544 = vsub.s32 %v2541, %v2543
    %v2545 = vrot.slane %v2529, %v2544
    %v2547 = vunpack.c.l.s4 1966171168
    %v2548 = vunpack.c.0.s8 %v2547
    %v2549 = vlaneseq
    %v2550 = vshrl.u32 %v2549, 7
    %v2551 = vsub.s32 %v2548, %v2550
    %v2552 = vrot.slane %v2530, %v2551
    %v2554 = vunpack.c.l.s4 1966171168
    %v2555 = vunpack.c.0.s8 %v2554
    %v2556 = vlaneseq
    %v2557 = vshrl.u32 %v2556, 7
    %v2558 = vsub.s32 %v2555, %v2557
    %v2559 = vrot.slane %v2531, %v2558
    %v2560 = vcombine.high %v2538, %v2538
    %v2561 = vcombine.high %v2545, %v2545
    %v2562 = vcombine.high %v2552, %v2552
    %v2563 = vcombine.high %v2559, %v2559
    %v2564 = vcombine.high %v1204, %v1204
    %v2566 = vunpack.c.l.s4 1966171168
    %v2567 = vunpack.c.0.s8 %v2566
    %v2568 = vlaneseq
    %v2569 = vshrl.u32 %v2568, 7
    %v2570 = vsub.s32 %v2567, %v2569
    %v2571 = vrot.slane %v1204, %v2570
    %v2573 = vunpack.c.l.s4 1966171168
    %v2574 = vunpack.c.0.s8 %v2573
    %v2575 = vlaneseq
    %v2576 = vshrl.u32 %v2575, 7
    %v2577 = vsub.s32 %v2574, %v2576
    %v2578 = vrot.slane %v2564, %v2577
    %v2579 = vcombine.high %v2571, %v2571
    %v2580 = vcombine.high %v2578, %v2578
    %v2582 = vunpack.c.l.s4 1966171168
    %v2583 = vunpack.c.0.s8 %v2582
    %v2584 = vlaneseq
    %v2585 = vshrl.u32 %v2584, 7
    %v2586 = vsub.s32 %v2583, %v2585
    %v2587 = vrot.slane %v2571, %v2586
    %v2589 = vunpack.c.l.s4 1966171168
    %v2590 = vunpack.c.0.s8 %v2589
    %v2591 = vlaneseq
    %v2592 = vshrl.u32 %v2591, 7
    %v2593 = vsub.s32 %v2590, %v2592
    %v2594 = vrot.slane %v2578, %v2593
    %v2596 = vunpack.c.l.s4 1966171168
    %v2597 = vunpack.c.0.s8 %v2596
    %v2598 = vlaneseq
    %v2599 = vshrl.u32 %v2598, 7
    %v2600 = vsub.s32 %v2597, %v2599
    %v2601 = vrot.slane %v2579, %v2600
    %v2603 = vunpack.c.l.s4 1966171168
    %v2604 = vunpack.c.0.s8 %v2603
    %v2605 = vlaneseq
    %v2606 = vshrl.u32 %v2605, 7
    %v2607 = vsub.s32 %v2604, %v2606
    %v2608 = vrot.slane %v2580, %v2607
    %v2609 = vcombine.high %v2587, %v2587
    %v2610 = vcombine.high %v2594, %v2594
    %v2611 = vcombine.high %v2601, %v2601
    %v2612 = vcombine.high %v2608, %v2608
    %v2613 = vcombine.high %v1205, %v1205
    %v2615 = vunpack.c.l.s4 1966171168
    %v2616 = vunpack.c.0.s8 %v2615
    %v2617 = vlaneseq
    %v2618 = vshrl.u32 %v2617, 7
    %v2619 = vsub.s32 %v2616, %v2618
    %v2620 = vrot.slane %v1205, %v2619
    %v2622 = vunpack.c.l.s4 1966171168
    %v2623 = vunpack.c.0.s8 %v2622
    %v2624 = vlaneseq
    %v2625 = vshrl.u32 %v2624, 7
    %v2626 = vsub.s32 %v2623, %v2625
    %v2627 = vrot.slane %v2613, %v2626
    %v2628 = vcombine.high %v2620, %v2620
    %v2629 = vcombine.high %v2627, %v2627
    %v2631 = vunpack.c.l.s4 1966171168
    %v2632 = vunpack.c.0.s8 %v2631
    %v2633 = vlaneseq
    %v2634 = vshrl.u32 %v2633, 7
    %v2635 = vsub.s32 %v2632, %v2634
    %v2636 = vrot.slane %v2620, %v2635
    %v2638 = vunpack.c.l.s4 1966171168
    %v2639 = vunpack.c.0.s8 %v2638
    %v2640 = vlaneseq
    %v2641 = vshrl.u32 %v2640, 7
    %v2642 = vsub.s32 %v2639, %v2641
    %v2643 = vrot.slane %v2627, %v2642
    %v2645 = vunpack.c.l.s4 1966171168
    %v2646 = vunpack.c.0.s8 %v2645
    %v2647 = vlaneseq
    %v2648 = vshrl.u32 %v2647, 7
    %v2649 = vsub.s32 %v2646, %v2648
    %v2650 = vrot.slane %v2628, %v2649
    %v2652 = vunpack.c.l.s4 1966171168
    %v2653 = vunpack.c.0.s8 %v2652
    %v2654 = vlaneseq
    %v2655 = vshrl.u32 %v2654, 7
    %v2656 = vsub.s32 %v2653, %v2655
    %v2657 = vrot.slane %v2629, %v2656
    %v2658 = vcombine.high %v2636, %v2636
    %v2659 = vcombine.high %v2643, %v2643
    %v2660 = vcombine.high %v2650, %v2650
    %v2661 = vcombine.high %v2657, %v2657
    %v2662 = vcombine.high %v1206, %v1206
    %v2664 = vunpack.c.l.s4 1966171168
    %v2665 = vunpack.c.0.s8 %v2664
    %v2666 = vlaneseq
    %v2667 = vshrl.u32 %v2666, 7
    %v2668 = vsub.s32 %v2665, %v2667
    %v2669 = vrot.slane %v1206, %v2668
    %v2671 = vunpack.c.l.s4 1966171168
    %v2672 = vunpack.c.0.s8 %v2671
    %v2673 = vlaneseq
    %v2674 = vshrl.u32 %v2673, 7
    %v2675 = vsub.s32 %v2672, %v2674
    %v2676 = vrot.slane %v2662, %v2675
    %v2677 = vcombine.high %v2669, %v2669
    %v2678 = vcombine.high %v2676, %v2676
    %v2680 = vunpack.c.l.s4 1966171168
    %v2681 = vunpack.c.0.s8 %v2680
    %v2682 = vlaneseq
    %v2683 = vshrl.u32 %v2682, 7
    %v2684 = vsub.s32 %v2681, %v2683
    %v2685 = vrot.slane %v2669, %v2684
    %v2687 = vunpack.c.l.s4 1966171168
    %v2688 = vunpack.c.0.s8 %v2687
    %v2689 = vlaneseq
    %v2690 = vshrl.u32 %v2689, 7
    %v2691 = vsub.s32 %v2688, %v2690
    %v2692 = vrot.slane %v2676, %v2691
    %v2694 = vunpack.c.l.s4 1966171168
    %v2695 = vunpack.c.0.s8 %v2694
    %v2696 = vlaneseq
    %v2697 = vshrl.u32 %v2696, 7
    %v2698 = vsub.s32 %v2695, %v2697
    %v2699 = vrot.slane %v2677, %v2698
    %v2701 = vunpack.c.l.s4 1966171168
    %v2702 = vunpack.c.0.s8 %v2701
    %v2703 = vlaneseq
    %v2704 = vshrl.u32 %v2703, 7
    %v2705 = vsub.s32 %v2702, %v2704
    %v2706 = vrot.slane %v2678, %v2705
    %v2707 = vcombine.high %v2685, %v2685
    %v2708 = vcombine.high %v2692, %v2692
    %v2709 = vcombine.high %v2699, %v2699
    %v2710 = vcombine.high %v2706, %v2706
    %v2711 = vcombine.high %v1207, %v1207
    %v2713 = vunpack.c.l.s4 1966171168
    %v2714 = vunpack.c.0.s8 %v2713
    %v2715 = vlaneseq
    %v2716 = vshrl.u32 %v2715, 7
    %v2717 = vsub.s32 %v2714, %v2716
    %v2718 = vrot.slane %v1207, %v2717
    %v2720 = vunpack.c.l.s4 1966171168
    %v2721 = vunpack.c.0.s8 %v2720
    %v2722 = vlaneseq
    %v2723 = vshrl.u32 %v2722, 7
    %v2724 = vsub.s32 %v2721, %v2723
    %v2725 = vrot.slane %v2711, %v2724
    %v2726 = vcombine.high %v2718, %v2718
    %v2727 = vcombine.high %v2725, %v2725
    %v2729 = vunpack.c.l.s4 1966171168
    %v2730 = vunpack.c.0.s8 %v2729
    %v2731 = vlaneseq
    %v2732 = vshrl.u32 %v2731, 7
    %v2733 = vsub.s32 %v2730, %v2732
    %v2734 = vrot.slane %v2718, %v2733
    %v2736 = vunpack.c.l.s4 1966171168
    %v2737 = vunpack.c.0.s8 %v2736
    %v2738 = vlaneseq
    %v2739 = vshrl.u32 %v2738, 7
    %v2740 = vsub.s32 %v2737, %v2739
    %v2741 = vrot.slane %v2725, %v2740
    %v2743 = vunpack.c.l.s4 1966171168
    %v2744 = vunpack.c.0.s8 %v2743
    %v2745 = vlaneseq
    %v2746 = vshrl.u32 %v2745, 7
    %v2747 = vsub.s32 %v2744, %v2746
    %v2748 = vrot.slane %v2726, %v2747
    %v2750 = vunpack.c.l.s4 1966171168
    %v2751 = vunpack.c.0.s8 %v2750
    %v2752 = vlaneseq
    %v2753 = vshrl.u32 %v2752, 7
    %v2754 = vsub.s32 %v2751, %v2753
    %v2755 = vrot.slane %v2727, %v2754
    %v2756 = vcombine.high %v2734, %v2734
    %v2757 = vcombine.high %v2741, %v2741
    %v2758 = vcombine.high %v2748, %v2748
    %v2759 = vcombine.high %v2755, %v2755
    %v2760 = vcombine.high %v1208, %v1208
    %v2762 = vunpack.c.l.s4 1966171168
    %v2763 = vunpack.c.0.s8 %v2762
    %v2764 = vlaneseq
    %v2765 = vshrl.u32 %v2764, 7
    %v2766 = vsub.s32 %v2763, %v2765
    %v2767 = vrot.slane %v1208, %v2766
    %v2769 = vunpack.c.l.s4 1966171168
    %v2770 = vunpack.c.0.s8 %v2769
    %v2771 = vlaneseq
    %v2772 = vshrl.u32 %v2771, 7
    %v2773 = vsub.s32 %v2770, %v2772
    %v2774 = vrot.slane %v2760, %v2773
    %v2775 = vcombine.high %v2767, %v2767
    %v2776 = vcombine.high %v2774, %v2774
    %v2778 = vunpack.c.l.s4 1966171168
    %v2779 = vunpack.c.0.s8 %v2778
    %v2780 = vlaneseq
    %v2781 = vshrl.u32 %v2780, 7
    %v2782 = vsub.s32 %v2779, %v2781
    %v2783 = vrot.slane %v2767, %v2782
    %v2785 = vunpack.c.l.s4 1966171168
    %v2786 = vunpack.c.0.s8 %v2785
    %v2787 = vlaneseq
    %v2788 = vshrl.u32 %v2787, 7
    %v2789 = vsub.s32 %v2786, %v2788
    %v2790 = vrot.slane %v2774, %v2789
    %v2792 = vunpack.c.l.s4 1966171168
    %v2793 = vunpack.c.0.s8 %v2792
    %v2794 = vlaneseq
    %v2795 = vshrl.u32 %v2794, 7
    %v2796 = vsub.s32 %v2793, %v2795
    %v2797 = vrot.slane %v2775, %v2796
    %v2799 = vunpack.c.l.s4 1966171168
    %v2800 = vunpack.c.0.s8 %v2799
    %v2801 = vlaneseq
    %v2802 = vshrl.u32 %v2801, 7
    %v2803 = vsub.s32 %v2800, %v2802
    %v2804 = vrot.slane %v2776, %v2803
    %v2805 = vcombine.high %v2783, %v2783
    %v2806 = vcombine.high %v2790, %v2790
    %v2807 = vcombine.high %v2797, %v2797
    %v2808 = vcombine.high %v2804, %v2804
    %v2809 = vcombine.low %v1264, %v1278
    %v2810 = vcombine.low %v1286, %v1288
    %v2811 = vcombine.low %v1271, %v1285
    %v2812 = vcombine.low %v1287, %v1289
    %v2814 = vunpack.c.l.s4 1966171168
    %v2815 = vunpack.c.0.s8 %v2814
    %v2816 = vlaneseq
    %v2817 = vshrl.u32 %v2816, 7
    %v2818 = vsub.s32 %v2815, %v2817
    %v2819 = vrot.slane %v2809, %v2818
    %v2821 = vunpack.c.l.s4 1966171168
    %v2822 = vunpack.c.0.s8 %v2821
    %v2823 = vlaneseq
    %v2824 = vshrl.u32 %v2823, 7
    %v2825 = vsub.s32 %v2822, %v2824
    %v2826 = vrot.slane %v2810, %v2825
    %v2828 = vunpack.c.l.s4 1966171168
    %v2829 = vunpack.c.0.s8 %v2828
    %v2830 = vlaneseq
    %v2831 = vshrl.u32 %v2830, 7
    %v2832 = vsub.s32 %v2829, %v2831
    %v2833 = vrot.slane %v2811, %v2832
    %v2835 = vunpack.c.l.s4 1966171168
    %v2836 = vunpack.c.0.s8 %v2835
    %v2837 = vlaneseq
    %v2838 = vshrl.u32 %v2837, 7
    %v2839 = vsub.s32 %v2836, %v2838
    %v2840 = vrot.slane %v2812, %v2839
    %v2841 = vcombine.low %v2819, %v2826
    %v2842 = vcombine.low %v2833, %v2840
    %v2844 = vunpack.c.l.s4 1966171168
    %v2845 = vunpack.c.0.s8 %v2844
    %v2846 = vlaneseq
    %v2847 = vshrl.u32 %v2846, 7
    %v2848 = vsub.s32 %v2845, %v2847
    %v2849 = vrot.slane %v2841, %v2848
    %v2851 = vunpack.c.l.s4 1966171168
    %v2852 = vunpack.c.0.s8 %v2851
    %v2853 = vlaneseq
    %v2854 = vshrl.u32 %v2853, 7
    %v2855 = vsub.s32 %v2852, %v2854
    %v2856 = vrot.slane %v2842, %v2855
    %v2857 = vcombine.low %v2849, %v2856
    %v2858 = vcombine.low %v1313, %v1327
    %v2859 = vcombine.low %v1335, %v1337
    %v2860 = vcombine.low %v1320, %v1334
    %v2861 = vcombine.low %v1336, %v1338
    %v2863 = vunpack.c.l.s4 1966171168
    %v2864 = vunpack.c.0.s8 %v2863
    %v2865 = vlaneseq
    %v2866 = vshrl.u32 %v2865, 7
    %v2867 = vsub.s32 %v2864, %v2866
    %v2868 = vrot.slane %v2858, %v2867
    %v2870 = vunpack.c.l.s4 1966171168
    %v2871 = vunpack.c.0.s8 %v2870
    %v2872 = vlaneseq
    %v2873 = vshrl.u32 %v2872, 7
    %v2874 = vsub.s32 %v2871, %v2873
    %v2875 = vrot.slane %v2859, %v2874
    %v2877 = vunpack.c.l.s4 1966171168
    %v2878 = vunpack.c.0.s8 %v2877
    %v2879 = vlaneseq
    %v2880 = vshrl.u32 %v2879, 7
    %v2881 = vsub.s32 %v2878, %v2880
    %v2882 = vrot.slane %v2860, %v2881
    %v2884 = vunpack.c.l.s4 1966171168
    %v2885 = vunpack.c.0.s8 %v2884
    %v2886 = vlaneseq
    %v2887 = vshrl.u32 %v2886, 7
    %v2888 = vsub.s32 %v2885, %v2887
    %v2889 = vrot.slane %v2861, %v2888
    %v2890 = vcombine.low %v2868, %v2875
    %v2891 = vcombine.low %v2882, %v2889
    %v2893 = vunpack.c.l.s4 1966171168
    %v2894 = vunpack.c.0.s8 %v2893
    %v2895 = vlaneseq
    %v2896 = vshrl.u32 %v2895, 7
    %v2897 = vsub.s32 %v2894, %v2896
    %v2898 = vrot.slane %v2890, %v2897
    %v2900 = vunpack.c.l.s4 1966171168
    %v2901 = vunpack.c.0.s8 %v2900
    %v2902 = vlaneseq
    %v2903 = vshrl.u32 %v2902, 7
    %v2904 = vsub.s32 %v2901, %v2903
    %v2905 = vrot.slane %v2891, %v2904
    %v2906 = vcombine.low %v2898, %v2905
    %v2907 = vcombine.low %v1362, %v1376
    %v2908 = vcombine.low %v1384, %v1386
    %v2909 = vcombine.low %v1369, %v1383
    %v2910 = vcombine.low %v1385, %v1387
    %v2912 = vunpack.c.l.s4 1966171168
    %v2913 = vunpack.c.0.s8 %v2912
    %v2914 = vlaneseq
    %v2915 = vshrl.u32 %v2914, 7
    %v2916 = vsub.s32 %v2913, %v2915
    %v2917 = vrot.slane %v2907, %v2916
    %v2919 = vunpack.c.l.s4 1966171168
    %v2920 = vunpack.c.0.s8 %v2919
    %v2921 = vlaneseq
    %v2922 = vshrl.u32 %v2921, 7
    %v2923 = vsub.s32 %v2920, %v2922
    %v2924 = vrot.slane %v2908, %v2923
    %v2926 = vunpack.c.l.s4 1966171168
    %v2927 = vunpack.c.0.s8 %v2926
    %v2928 = vlaneseq
    %v2929 = vshrl.u32 %v2928, 7
    %v2930 = vsub.s32 %v2927, %v2929
    %v2931 = vrot.slane %v2909, %v2930
    %v2933 = vunpack.c.l.s4 1966171168
    %v2934 = vunpack.c.0.s8 %v2933
    %v2935 = vlaneseq
    %v2936 = vshrl.u32 %v2935, 7
    %v2937 = vsub.s32 %v2934, %v2936
    %v2938 = vrot.slane %v2910, %v2937
    %v2939 = vcombine.low %v2917, %v2924
    %v2940 = vcombine.low %v2931, %v2938
    %v2942 = vunpack.c.l.s4 1966171168
    %v2943 = vunpack.c.0.s8 %v2942
    %v2944 = vlaneseq
    %v2945 = vshrl.u32 %v2944, 7
    %v2946 = vsub.s32 %v2943, %v2945
    %v2947 = vrot.slane %v2939, %v2946
    %v2949 = vunpack.c.l.s4 1966171168
    %v2950 = vunpack.c.0.s8 %v2949
    %v2951 = vlaneseq
    %v2952 = vshrl.u32 %v2951, 7
    %v2953 = vsub.s32 %v2950, %v2952
    %v2954 = vrot.slane %v2940, %v2953
    %v2955 = vcombine.low %v2947, %v2954
    %v2956 = vcombine.low %v1411, %v1425
    %v2957 = vcombine.low %v1433, %v1435
    %v2958 = vcombine.low %v1418, %v1432
    %v2959 = vcombine.low %v1434, %v1436
    %v2961 = vunpack.c.l.s4 1966171168
    %v2962 = vunpack.c.0.s8 %v2961
    %v2963 = vlaneseq
    %v2964 = vshrl.u32 %v2963, 7
    %v2965 = vsub.s32 %v2962, %v2964
    %v2966 = vrot.slane %v2956, %v2965
    %v2968 = vunpack.c.l.s4 1966171168
    %v2969 = vunpack.c.0.s8 %v2968
    %v2970 = vlaneseq
    %v2971 = vshrl.u32 %v2970, 7
    %v2972 = vsub.s32 %v2969, %v2971
    %v2973 = vrot.slane %v2957, %v2972
    %v2975 = vunpack.c.l.s4 1966171168
    %v2976 = vunpack.c.0.s8 %v2975
    %v2977 = vlaneseq
    %v2978 = vshrl.u32 %v2977, 7
    %v2979 = vsub.s32 %v2976, %v2978
    %v2980 = vrot.slane %v2958, %v2979
    %v2982 = vunpack.c.l.s4 1966171168
    %v2983 = vunpack.c.0.s8 %v2982
    %v2984 = vlaneseq
    %v2985 = vshrl.u32 %v2984, 7
    %v2986 = vsub.s32 %v2983, %v2985
    %v2987 = vrot.slane %v2959, %v2986
    %v2988 = vcombine.low %v2966, %v2973
    %v2989 = vcombine.low %v2980, %v2987
    %v2991 = vunpack.c.l.s4 1966171168
    %v2992 = vunpack.c.0.s8 %v2991
    %v2993 = vlaneseq
    %v2994 = vshrl.u32 %v2993, 7
    %v2995 = vsub.s32 %v2992, %v2994
    %v2996 = vrot.slane %v2988, %v2995
    %v2998 = vunpack.c.l.s4 1966171168
    %v2999 = vunpack.c.0.s8 %v2998
    %v3000 = vlaneseq
    %v3001 = vshrl.u32 %v3000, 7
    %v3002 = vsub.s32 %v2999, %v3001
    %v3003 = vrot.slane %v2989, %v3002
    %v3004 = vcombine.low %v2996, %v3003
    %v3005 = vcombine.low %v1460, %v1474
    %v3006 = vcombine.low %v1482, %v1484
    %v3007 = vcombine.low %v1467, %v1481
    %v3008 = vcombine.low %v1483, %v1485
    %v3010 = vunpack.c.l.s4 1966171168
    %v3011 = vunpack.c.0.s8 %v3010
    %v3012 = vlaneseq
    %v3013 = vshrl.u32 %v3012, 7
    %v3014 = vsub.s32 %v3011, %v3013
    %v3015 = vrot.slane %v3005, %v3014
    %v3017 = vunpack.c.l.s4 1966171168
    %v3018 = vunpack.c.0.s8 %v3017
    %v3019 = vlaneseq
    %v3020 = vshrl.u32 %v3019, 7
    %v3021 = vsub.s32 %v3018, %v3020
    %v3022 = vrot.slane %v3006, %v3021
    %v3024 = vunpack.c.l.s4 1966171168
    %v3025 = vunpack.c.0.s8 %v3024
    %v3026 = vlaneseq
    %v3027 = vshrl.u32 %v3026, 7
    %v3028 = vsub.s32 %v3025, %v3027
    %v3029 = vrot.slane %v3007, %v3028
    %v3031 = vunpack.c.l.s4 1966171168
    %v3032 = vunpack.c.0.s8 %v3031
    %v3033 = vlaneseq
    %v3034 = vshrl.u32 %v3033, 7
    %v3035 = vsub.s32 %v3032, %v3034
    %v3036 = vrot.slane %v3008, %v3035
    %v3037 = vcombine.low %v3015, %v3022
    %v3038 = vcombine.low %v3029, %v3036
    %v3040 = vunpack.c.l.s4 1966171168
    %v3041 = vunpack.c.0.s8 %v3040
    %v3042 = vlaneseq
    %v3043 = vshrl.u32 %v3042, 7
    %v3044 = vsub.s32 %v3041, %v3043
    %v3045 = vrot.slane %v3037, %v3044
    %v3047 = vunpack.c.l.s4 1966171168
    %v3048 = vunpack.c.0.s8 %v3047
    %v3049 = vlaneseq
    %v3050 = vshrl.u32 %v3049, 7
    %v3051 = vsub.s32 %v3048, %v3050
    %v3052 = vrot.slane %v3038, %v3051
    %v3053 = vcombine.low %v3045, %v3052
    %v3054 = vcombine.low %v1509, %v1523
    %v3055 = vcombine.low %v1531, %v1533
    %v3056 = vcombine.low %v1516, %v1530
    %v3057 = vcombine.low %v1532, %v1534
    %v3059 = vunpack.c.l.s4 1966171168
    %v3060 = vunpack.c.0.s8 %v3059
    %v3061 = vlaneseq
    %v3062 = vshrl.u32 %v3061, 7
    %v3063 = vsub.s32 %v3060, %v3062
    %v3064 = vrot.slane %v3054, %v3063
    %v3066 = vunpack.c.l.s4 1966171168
    %v3067 = vunpack.c.0.s8 %v3066
    %v3068 = vlaneseq
    %v3069 = vshrl.u32 %v3068, 7
    %v3070 = vsub.s32 %v3067, %v3069
    %v3071 = vrot.slane %v3055, %v3070
    %v3073 = vunpack.c.l.s4 1966171168
    %v3074 = vunpack.c.0.s8 %v3073
    %v3075 = vlaneseq
    %v3076 = vshrl.u32 %v3075, 7
    %v3077 = vsub.s32 %v3074, %v3076
    %v3078 = vrot.slane %v3056, %v3077
    %v3080 = vunpack.c.l.s4 1966171168
    %v3081 = vunpack.c.0.s8 %v3080
    %v3082 = vlaneseq
    %v3083 = vshrl.u32 %v3082, 7
    %v3084 = vsub.s32 %v3081, %v3083
    %v3085 = vrot.slane %v3057, %v3084
    %v3086 = vcombine.low %v3064, %v3071
    %v3087 = vcombine.low %v3078, %v3085
    %v3089 = vunpack.c.l.s4 1966171168
    %v3090 = vunpack.c.0.s8 %v3089
    %v3091 = vlaneseq
    %v3092 = vshrl.u32 %v3091, 7
    %v3093 = vsub.s32 %v3090, %v3092
    %v3094 = vrot.slane %v3086, %v3093
    %v3096 = vunpack.c.l.s4 1966171168
    %v3097 = vunpack.c.0.s8 %v3096
    %v3098 = vlaneseq
    %v3099 = vshrl.u32 %v3098, 7
    %v3100 = vsub.s32 %v3097, %v3099
    %v3101 = vrot.slane %v3087, %v3100
    %v3102 = vcombine.low %v3094, %v3101
    %v3103 = vcombine.low %v1558, %v1572
    %v3104 = vcombine.low %v1580, %v1582
    %v3105 = vcombine.low %v1565, %v1579
    %v3106 = vcombine.low %v1581, %v1583
    %v3108 = vunpack.c.l.s4 1966171168
    %v3109 = vunpack.c.0.s8 %v3108
    %v3110 = vlaneseq
    %v3111 = vshrl.u32 %v3110, 7
    %v3112 = vsub.s32 %v3109, %v3111
    %v3113 = vrot.slane %v3103, %v3112
    %v3115 = vunpack.c.l.s4 1966171168
    %v3116 = vunpack.c.0.s8 %v3115
    %v3117 = vlaneseq
    %v3118 = vshrl.u32 %v3117, 7
    %v3119 = vsub.s32 %v3116, %v3118
    %v3120 = vrot.slane %v3104, %v3119
    %v3122 = vunpack.c.l.s4 1966171168
    %v3123 = vunpack.c.0.s8 %v3122
    %v3124 = vlaneseq
    %v3125 = vshrl.u32 %v3124, 7
    %v3126 = vsub.s32 %v3123, %v3125
    %v3127 = vrot.slane %v3105, %v3126
    %v3129 = vunpack.c.l.s4 1966171168
    %v3130 = vunpack.c.0.s8 %v3129
    %v3131 = vlaneseq
    %v3132 = vshrl.u32 %v3131, 7
    %v3133 = vsub.s32 %v3130, %v3132
    %v3134 = vrot.slane %v3106, %v3133
    %v3135 = vcombine.low %v3113, %v3120
    %v3136 = vcombine.low %v3127, %v3134
    %v3138 = vunpack.c.l.s4 1966171168
    %v3139 = vunpack.c.0.s8 %v3138
    %v3140 = vlaneseq
    %v3141 = vshrl.u32 %v3140, 7
    %v3142 = vsub.s32 %v3139, %v3141
    %v3143 = vrot.slane %v3135, %v3142
    %v3145 = vunpack.c.l.s4 1966171168
    %v3146 = vunpack.c.0.s8 %v3145
    %v3147 = vlaneseq
    %v3148 = vshrl.u32 %v3147, 7
    %v3149 = vsub.s32 %v3146, %v3148
    %v3150 = vrot.slane %v3136, %v3149
    %v3151 = vcombine.low %v3143, %v3150
    %v3152 = vcombine.low %v1607, %v1621
    %v3153 = vcombine.low %v1629, %v1631
    %v3154 = vcombine.low %v1614, %v1628
    %v3155 = vcombine.low %v1630, %v1632
    %v3157 = vunpack.c.l.s4 1966171168
    %v3158 = vunpack.c.0.s8 %v3157
    %v3159 = vlaneseq
    %v3160 = vshrl.u32 %v3159, 7
    %v3161 = vsub.s32 %v3158, %v3160
    %v3162 = vrot.slane %v3152, %v3161
    %v3164 = vunpack.c.l.s4 1966171168
    %v3165 = vunpack.c.0.s8 %v3164
    %v3166 = vlaneseq
    %v3167 = vshrl.u32 %v3166, 7
    %v3168 = vsub.s32 %v3165, %v3167
    %v3169 = vrot.slane %v3153, %v3168
    %v3171 = vunpack.c.l.s4 1966171168
    %v3172 = vunpack.c.0.s8 %v3171
    %v3173 = vlaneseq
    %v3174 = vshrl.u32 %v3173, 7
    %v3175 = vsub.s32 %v3172, %v3174
    %v3176 = vrot.slane %v3154, %v3175
    %v3178 = vunpack.c.l.s4 1966171168
    %v3179 = vunpack.c.0.s8 %v3178
    %v3180 = vlaneseq
    %v3181 = vshrl.u32 %v3180, 7
    %v3182 = vsub.s32 %v3179, %v3181
    %v3183 = vrot.slane %v3155, %v3182
    %v3184 = vcombine.low %v3162, %v3169
    %v3185 = vcombine.low %v3176, %v3183
    %v3187 = vunpack.c.l.s4 1966171168
    %v3188 = vunpack.c.0.s8 %v3187
    %v3189 = vlaneseq
    %v3190 = vshrl.u32 %v3189, 7
    %v3191 = vsub.s32 %v3188, %v3190
    %v3192 = vrot.slane %v3184, %v3191
    %v3194 = vunpack.c.l.s4 1966171168
    %v3195 = vunpack.c.0.s8 %v3194
    %v3196 = vlaneseq
    %v3197 = vshrl.u32 %v3196, 7
    %v3198 = vsub.s32 %v3195, %v3197
    %v3199 = vrot.slane %v3185, %v3198
    %v3200 = vcombine.low %v3192, %v3199
    %v3201 = vcombine.low %v1656, %v1670
    %v3202 = vcombine.low %v1678, %v1680
    %v3203 = vcombine.low %v1663, %v1677
    %v3204 = vcombine.low %v1679, %v1681
    %v3206 = vunpack.c.l.s4 1966171168
    %v3207 = vunpack.c.0.s8 %v3206
    %v3208 = vlaneseq
    %v3209 = vshrl.u32 %v3208, 7
    %v3210 = vsub.s32 %v3207, %v3209
    %v3211 = vrot.slane %v3201, %v3210
    %v3213 = vunpack.c.l.s4 1966171168
    %v3214 = vunpack.c.0.s8 %v3213
    %v3215 = vlaneseq
    %v3216 = vshrl.u32 %v3215, 7
    %v3217 = vsub.s32 %v3214, %v3216
    %v3218 = vrot.slane %v3202, %v3217
    %v3220 = vunpack.c.l.s4 1966171168
    %v3221 = vunpack.c.0.s8 %v3220
    %v3222 = vlaneseq
    %v3223 = vshrl.u32 %v3222, 7
    %v3224 = vsub.s32 %v3221, %v3223
    %v3225 = vrot.slane %v3203, %v3224
    %v3227 = vunpack.c.l.s4 1966171168
    %v3228 = vunpack.c.0.s8 %v3227
    %v3229 = vlaneseq
    %v3230 = vshrl.u32 %v3229, 7
    %v3231 = vsub.s32 %v3228, %v3230
    %v3232 = vrot.slane %v3204, %v3231
    %v3233 = vcombine.low %v3211, %v3218
    %v3234 = vcombine.low %v3225, %v3232
    %v3236 = vunpack.c.l.s4 1966171168
    %v3237 = vunpack.c.0.s8 %v3236
    %v3238 = vlaneseq
    %v3239 = vshrl.u32 %v3238, 7
    %v3240 = vsub.s32 %v3237, %v3239
    %v3241 = vrot.slane %v3233, %v3240
    %v3243 = vunpack.c.l.s4 1966171168
    %v3244 = vunpack.c.0.s8 %v3243
    %v3245 = vlaneseq
    %v3246 = vshrl.u32 %v3245, 7
    %v3247 = vsub.s32 %v3244, %v3246
    %v3248 = vrot.slane %v3234, %v3247
    %v3249 = vcombine.low %v3241, %v3248
    %v3250 = vcombine.low %v1705, %v1719
    %v3251 = vcombine.low %v1727, %v1729
    %v3252 = vcombine.low %v1712, %v1726
    %v3253 = vcombine.low %v1728, %v1730
    %v3255 = vunpack.c.l.s4 1966171168
    %v3256 = vunpack.c.0.s8 %v3255
    %v3257 = vlaneseq
    %v3258 = vshrl.u32 %v3257, 7
    %v3259 = vsub.s32 %v3256, %v3258
    %v3260 = vrot.slane %v3250, %v3259
    %v3262 = vunpack.c.l.s4 1966171168
    %v3263 = vunpack.c.0.s8 %v3262
    %v3264 = vlaneseq
    %v3265 = vshrl.u32 %v3264, 7
    %v3266 = vsub.s32 %v3263, %v3265
    %v3267 = vrot.slane %v3251, %v3266
    %v3269 = vunpack.c.l.s4 1966171168
    %v3270 = vunpack.c.0.s8 %v3269
    %v3271 = vlaneseq
    %v3272 = vshrl.u32 %v3271, 7
    %v3273 = vsub.s32 %v3270, %v3272
    %v3274 = vrot.slane %v3252, %v3273
    %v3276 = vunpack.c.l.s4 1966171168
    %v3277 = vunpack.c.0.s8 %v3276
    %v3278 = vlaneseq
    %v3279 = vshrl.u32 %v3278, 7
    %v3280 = vsub.s32 %v3277, %v3279
    %v3281 = vrot.slane %v3253, %v3280
    %v3282 = vcombine.low %v3260, %v3267
    %v3283 = vcombine.low %v3274, %v3281
    %v3285 = vunpack.c.l.s4 1966171168
    %v3286 = vunpack.c.0.s8 %v3285
    %v3287 = vlaneseq
    %v3288 = vshrl.u32 %v3287, 7
    %v3289 = vsub.s32 %v3286, %v3288
    %v3290 = vrot.slane %v3282, %v3289
    %v3292 = vunpack.c.l.s4 1966171168
    %v3293 = vunpack.c.0.s8 %v3292
    %v3294 = vlaneseq
    %v3295 = vshrl.u32 %v3294, 7
    %v3296 = vsub.s32 %v3293, %v3295
    %v3297 = vrot.slane %v3283, %v3296
    %v3298 = vcombine.low %v3290, %v3297
    %v3299 = vcombine.low %v1754, %v1768
    %v3300 = vcombine.low %v1776, %v1778
    %v3301 = vcombine.low %v1761, %v1775
    %v3302 = vcombine.low %v1777, %v1779
    %v3304 = vunpack.c.l.s4 1966171168
    %v3305 = vunpack.c.0.s8 %v3304
    %v3306 = vlaneseq
    %v3307 = vshrl.u32 %v3306, 7
    %v3308 = vsub.s32 %v3305, %v3307
    %v3309 = vrot.slane %v3299, %v3308
    %v3311 = vunpack.c.l.s4 1966171168
    %v3312 = vunpack.c.0.s8 %v3311
    %v3313 = vlaneseq
    %v3314 = vshrl.u32 %v3313, 7
    %v3315 = vsub.s32 %v3312, %v3314
    %v3316 = vrot.slane %v3300, %v3315
    %v3318 = vunpack.c.l.s4 1966171168
    %v3319 = vunpack.c.0.s8 %v3318
    %v3320 = vlaneseq
    %v3321 = vshrl.u32 %v3320, 7
    %v3322 = vsub.s32 %v3319, %v3321
    %v3323 = vrot.slane %v3301, %v3322
    %v3325 = vunpack.c.l.s4 1966171168
    %v3326 = vunpack.c.0.s8 %v3325
    %v3327 = vlaneseq
    %v3328 = vshrl.u32 %v3327, 7
    %v3329 = vsub.s32 %v3326, %v3328
    %v3330 = vrot.slane %v3302, %v3329
    %v3331 = vcombine.low %v3309, %v3316
    %v3332 = vcombine.low %v3323, %v3330
    %v3334 = vunpack.c.l.s4 1966171168
    %v3335 = vunpack.c.0.s8 %v3334
    %v3336 = vlaneseq
    %v3337 = vshrl.u32 %v3336, 7
    %v3338 = vsub.s32 %v3335, %v3337
    %v3339 = vrot.slane %v3331, %v3338
    %v3341 = vunpack.c.l.s4 1966171168
    %v3342 = vunpack.c.0.s8 %v3341
    %v3343 = vlaneseq
    %v3344 = vshrl.u32 %v3343, 7
    %v3345 = vsub.s32 %v3342, %v3344
    %v3346 = vrot.slane %v3332, %v3345
    %v3347 = vcombine.low %v3339, %v3346
    %v3348 = vcombine.low %v1803, %v1817
    %v3349 = vcombine.low %v1825, %v1827
    %v3350 = vcombine.low %v1810, %v1824
    %v3351 = vcombine.low %v1826, %v1828
    %v3353 = vunpack.c.l.s4 1966171168
    %v3354 = vunpack.c.0.s8 %v3353
    %v3355 = vlaneseq
    %v3356 = vshrl.u32 %v3355, 7
    %v3357 = vsub.s32 %v3354, %v3356
    %v3358 = vrot.slane %v3348, %v3357
    %v3360 = vunpack.c.l.s4 1966171168
    %v3361 = vunpack.c.0.s8 %v3360
    %v3362 = vlaneseq
    %v3363 = vshrl.u32 %v3362, 7
    %v3364 = vsub.s32 %v3361, %v3363
    %v3365 = vrot.slane %v3349, %v3364
    %v3367 = vunpack.c.l.s4 1966171168
    %v3368 = vunpack.c.0.s8 %v3367
    %v3369 = vlaneseq
    %v3370 = vshrl.u32 %v3369, 7
    %v3371 = vsub.s32 %v3368, %v3370
    %v3372 = vrot.slane %v3350, %v3371
    %v3374 = vunpack.c.l.s4 1966171168
    %v3375 = vunpack.c.0.s8 %v3374
    %v3376 = vlaneseq
    %v3377 = vshrl.u32 %v3376, 7
    %v3378 = vsub.s32 %v3375, %v3377
    %v3379 = vrot.slane %v3351, %v3378
    %v3380 = vcombine.low %v3358, %v3365
    %v3381 = vcombine.low %v3372, %v3379
    %v3383 = vunpack.c.l.s4 1966171168
    %v3384 = vunpack.c.0.s8 %v3383
    %v3385 = vlaneseq
    %v3386 = vshrl.u32 %v3385, 7
    %v3387 = vsub.s32 %v3384, %v3386
    %v3388 = vrot.slane %v3380, %v3387
    %v3390 = vunpack.c.l.s4 1966171168
    %v3391 = vunpack.c.0.s8 %v3390
    %v3392 = vlaneseq
    %v3393 = vshrl.u32 %v3392, 7
    %v3394 = vsub.s32 %v3391, %v3393
    %v3395 = vrot.slane %v3381, %v3394
    %v3396 = vcombine.low %v3388, %v3395
    %v3397 = vcombine.low %v1852, %v1866
    %v3398 = vcombine.low %v1874, %v1876
    %v3399 = vcombine.low %v1859, %v1873
    %v3400 = vcombine.low %v1875, %v1877
    %v3402 = vunpack.c.l.s4 1966171168
    %v3403 = vunpack.c.0.s8 %v3402
    %v3404 = vlaneseq
    %v3405 = vshrl.u32 %v3404, 7
    %v3406 = vsub.s32 %v3403, %v3405
    %v3407 = vrot.slane %v3397, %v3406
    %v3409 = vunpack.c.l.s4 1966171168
    %v3410 = vunpack.c.0.s8 %v3409
    %v3411 = vlaneseq
    %v3412 = vshrl.u32 %v3411, 7
    %v3413 = vsub.s32 %v3410, %v3412
    %v3414 = vrot.slane %v3398, %v3413
    %v3416 = vunpack.c.l.s4 1966171168
    %v3417 = vunpack.c.0.s8 %v3416
    %v3418 = vlaneseq
    %v3419 = vshrl.u32 %v3418, 7
    %v3420 = vsub.s32 %v3417, %v3419
    %v3421 = vrot.slane %v3399, %v3420
    %v3423 = vunpack.c.l.s4 1966171168
    %v3424 = vunpack.c.0.s8 %v3423
    %v3425 = vlaneseq
    %v3426 = vshrl.u32 %v3425, 7
    %v3427 = vsub.s32 %v3424, %v3426
    %v3428 = vrot.slane %v3400, %v3427
    %v3429 = vcombine.low %v3407, %v3414
    %v3430 = vcombine.low %v3421, %v3428
    %v3432 = vunpack.c.l.s4 1966171168
    %v3433 = vunpack.c.0.s8 %v3432
    %v3434 = vlaneseq
    %v3435 = vshrl.u32 %v3434, 7
    %v3436 = vsub.s32 %v3433, %v3435
    %v3437 = vrot.slane %v3429, %v3436
    %v3439 = vunpack.c.l.s4 1966171168
    %v3440 = vunpack.c.0.s8 %v3439
    %v3441 = vlaneseq
    %v3442 = vshrl.u32 %v3441, 7
    %v3443 = vsub.s32 %v3440, %v3442
    %v3444 = vrot.slane %v3430, %v3443
    %v3445 = vcombine.low %v3437, %v3444
    %v3446 = vcombine.low %v1901, %v1915
    %v3447 = vcombine.low %v1923, %v1925
    %v3448 = vcombine.low %v1908, %v1922
    %v3449 = vcombine.low %v1924, %v1926
    %v3451 = vunpack.c.l.s4 1966171168
    %v3452 = vunpack.c.0.s8 %v3451
    %v3453 = vlaneseq
    %v3454 = vshrl.u32 %v3453, 7
    %v3455 = vsub.s32 %v3452, %v3454
    %v3456 = vrot.slane %v3446, %v3455
    %v3458 = vunpack.c.l.s4 1966171168
    %v3459 = vunpack.c.0.s8 %v3458
    %v3460 = vlaneseq
    %v3461 = vshrl.u32 %v3460, 7
    %v3462 = vsub.s32 %v3459, %v3461
    %v3463 = vrot.slane %v3447, %v3462
    %v3465 = vunpack.c.l.s4 1966171168
    %v3466 = vunpack.c.0.s8 %v3465
    %v3467 = vlaneseq
    %v3468 = vshrl.u32 %v3467, 7
    %v3469 = vsub.s32 %v3466, %v3468
    %v3470 = vrot.slane %v3448, %v3469
    %v3472 = vunpack.c.l.s4 1966171168
    %v3473 = vunpack.c.0.s8 %v3472
    %v3474 = vlaneseq
    %v3475 = vshrl.u32 %v3474, 7
    %v3476 = vsub.s32 %v3473, %v3475
    %v3477 = vrot.slane %v3449, %v3476
    %v3478 = vcombine.low %v3456, %v3463
    %v3479 = vcombine.low %v3470, %v3477
    %v3481 = vunpack.c.l.s4 1966171168
    %v3482 = vunpack.c.0.s8 %v3481
    %v3483 = vlaneseq
    %v3484 = vshrl.u32 %v3483, 7
    %v3485 = vsub.s32 %v3482, %v3484
    %v3486 = vrot.slane %v3478, %v3485
    %v3488 = vunpack.c.l.s4 1966171168
    %v3489 = vunpack.c.0.s8 %v3488
    %v3490 = vlaneseq
    %v3491 = vshrl.u32 %v3490, 7
    %v3492 = vsub.s32 %v3489, %v3491
    %v3493 = vrot.slane %v3479, %v3492
    %v3494 = vcombine.low %v3486, %v3493
    %v3495 = vcombine.low %v1950, %v1964
    %v3496 = vcombine.low %v1972, %v1974
    %v3497 = vcombine.low %v1957, %v1971
    %v3498 = vcombine.low %v1973, %v1975
    %v3500 = vunpack.c.l.s4 1966171168
    %v3501 = vunpack.c.0.s8 %v3500
    %v3502 = vlaneseq
    %v3503 = vshrl.u32 %v3502, 7
    %v3504 = vsub.s32 %v3501, %v3503
    %v3505 = vrot.slane %v3495, %v3504
    %v3507 = vunpack.c.l.s4 1966171168
    %v3508 = vunpack.c.0.s8 %v3507
    %v3509 = vlaneseq
    %v3510 = vshrl.u32 %v3509, 7
    %v3511 = vsub.s32 %v3508, %v3510
    %v3512 = vrot.slane %v3496, %v3511
    %v3514 = vunpack.c.l.s4 1966171168
    %v3515 = vunpack.c.0.s8 %v3514
    %v3516 = vlaneseq
    %v3517 = vshrl.u32 %v3516, 7
    %v3518 = vsub.s32 %v3515, %v3517
    %v3519 = vrot.slane %v3497, %v3518
    %v3521 = vunpack.c.l.s4 1966171168
    %v3522 = vunpack.c.0.s8 %v3521
    %v3523 = vlaneseq
    %v3524 = vshrl.u32 %v3523, 7
    %v3525 = vsub.s32 %v3522, %v3524
    %v3526 = vrot.slane %v3498, %v3525
    %v3527 = vcombine.low %v3505, %v3512
    %v3528 = vcombine.low %v3519, %v3526
    %v3530 = vunpack.c.l.s4 1966171168
    %v3531 = vunpack.c.0.s8 %v3530
    %v3532 = vlaneseq
    %v3533 = vshrl.u32 %v3532, 7
    %v3534 = vsub.s32 %v3531, %v3533
    %v3535 = vrot.slane %v3527, %v3534
    %v3537 = vunpack.c.l.s4 1966171168
    %v3538 = vunpack.c.0.s8 %v3537
    %v3539 = vlaneseq
    %v3540 = vshrl.u32 %v3539, 7
    %v3541 = vsub.s32 %v3538, %v3540
    %v3542 = vrot.slane %v3528, %v3541
    %v3543 = vcombine.low %v3535, %v3542
    %v3544 = vcombine.low %v1999, %v2013
    %v3545 = vcombine.low %v2021, %v2023
    %v3546 = vcombine.low %v2006, %v2020
    %v3547 = vcombine.low %v2022, %v2024
    %v3549 = vunpack.c.l.s4 1966171168
    %v3550 = vunpack.c.0.s8 %v3549
    %v3551 = vlaneseq
    %v3552 = vshrl.u32 %v3551, 7
    %v3553 = vsub.s32 %v3550, %v3552
    %v3554 = vrot.slane %v3544, %v3553
    %v3556 = vunpack.c.l.s4 1966171168
    %v3557 = vunpack.c.0.s8 %v3556
    %v3558 = vlaneseq
    %v3559 = vshrl.u32 %v3558, 7
    %v3560 = vsub.s32 %v3557, %v3559
    %v3561 = vrot.slane %v3545, %v3560
    %v3563 = vunpack.c.l.s4 1966171168
    %v3564 = vunpack.c.0.s8 %v3563
    %v3565 = vlaneseq
    %v3566 = vshrl.u32 %v3565, 7
    %v3567 = vsub.s32 %v3564, %v3566
    %v3568 = vrot.slane %v3546, %v3567
    %v3570 = vunpack.c.l.s4 1966171168
    %v3571 = vunpack.c.0.s8 %v3570
    %v3572 = vlaneseq
    %v3573 = vshrl.u32 %v3572, 7
    %v3574 = vsub.s32 %v3571, %v3573
    %v3575 = vrot.slane %v3547, %v3574
    %v3576 = vcombine.low %v3554, %v3561
    %v3577 = vcombine.low %v3568, %v3575
    %v3579 = vunpack.c.l.s4 1966171168
    %v3580 = vunpack.c.0.s8 %v3579
    %v3581 = vlaneseq
    %v3582 = vshrl.u32 %v3581, 7
    %v3583 = vsub.s32 %v3580, %v3582
    %v3584 = vrot.slane %v3576, %v3583
    %v3586 = vunpack.c.l.s4 1966171168
    %v3587 = vunpack.c.0.s8 %v3586
    %v3588 = vlaneseq
    %v3589 = vshrl.u32 %v3588, 7
    %v3590 = vsub.s32 %v3587, %v3589
    %v3591 = vrot.slane %v3577, %v3590
    %v3592 = vcombine.low %v3584, %v3591
    %v3593 = vcombine.low %v2048, %v2062
    %v3594 = vcombine.low %v2070, %v2072
    %v3595 = vcombine.low %v2055, %v2069
    %v3596 = vcombine.low %v2071, %v2073
    %v3598 = vunpack.c.l.s4 1966171168
    %v3599 = vunpack.c.0.s8 %v3598
    %v3600 = vlaneseq
    %v3601 = vshrl.u32 %v3600, 7
    %v3602 = vsub.s32 %v3599, %v3601
    %v3603 = vrot.slane %v3593, %v3602
    %v3605 = vunpack.c.l.s4 1966171168
    %v3606 = vunpack.c.0.s8 %v3605
    %v3607 = vlaneseq
    %v3608 = vshrl.u32 %v3607, 7
    %v3609 = vsub.s32 %v3606, %v3608
    %v3610 = vrot.slane %v3594, %v3609
    %v3612 = vunpack.c.l.s4 1966171168
    %v3613 = vunpack.c.0.s8 %v3612
    %v3614 = vlaneseq
    %v3615 = vshrl.u32 %v3614, 7
    %v3616 = vsub.s32 %v3613, %v3615
    %v3617 = vrot.slane %v3595, %v3616
    %v3619 = vunpack.c.l.s4 1966171168
    %v3620 = vunpack.c.0.s8 %v3619
    %v3621 = vlaneseq
    %v3622 = vshrl.u32 %v3621, 7
    %v3623 = vsub.s32 %v3620, %v3622
    %v3624 = vrot.slane %v3596, %v3623
    %v3625 = vcombine.low %v3603, %v3610
    %v3626 = vcombine.low %v3617, %v3624
    %v3628 = vunpack.c.l.s4 1966171168
    %v3629 = vunpack.c.0.s8 %v3628
    %v3630 = vlaneseq
    %v3631 = vshrl.u32 %v3630, 7
    %v3632 = vsub.s32 %v3629, %v3631
    %v3633 = vrot.slane %v3625, %v3632
    %v3635 = vunpack.c.l.s4 1966171168
    %v3636 = vunpack.c.0.s8 %v3635
    %v3637 = vlaneseq
    %v3638 = vshrl.u32 %v3637, 7
    %v3639 = vsub.s32 %v3636, %v3638
    %v3640 = vrot.slane %v3626, %v3639
    %v3641 = vcombine.low %v3633, %v3640
    %v3642 = vcombine.low %v2097, %v2111
    %v3643 = vcombine.low %v2119, %v2121
    %v3644 = vcombine.low %v2104, %v2118
    %v3645 = vcombine.low %v2120, %v2122
    %v3647 = vunpack.c.l.s4 1966171168
    %v3648 = vunpack.c.0.s8 %v3647
    %v3649 = vlaneseq
    %v3650 = vshrl.u32 %v3649, 7
    %v3651 = vsub.s32 %v3648, %v3650
    %v3652 = vrot.slane %v3642, %v3651
    %v3654 = vunpack.c.l.s4 1966171168
    %v3655 = vunpack.c.0.s8 %v3654
    %v3656 = vlaneseq
    %v3657 = vshrl.u32 %v3656, 7
    %v3658 = vsub.s32 %v3655, %v3657
    %v3659 = vrot.slane %v3643, %v3658
    %v3661 = vunpack.c.l.s4 1966171168
    %v3662 = vunpack.c.0.s8 %v3661
    %v3663 = vlaneseq
    %v3664 = vshrl.u32 %v3663, 7
    %v3665 = vsub.s32 %v3662, %v3664
    %v3666 = vrot.slane %v3644, %v3665
    %v3668 = vunpack.c.l.s4 1966171168
    %v3669 = vunpack.c.0.s8 %v3668
    %v3670 = vlaneseq
    %v3671 = vshrl.u32 %v3670, 7
    %v3672 = vsub.s32 %v3669, %v3671
    %v3673 = vrot.slane %v3645, %v3672
    %v3674 = vcombine.low %v3652, %v3659
    %v3675 = vcombine.low %v3666, %v3673
    %v3677 = vunpack.c.l.s4 1966171168
    %v3678 = vunpack.c.0.s8 %v3677
    %v3679 = vlaneseq
    %v3680 = vshrl.u32 %v3679, 7
    %v3681 = vsub.s32 %v3678, %v3680
    %v3682 = vrot.slane %v3674, %v3681
    %v3684 = vunpack.c.l.s4 1966171168
    %v3685 = vunpack.c.0.s8 %v3684
    %v3686 = vlaneseq
    %v3687 = vshrl.u32 %v3686, 7
    %v3688 = vsub.s32 %v3685, %v3687
    %v3689 = vrot.slane %v3675, %v3688
    %v3690 = vcombine.low %v3682, %v3689
    %v3691 = vcombine.low %v2146, %v2160
    %v3692 = vcombine.low %v2168, %v2170
    %v3693 = vcombine.low %v2153, %v2167
    %v3694 = vcombine.low %v2169, %v2171
    %v3696 = vunpack.c.l.s4 1966171168
    %v3697 = vunpack.c.0.s8 %v3696
    %v3698 = vlaneseq
    %v3699 = vshrl.u32 %v3698, 7
    %v3700 = vsub.s32 %v3697, %v3699
    %v3701 = vrot.slane %v3691, %v3700
    %v3703 = vunpack.c.l.s4 1966171168
    %v3704 = vunpack.c.0.s8 %v3703
    %v3705 = vlaneseq
    %v3706 = vshrl.u32 %v3705, 7
    %v3707 = vsub.s32 %v3704, %v3706
    %v3708 = vrot.slane %v3692, %v3707
    %v3710 = vunpack.c.l.s4 1966171168
    %v3711 = vunpack.c.0.s8 %v3710
    %v3712 = vlaneseq
    %v3713 = vshrl.u32 %v3712, 7
    %v3714 = vsub.s32 %v3711, %v3713
    %v3715 = vrot.slane %v3693, %v3714
    %v3717 = vunpack.c.l.s4 1966171168
    %v3718 = vunpack.c.0.s8 %v3717
    %v3719 = vlaneseq
    %v3720 = vshrl.u32 %v3719, 7
    %v3721 = vsub.s32 %v3718, %v3720
    %v3722 = vrot.slane %v3694, %v3721
    %v3723 = vcombine.low %v3701, %v3708
    %v3724 = vcombine.low %v3715, %v3722
    %v3726 = vunpack.c.l.s4 1966171168
    %v3727 = vunpack.c.0.s8 %v3726
    %v3728 = vlaneseq
    %v3729 = vshrl.u32 %v3728, 7
    %v3730 = vsub.s32 %v3727, %v3729
    %v3731 = vrot.slane %v3723, %v3730
    %v3733 = vunpack.c.l.s4 1966171168
    %v3734 = vunpack.c.0.s8 %v3733
    %v3735 = vlaneseq
    %v3736 = vshrl.u32 %v3735, 7
    %v3737 = vsub.s32 %v3734, %v3736
    %v3738 = vrot.slane %v3724, %v3737
    %v3739 = vcombine.low %v3731, %v3738
    %v3740 = vcombine.low %v2195, %v2209
    %v3741 = vcombine.low %v2217, %v2219
    %v3742 = vcombine.low %v2202, %v2216
    %v3743 = vcombine.low %v2218, %v2220
    %v3745 = vunpack.c.l.s4 1966171168
    %v3746 = vunpack.c.0.s8 %v3745
    %v3747 = vlaneseq
    %v3748 = vshrl.u32 %v3747, 7
    %v3749 = vsub.s32 %v3746, %v3748
    %v3750 = vrot.slane %v3740, %v3749
    %v3752 = vunpack.c.l.s4 1966171168
    %v3753 = vunpack.c.0.s8 %v3752
    %v3754 = vlaneseq
    %v3755 = vshrl.u32 %v3754, 7
    %v3756 = vsub.s32 %v3753, %v3755
    %v3757 = vrot.slane %v3741, %v3756
    %v3759 = vunpack.c.l.s4 1966171168
    %v3760 = vunpack.c.0.s8 %v3759
    %v3761 = vlaneseq
    %v3762 = vshrl.u32 %v3761, 7
    %v3763 = vsub.s32 %v3760, %v3762
    %v3764 = vrot.slane %v3742, %v3763
    %v3766 = vunpack.c.l.s4 1966171168
    %v3767 = vunpack.c.0.s8 %v3766
    %v3768 = vlaneseq
    %v3769 = vshrl.u32 %v3768, 7
    %v3770 = vsub.s32 %v3767, %v3769
    %v3771 = vrot.slane %v3743, %v3770
    %v3772 = vcombine.low %v3750, %v3757
    %v3773 = vcombine.low %v3764, %v3771
    %v3775 = vunpack.c.l.s4 1966171168
    %v3776 = vunpack.c.0.s8 %v3775
    %v3777 = vlaneseq
    %v3778 = vshrl.u32 %v3777, 7
    %v3779 = vsub.s32 %v3776, %v3778
    %v3780 = vrot.slane %v3772, %v3779
    %v3782 = vunpack.c.l.s4 1966171168
    %v3783 = vunpack.c.0.s8 %v3782
    %v3784 = vlaneseq
    %v3785 = vshrl.u32 %v3784, 7
    %v3786 = vsub.s32 %v3783, %v3785
    %v3787 = vrot.slane %v3773, %v3786
    %v3788 = vcombine.low %v3780, %v3787
    %v3789 = vcombine.low %v2244, %v2258
    %v3790 = vcombine.low %v2266, %v2268
    %v3791 = vcombine.low %v2251, %v2265
    %v3792 = vcombine.low %v2267, %v2269
    %v3794 = vunpack.c.l.s4 1966171168
    %v3795 = vunpack.c.0.s8 %v3794
    %v3796 = vlaneseq
    %v3797 = vshrl.u32 %v3796, 7
    %v3798 = vsub.s32 %v3795, %v3797
    %v3799 = vrot.slane %v3789, %v3798
    %v3801 = vunpack.c.l.s4 1966171168
    %v3802 = vunpack.c.0.s8 %v3801
    %v3803 = vlaneseq
    %v3804 = vshrl.u32 %v3803, 7
    %v3805 = vsub.s32 %v3802, %v3804
    %v3806 = vrot.slane %v3790, %v3805
    %v3808 = vunpack.c.l.s4 1966171168
    %v3809 = vunpack.c.0.s8 %v3808
    %v3810 = vlaneseq
    %v3811 = vshrl.u32 %v3810, 7
    %v3812 = vsub.s32 %v3809, %v3811
    %v3813 = vrot.slane %v3791, %v3812
    %v3815 = vunpack.c.l.s4 1966171168
    %v3816 = vunpack.c.0.s8 %v3815
    %v3817 = vlaneseq
    %v3818 = vshrl.u32 %v3817, 7
    %v3819 = vsub.s32 %v3816, %v3818
    %v3820 = vrot.slane %v3792, %v3819
    %v3821 = vcombine.low %v3799, %v3806
    %v3822 = vcombine.low %v3813, %v3820
    %v3824 = vunpack.c.l.s4 1966171168
    %v3825 = vunpack.c.0.s8 %v3824
    %v3826 = vlaneseq
    %v3827 = vshrl.u32 %v3826, 7
    %v3828 = vsub.s32 %v3825, %v3827
    %v3829 = vrot.slane %v3821, %v3828
    %v3831 = vunpack.c.l.s4 1966171168
    %v3832 = vunpack.c.0.s8 %v3831
    %v3833 = vlaneseq
    %v3834 = vshrl.u32 %v3833, 7
    %v3835 = vsub.s32 %v3832, %v3834
    %v3836 = vrot.slane %v3822, %v3835
    %v3837 = vcombine.low %v3829, %v3836
    %v3838 = vcombine.low %v2293, %v2307
    %v3839 = vcombine.low %v2315, %v2317
    %v3840 = vcombine.low %v2300, %v2314
    %v3841 = vcombine.low %v2316, %v2318
    %v3843 = vunpack.c.l.s4 1966171168
    %v3844 = vunpack.c.0.s8 %v3843
    %v3845 = vlaneseq
    %v3846 = vshrl.u32 %v3845, 7
    %v3847 = vsub.s32 %v3844, %v3846
    %v3848 = vrot.slane %v3838, %v3847
    %v3850 = vunpack.c.l.s4 1966171168
    %v3851 = vunpack.c.0.s8 %v3850
    %v3852 = vlaneseq
    %v3853 = vshrl.u32 %v3852, 7
    %v3854 = vsub.s32 %v3851, %v3853
    %v3855 = vrot.slane %v3839, %v3854
    %v3857 = vunpack.c.l.s4 1966171168
    %v3858 = vunpack.c.0.s8 %v3857
    %v3859 = vlaneseq
    %v3860 = vshrl.u32 %v3859, 7
    %v3861 = vsub.s32 %v3858, %v3860
    %v3862 = vrot.slane %v3840, %v3861
    %v3864 = vunpack.c.l.s4 1966171168
    %v3865 = vunpack.c.0.s8 %v3864
    %v3866 = vlaneseq
    %v3867 = vshrl.u32 %v3866, 7
    %v3868 = vsub.s32 %v3865, %v3867
    %v3869 = vrot.slane %v3841, %v3868
    %v3870 = vcombine.low %v3848, %v3855
    %v3871 = vcombine.low %v3862, %v3869
    %v3873 = vunpack.c.l.s4 1966171168
    %v3874 = vunpack.c.0.s8 %v3873
    %v3875 = vlaneseq
    %v3876 = vshrl.u32 %v3875, 7
    %v3877 = vsub.s32 %v3874, %v3876
    %v3878 = vrot.slane %v3870, %v3877
    %v3880 = vunpack.c.l.s4 1966171168
    %v3881 = vunpack.c.0.s8 %v3880
    %v3882 = vlaneseq
    %v3883 = vshrl.u32 %v3882, 7
    %v3884 = vsub.s32 %v3881, %v3883
    %v3885 = vrot.slane %v3871, %v3884
    %v3886 = vcombine.low %v3878, %v3885
    %v3887 = vcombine.low %v2342, %v2356
    %v3888 = vcombine.low %v2364, %v2366
    %v3889 = vcombine.low %v2349, %v2363
    %v3890 = vcombine.low %v2365, %v2367
    %v3892 = vunpack.c.l.s4 1966171168
    %v3893 = vunpack.c.0.s8 %v3892
    %v3894 = vlaneseq
    %v3895 = vshrl.u32 %v3894, 7
    %v3896 = vsub.s32 %v3893, %v3895
    %v3897 = vrot.slane %v3887, %v3896
    %v3899 = vunpack.c.l.s4 1966171168
    %v3900 = vunpack.c.0.s8 %v3899
    %v3901 = vlaneseq
    %v3902 = vshrl.u32 %v3901, 7
    %v3903 = vsub.s32 %v3900, %v3902
    %v3904 = vrot.slane %v3888, %v3903
    %v3906 = vunpack.c.l.s4 1966171168
    %v3907 = vunpack.c.0.s8 %v3906
    %v3908 = vlaneseq
    %v3909 = vshrl.u32 %v3908, 7
    %v3910 = vsub.s32 %v3907, %v3909
    %v3911 = vrot.slane %v3889, %v3910
    %v3913 = vunpack.c.l.s4 1966171168
    %v3914 = vunpack.c.0.s8 %v3913
    %v3915 = vlaneseq
    %v3916 = vshrl.u32 %v3915, 7
    %v3917 = vsub.s32 %v3914, %v3916
    %v3918 = vrot.slane %v3890, %v3917
    %v3919 = vcombine.low %v3897, %v3904
    %v3920 = vcombine.low %v3911, %v3918
    %v3922 = vunpack.c.l.s4 1966171168
    %v3923 = vunpack.c.0.s8 %v3922
    %v3924 = vlaneseq
    %v3925 = vshrl.u32 %v3924, 7
    %v3926 = vsub.s32 %v3923, %v3925
    %v3927 = vrot.slane %v3919, %v3926
    %v3929 = vunpack.c.l.s4 1966171168
    %v3930 = vunpack.c.0.s8 %v3929
    %v3931 = vlaneseq
    %v3932 = vshrl.u32 %v3931, 7
    %v3933 = vsub.s32 %v3930, %v3932
    %v3934 = vrot.slane %v3920, %v3933
    %v3935 = vcombine.low %v3927, %v3934
    %v3936 = vcombine.low %v2391, %v2405
    %v3937 = vcombine.low %v2413, %v2415
    %v3938 = vcombine.low %v2398, %v2412
    %v3939 = vcombine.low %v2414, %v2416
    %v3941 = vunpack.c.l.s4 1966171168
    %v3942 = vunpack.c.0.s8 %v3941
    %v3943 = vlaneseq
    %v3944 = vshrl.u32 %v3943, 7
    %v3945 = vsub.s32 %v3942, %v3944
    %v3946 = vrot.slane %v3936, %v3945
    %v3948 = vunpack.c.l.s4 1966171168
    %v3949 = vunpack.c.0.s8 %v3948
    %v3950 = vlaneseq
    %v3951 = vshrl.u32 %v3950, 7
    %v3952 = vsub.s32 %v3949, %v3951
    %v3953 = vrot.slane %v3937, %v3952
    %v3955 = vunpack.c.l.s4 1966171168
    %v3956 = vunpack.c.0.s8 %v3955
    %v3957 = vlaneseq
    %v3958 = vshrl.u32 %v3957, 7
    %v3959 = vsub.s32 %v3956, %v3958
    %v3960 = vrot.slane %v3938, %v3959
    %v3962 = vunpack.c.l.s4 1966171168
    %v3963 = vunpack.c.0.s8 %v3962
    %v3964 = vlaneseq
    %v3965 = vshrl.u32 %v3964, 7
    %v3966 = vsub.s32 %v3963, %v3965
    %v3967 = vrot.slane %v3939, %v3966
    %v3968 = vcombine.low %v3946, %v3953
    %v3969 = vcombine.low %v3960, %v3967
    %v3971 = vunpack.c.l.s4 1966171168
    %v3972 = vunpack.c.0.s8 %v3971
    %v3973 = vlaneseq
    %v3974 = vshrl.u32 %v3973, 7
    %v3975 = vsub.s32 %v3972, %v3974
    %v3976 = vrot.slane %v3968, %v3975
    %v3978 = vunpack.c.l.s4 1966171168
    %v3979 = vunpack.c.0.s8 %v3978
    %v3980 = vlaneseq
    %v3981 = vshrl.u32 %v3980, 7
    %v3982 = vsub.s32 %v3979, %v3981
    %v3983 = vrot.slane %v3969, %v3982
    %v3984 = vcombine.low %v3976, %v3983
    %v3985 = vcombine.low %v2440, %v2454
    %v3986 = vcombine.low %v2462, %v2464
    %v3987 = vcombine.low %v2447, %v2461
    %v3988 = vcombine.low %v2463, %v2465
    %v3990 = vunpack.c.l.s4 1966171168
    %v3991 = vunpack.c.0.s8 %v3990
    %v3992 = vlaneseq
    %v3993 = vshrl.u32 %v3992, 7
    %v3994 = vsub.s32 %v3991, %v3993
    %v3995 = vrot.slane %v3985, %v3994
    %v3997 = vunpack.c.l.s4 1966171168
    %v3998 = vunpack.c.0.s8 %v3997
    %v3999 = vlaneseq
    %v4000 = vshrl.u32 %v3999, 7
    %v4001 = vsub.s32 %v3998, %v4000
    %v4002 = vrot.slane %v3986, %v4001
    %v4004 = vunpack.c.l.s4 1966171168
    %v4005 = vunpack.c.0.s8 %v4004
    %v4006 = vlaneseq
    %v4007 = vshrl.u32 %v4006, 7
    %v4008 = vsub.s32 %v4005, %v4007
    %v4009 = vrot.slane %v3987, %v4008
    %v4011 = vunpack.c.l.s4 1966171168
    %v4012 = vunpack.c.0.s8 %v4011
    %v4013 = vlaneseq
    %v4014 = vshrl.u32 %v4013, 7
    %v4015 = vsub.s32 %v4012, %v4014
    %v4016 = vrot.slane %v3988, %v4015
    %v4017 = vcombine.low %v3995, %v4002
    %v4018 = vcombine.low %v4009, %v4016
    %v4020 = vunpack.c.l.s4 1966171168
    %v4021 = vunpack.c.0.s8 %v4020
    %v4022 = vlaneseq
    %v4023 = vshrl.u32 %v4022, 7
    %v4024 = vsub.s32 %v4021, %v4023
    %v4025 = vrot.slane %v4017, %v4024
    %v4027 = vunpack.c.l.s4 1966171168
    %v4028 = vunpack.c.0.s8 %v4027
    %v4029 = vlaneseq
    %v4030 = vshrl.u32 %v4029, 7
    %v4031 = vsub.s32 %v4028, %v4030
    %v4032 = vrot.slane %v4018, %v4031
    %v4033 = vcombine.low %v4025, %v4032
    %v4034 = vcombine.low %v2489, %v2503
    %v4035 = vcombine.low %v2511, %v2513
    %v4036 = vcombine.low %v2496, %v2510
    %v4037 = vcombine.low %v2512, %v2514
    %v4039 = vunpack.c.l.s4 1966171168
    %v4040 = vunpack.c.0.s8 %v4039
    %v4041 = vlaneseq
    %v4042 = vshrl.u32 %v4041, 7
    %v4043 = vsub.s32 %v4040, %v4042
    %v4044 = vrot.slane %v4034, %v4043
    %v4046 = vunpack.c.l.s4 1966171168
    %v4047 = vunpack.c.0.s8 %v4046
    %v4048 = vlaneseq
    %v4049 = vshrl.u32 %v4048, 7
    %v4050 = vsub.s32 %v4047, %v4049
    %v4051 = vrot.slane %v4035, %v4050
    %v4053 = vunpack.c.l.s4 1966171168
    %v4054 = vunpack.c.0.s8 %v4053
    %v4055 = vlaneseq
    %v4056 = vshrl.u32 %v4055, 7
    %v4057 = vsub.s32 %v4054, %v4056
    %v4058 = vrot.slane %v4036, %v4057
    %v4060 = vunpack.c.l.s4 1966171168
    %v4061 = vunpack.c.0.s8 %v4060
    %v4062 = vlaneseq
    %v4063 = vshrl.u32 %v4062, 7
    %v4064 = vsub.s32 %v4061, %v4063
    %v4065 = vrot.slane %v4037, %v4064
    %v4066 = vcombine.low %v4044, %v4051
    %v4067 = vcombine.low %v4058, %v4065
    %v4069 = vunpack.c.l.s4 1966171168
    %v4070 = vunpack.c.0.s8 %v4069
    %v4071 = vlaneseq
    %v4072 = vshrl.u32 %v4071, 7
    %v4073 = vsub.s32 %v4070, %v4072
    %v4074 = vrot.slane %v4066, %v4073
    %v4076 = vunpack.c.l.s4 1966171168
    %v4077 = vunpack.c.0.s8 %v4076
    %v4078 = vlaneseq
    %v4079 = vshrl.u32 %v4078, 7
    %v4080 = vsub.s32 %v4077, %v4079
    %v4081 = vrot.slane %v4067, %v4080
    %v4082 = vcombine.low %v4074, %v4081
    %v4083 = vcombine.low %v2538, %v2552
    %v4084 = vcombine.low %v2560, %v2562
    %v4085 = vcombine.low %v2545, %v2559
    %v4086 = vcombine.low %v2561, %v2563
    %v4088 = vunpack.c.l.s4 1966171168
    %v4089 = vunpack.c.0.s8 %v4088
    %v4090 = vlaneseq
    %v4091 = vshrl.u32 %v4090, 7
    %v4092 = vsub.s32 %v4089, %v4091
    %v4093 = vrot.slane %v4083, %v4092
    %v4095 = vunpack.c.l.s4 1966171168
    %v4096 = vunpack.c.0.s8 %v4095
    %v4097 = vlaneseq
    %v4098 = vshrl.u32 %v4097, 7
    %v4099 = vsub.s32 %v4096, %v4098
    %v4100 = vrot.slane %v4084, %v4099
    %v4102 = vunpack.c.l.s4 1966171168
    %v4103 = vunpack.c.0.s8 %v4102
    %v4104 = vlaneseq
    %v4105 = vshrl.u32 %v4104, 7
    %v4106 = vsub.s32 %v4103, %v4105
    %v4107 = vrot.slane %v4085, %v4106
    %v4109 = vunpack.c.l.s4 1966171168
    %v4110 = vunpack.c.0.s8 %v4109
    %v4111 = vlaneseq
    %v4112 = vshrl.u32 %v4111, 7
    %v4113 = vsub.s32 %v4110, %v4112
    %v4114 = vrot.slane %v4086, %v4113
    %v4115 = vcombine.low %v4093, %v4100
    %v4116 = vcombine.low %v4107, %v4114
    %v4118 = vunpack.c.l.s4 1966171168
    %v4119 = vunpack.c.0.s8 %v4118
    %v4120 = vlaneseq
    %v4121 = vshrl.u32 %v4120, 7
    %v4122 = vsub.s32 %v4119, %v4121
    %v4123 = vrot.slane %v4115, %v4122
    %v4125 = vunpack.c.l.s4 1966171168
    %v4126 = vunpack.c.0.s8 %v4125
    %v4127 = vlaneseq
    %v4128 = vshrl.u32 %v4127, 7
    %v4129 = vsub.s32 %v4126, %v4128
    %v4130 = vrot.slane %v4116, %v4129
    %v4131 = vcombine.low %v4123, %v4130
    %v4132 = vcombine.low %v2587, %v2601
    %v4133 = vcombine.low %v2609, %v2611
    %v4134 = vcombine.low %v2594, %v2608
    %v4135 = vcombine.low %v2610, %v2612
    %v4137 = vunpack.c.l.s4 1966171168
    %v4138 = vunpack.c.0.s8 %v4137
    %v4139 = vlaneseq
    %v4140 = vshrl.u32 %v4139, 7
    %v4141 = vsub.s32 %v4138, %v4140
    %v4142 = vrot.slane %v4132, %v4141
    %v4144 = vunpack.c.l.s4 1966171168
    %v4145 = vunpack.c.0.s8 %v4144
    %v4146 = vlaneseq
    %v4147 = vshrl.u32 %v4146, 7
    %v4148 = vsub.s32 %v4145, %v4147
    %v4149 = vrot.slane %v4133, %v4148
    %v4151 = vunpack.c.l.s4 1966171168
    %v4152 = vunpack.c.0.s8 %v4151
    %v4153 = vlaneseq
    %v4154 = vshrl.u32 %v4153, 7
    %v4155 = vsub.s32 %v4152, %v4154
    %v4156 = vrot.slane %v4134, %v4155
    %v4158 = vunpack.c.l.s4 1966171168
    %v4159 = vunpack.c.0.s8 %v4158
    %v4160 = vlaneseq
    %v4161 = vshrl.u32 %v4160, 7
    %v4162 = vsub.s32 %v4159, %v4161
    %v4163 = vrot.slane %v4135, %v4162
    %v4164 = vcombine.low %v4142, %v4149
    %v4165 = vcombine.low %v4156, %v4163
    %v4167 = vunpack.c.l.s4 1966171168
    %v4168 = vunpack.c.0.s8 %v4167
    %v4169 = vlaneseq
    %v4170 = vshrl.u32 %v4169, 7
    %v4171 = vsub.s32 %v4168, %v4170
    %v4172 = vrot.slane %v4164, %v4171
    %v4174 = vunpack.c.l.s4 1966171168
    %v4175 = vunpack.c.0.s8 %v4174
    %v4176 = vlaneseq
    %v4177 = vshrl.u32 %v4176, 7
    %v4178 = vsub.s32 %v4175, %v4177
    %v4179 = vrot.slane %v4165, %v4178
    %v4180 = vcombine.low %v4172, %v4179
    %v4181 = vcombine.low %v2636, %v2650
    %v4182 = vcombine.low %v2658, %v2660
    %v4183 = vcombine.low %v2643, %v2657
    %v4184 = vcombine.low %v2659, %v2661
    %v4186 = vunpack.c.l.s4 1966171168
    %v4187 = vunpack.c.0.s8 %v4186
    %v4188 = vlaneseq
    %v4189 = vshrl.u32 %v4188, 7
    %v4190 = vsub.s32 %v4187, %v4189
    %v4191 = vrot.slane %v4181, %v4190
    %v4193 = vunpack.c.l.s4 1966171168
    %v4194 = vunpack.c.0.s8 %v4193
    %v4195 = vlaneseq
    %v4196 = vshrl.u32 %v4195, 7
    %v4197 = vsub.s32 %v4194, %v4196
    %v4198 = vrot.slane %v4182, %v4197
    %v4200 = vunpack.c.l.s4 1966171168
    %v4201 = vunpack.c.0.s8 %v4200
    %v4202 = vlaneseq
    %v4203 = vshrl.u32 %v4202, 7
    %v4204 = vsub.s32 %v4201, %v4203
    %v4205 = vrot.slane %v4183, %v4204
    %v4207 = vunpack.c.l.s4 1966171168
    %v4208 = vunpack.c.0.s8 %v4207
    %v4209 = vlaneseq
    %v4210 = vshrl.u32 %v4209, 7
    %v4211 = vsub.s32 %v4208, %v4210
    %v4212 = vrot.slane %v4184, %v4211
    %v4213 = vcombine.low %v4191, %v4198
    %v4214 = vcombine.low %v4205, %v4212
    %v4216 = vunpack.c.l.s4 1966171168
    %v4217 = vunpack.c.0.s8 %v4216
    %v4218 = vlaneseq
    %v4219 = vshrl.u32 %v4218, 7
    %v4220 = vsub.s32 %v4217, %v4219
    %v4221 = vrot.slane %v4213, %v4220
    %v4223 = vunpack.c.l.s4 1966171168
    %v4224 = vunpack.c.0.s8 %v4223
    %v4225 = vlaneseq
    %v4226 = vshrl.u32 %v4225, 7
    %v4227 = vsub.s32 %v4224, %v4226
    %v4228 = vrot.slane %v4214, %v4227
    %v4229 = vcombine.low %v4221, %v4228
    %v4230 = vcombine.low %v2685, %v2699
    %v4231 = vcombine.low %v2707, %v2709
    %v4232 = vcombine.low %v2692, %v2706
    %v4233 = vcombine.low %v2708, %v2710
    %v4235 = vunpack.c.l.s4 1966171168
    %v4236 = vunpack.c.0.s8 %v4235
    %v4237 = vlaneseq
    %v4238 = vshrl.u32 %v4237, 7
    %v4239 = vsub.s32 %v4236, %v4238
    %v4240 = vrot.slane %v4230, %v4239
    %v4242 = vunpack.c.l.s4 1966171168
    %v4243 = vunpack.c.0.s8 %v4242
    %v4244 = vlaneseq
    %v4245 = vshrl.u32 %v4244, 7
    %v4246 = vsub.s32 %v4243, %v4245
    %v4247 = vrot.slane %v4231, %v4246
    %v4249 = vunpack.c.l.s4 1966171168
    %v4250 = vunpack.c.0.s8 %v4249
    %v4251 = vlaneseq
    %v4252 = vshrl.u32 %v4251, 7
    %v4253 = vsub.s32 %v4250, %v4252
    %v4254 = vrot.slane %v4232, %v4253
    %v4256 = vunpack.c.l.s4 1966171168
    %v4257 = vunpack.c.0.s8 %v4256
    %v4258 = vlaneseq
    %v4259 = vshrl.u32 %v4258, 7
    %v4260 = vsub.s32 %v4257, %v4259
    %v4261 = vrot.slane %v4233, %v4260
    %v4262 = vcombine.low %v4240, %v4247
    %v4263 = vcombine.low %v4254, %v4261
    %v4265 = vunpack.c.l.s4 1966171168
    %v4266 = vunpack.c.0.s8 %v4265
    %v4267 = vlaneseq
    %v4268 = vshrl.u32 %v4267, 7
    %v4269 = vsub.s32 %v4266, %v4268
    %v4270 = vrot.slane %v4262, %v4269
    %v4272 = vunpack.c.l.s4 1966171168
    %v4273 = vunpack.c.0.s8 %v4272
    %v4274 = vlaneseq
    %v4275 = vshrl.u32 %v4274, 7
    %v4276 = vsub.s32 %v4273, %v4275
    %v4277 = vrot.slane %v4263, %v4276
    %v4278 = vcombine.low %v4270, %v4277
    %v4279 = vcombine.low %v2734, %v2748
    %v4280 = vcombine.low %v2756, %v2758
    %v4281 = vcombine.low %v2741, %v2755
    %v4282 = vcombine.low %v2757, %v2759
    %v4284 = vunpack.c.l.s4 1966171168
    %v4285 = vunpack.c.0.s8 %v4284
    %v4286 = vlaneseq
    %v4287 = vshrl.u32 %v4286, 7
    %v4288 = vsub.s32 %v4285, %v4287
    %v4289 = vrot.slane %v4279, %v4288
    %v4291 = vunpack.c.l.s4 1966171168
    %v4292 = vunpack.c.0.s8 %v4291
    %v4293 = vlaneseq
    %v4294 = vshrl.u32 %v4293, 7
    %v4295 = vsub.s32 %v4292, %v4294
    %v4296 = vrot.slane %v4280, %v4295
    %v4298 = vunpack.c.l.s4 1966171168
    %v4299 = vunpack.c.0.s8 %v4298
    %v4300 = vlaneseq
    %v4301 = vshrl.u32 %v4300, 7
    %v4302 = vsub.s32 %v4299, %v4301
    %v4303 = vrot.slane %v4281, %v4302
    %v4305 = vunpack.c.l.s4 1966171168
    %v4306 = vunpack.c.0.s8 %v4305
    %v4307 = vlaneseq
    %v4308 = vshrl.u32 %v4307, 7
    %v4309 = vsub.s32 %v4306, %v4308
    %v4310 = vrot.slane %v4282, %v4309
    %v4311 = vcombine.low %v4289, %v4296
    %v4312 = vcombine.low %v4303, %v4310
    %v4314 = vunpack.c.l.s4 1966171168
    %v4315 = vunpack.c.0.s8 %v4314
    %v4316 = vlaneseq
    %v4317 = vshrl.u32 %v4316, 7
    %v4318 = vsub.s32 %v4315, %v4317
    %v4319 = vrot.slane %v4311, %v4318
    %v4321 = vunpack.c.l.s4 1966171168
    %v4322 = vunpack.c.0.s8 %v4321
    %v4323 = vlaneseq
    %v4324 = vshrl.u32 %v4323, 7
    %v4325 = vsub.s32 %v4322, %v4324
    %v4326 = vrot.slane %v4312, %v4325
    %v4327 = vcombine.low %v4319, %v4326
    %v4328 = vcombine.low %v2783, %v2797
    %v4329 = vcombine.low %v2805, %v2807
    %v4330 = vcombine.low %v2790, %v2804
    %v4331 = vcombine.low %v2806, %v2808
    %v4333 = vunpack.c.l.s4 1966171168
    %v4334 = vunpack.c.0.s8 %v4333
    %v4335 = vlaneseq
    %v4336 = vshrl.u32 %v4335, 7
    %v4337 = vsub.s32 %v4334, %v4336
    %v4338 = vrot.slane %v4328, %v4337
    %v4340 = vunpack.c.l.s4 1966171168
    %v4341 = vunpack.c.0.s8 %v4340
    %v4342 = vlaneseq
    %v4343 = vshrl.u32 %v4342, 7
    %v4344 = vsub.s32 %v4341, %v4343
    %v4345 = vrot.slane %v4329, %v4344
    %v4347 = vunpack.c.l.s4 1966171168
    %v4348 = vunpack.c.0.s8 %v4347
    %v4349 = vlaneseq
    %v4350 = vshrl.u32 %v4349, 7
    %v4351 = vsub.s32 %v4348, %v4350
    %v4352 = vrot.slane %v4330, %v4351
    %v4354 = vunpack.c.l.s4 1966171168
    %v4355 = vunpack.c.0.s8 %v4354
    %v4356 = vlaneseq
    %v4357 = vshrl.u32 %v4356, 7
    %v4358 = vsub.s32 %v4355, %v4357
    %v4359 = vrot.slane %v4331, %v4358
    %v4360 = vcombine.low %v4338, %v4345
    %v4361 = vcombine.low %v4352, %v4359
    %v4363 = vunpack.c.l.s4 1966171168
    %v4364 = vunpack.c.0.s8 %v4363
    %v4365 = vlaneseq
    %v4366 = vshrl.u32 %v4365, 7
    %v4367 = vsub.s32 %v4364, %v4366
    %v4368 = vrot.slane %v4360, %v4367
    %v4370 = vunpack.c.l.s4 1966171168
    %v4371 = vunpack.c.0.s8 %v4370
    %v4372 = vlaneseq
    %v4373 = vshrl.u32 %v4372, 7
    %v4374 = vsub.s32 %v4371, %v4373
    %v4375 = vrot.slane %v4361, %v4374
    %v4376 = vcombine.low %v4368, %v4375
    %4377 = vset.pattern.permute.xlu0 0
    %4378 = vperm.xlu0 %4377, %v2857
    %v4379 = vpop.permute.xlu0 %4378
    %4380 = vset.pattern.permute.xlu0 0
    %4381 = vperm.xlu0 %4380, %v2906
    %v4382 = vpop.permute.xlu0 %4381
    %4383 = vset.pattern.permute.xlu0 0
    %4384 = vperm.xlu0 %4383, %v2955
    %v4385 = vpop.permute.xlu0 %4384
    %4386 = vset.pattern.permute.xlu0 0
    %4387 = vperm.xlu0 %4386, %v3004
    %v4388 = vpop.permute.xlu0 %4387
    %4389 = vset.pattern.permute.xlu0 0
    %4390 = vperm.xlu0 %4389, %v3053
    %v4391 = vpop.permute.xlu0 %4390
    %4392 = vset.pattern.permute.xlu0 0
    %4393 = vperm.xlu0 %4392, %v3102
    %v4394 = vpop.permute.xlu0 %4393
    %4395 = vset.pattern.permute.xlu0 0
    %4396 = vperm.xlu0 %4395, %v3151
    %v4397 = vpop.permute.xlu0 %4396
    %4398 = vset.pattern.permute.xlu0 0
    %4399 = vperm.xlu0 %4398, %v3200
    %v4400 = vpop.permute.xlu0 %4399
    %4401 = vset.pattern.permute.xlu0 0
    %4402 = vperm.xlu0 %4401, %v3249
    %v4403 = vpop.permute.xlu0 %4402
    %4404 = vset.pattern.permute.xlu0 0
    %4405 = vperm.xlu0 %4404, %v3298
    %v4406 = vpop.permute.xlu0 %4405
    %4407 = vset.pattern.permute.xlu0 0
    %4408 = vperm.xlu0 %4407, %v3347
    %v4409 = vpop.permute.xlu0 %4408
    %4410 = vset.pattern.permute.xlu0 0
    %4411 = vperm.xlu0 %4410, %v3396
    %v4412 = vpop.permute.xlu0 %4411
    %4413 = vset.pattern.permute.xlu0 0
    %4414 = vperm.xlu0 %4413, %v3445
    %v4415 = vpop.permute.xlu0 %4414
    %4416 = vset.pattern.permute.xlu0 0
    %4417 = vperm.xlu0 %4416, %v3494
    %v4418 = vpop.permute.xlu0 %4417
    %4419 = vset.pattern.permute.xlu0 0
    %4420 = vperm.xlu0 %4419, %v3543
    %v4421 = vpop.permute.xlu0 %4420
    %4422 = vset.pattern.permute.xlu0 0
    %4423 = vperm.xlu0 %4422, %v3592
    %v4424 = vpop.permute.xlu0 %4423
    %4425 = vset.pattern.permute.xlu0 0
    %4426 = vperm.xlu0 %4425, %v3641
    %v4427 = vpop.permute.xlu0 %4426
    %4428 = vset.pattern.permute.xlu0 0
    %4429 = vperm.xlu0 %4428, %v3690
    %v4430 = vpop.permute.xlu0 %4429
    %4431 = vset.pattern.permute.xlu0 0
    %4432 = vperm.xlu0 %4431, %v3739
    %v4433 = vpop.permute.xlu0 %4432
    %4434 = vset.pattern.permute.xlu0 0
    %4435 = vperm.xlu0 %4434, %v3788
    %v4436 = vpop.permute.xlu0 %4435
    %4437 = vset.pattern.permute.xlu0 0
    %4438 = vperm.xlu0 %4437, %v3837
    %v4439 = vpop.permute.xlu0 %4438
    %4440 = vset.pattern.permute.xlu0 0
    %4441 = vperm.xlu0 %4440, %v3886
    %v4442 = vpop.permute.xlu0 %4441
    %4443 = vset.pattern.permute.xlu0 0
    %4444 = vperm.xlu0 %4443, %v3935
    %v4445 = vpop.permute.xlu0 %4444
    %4446 = vset.pattern.permute.xlu0 0
    %4447 = vperm.xlu0 %4446, %v3984
    %v4448 = vpop.permute.xlu0 %4447
    %4449 = vset.pattern.permute.xlu0 0
    %4450 = vperm.xlu0 %4449, %v4033
    %v4451 = vpop.permute.xlu0 %4450
    %4452 = vset.pattern.permute.xlu0 0
    %4453 = vperm.xlu0 %4452, %v4082
    %v4454 = vpop.permute.xlu0 %4453
    %4455 = vset.pattern.permute.xlu0 0
    %4456 = vperm.xlu0 %4455, %v4131
    %v4457 = vpop.permute.xlu0 %4456
    %4458 = vset.pattern.permute.xlu0 0
    %4459 = vperm.xlu0 %4458, %v4180
    %v4460 = vpop.permute.xlu0 %4459
    %4461 = vset.pattern.permute.xlu0 0
    %4462 = vperm.xlu0 %4461, %v4229
    %v4463 = vpop.permute.xlu0 %4462
    %4464 = vset.pattern.permute.xlu0 0
    %4465 = vperm.xlu0 %4464, %v4278
    %v4466 = vpop.permute.xlu0 %4465
    %4467 = vset.pattern.permute.xlu0 0
    %4468 = vperm.xlu0 %4467, %v4327
    %v4469 = vpop.permute.xlu0 %4468
    %4470 = vset.pattern.permute.xlu0 0
    %4471 = vperm.xlu0 %4470, %v4376
    %v4472 = vpop.permute.xlu0 %4471
    %v4473 = vlaneseq
    %v4474 = vand.u32 %v4473, 127
    %v4475 = vlaneseq
    %v4476 = vshrl.u32 %v4475, 7
    %v4477 = vsub.s32 %v4474, %v4476
    %v4478 = vrot.slane %v4379, %v4477
    %v4479 = vadd.s32 %v4474, 4294967288
    %v4480 = vlaneseq
    %v4481 = vshrl.u32 %v4480, 7
    %v4482 = vsub.s32 %v4479, %v4481
    %v4483 = vrot.slane %v4382, %v4482
    %vm4484 = vcmask 130112
    %v4485 = vsel %vm4484, %v4483, %v4478
    %v4486 = vadd.s32 %v4474, 4294967280
    %v4487 = vlaneseq
    %v4488 = vshrl.u32 %v4487, 7
    %v4489 = vsub.s32 %v4486, %v4488
    %v4490 = vrot.slane %v4385, %v4489
    %vm4491 = vcmask 195712
    %v4492 = vsel %vm4491, %v4490, %v4485
    %v4493 = vadd.s32 %v4474, 4294967272
    %v4494 = vlaneseq
    %v4495 = vshrl.u32 %v4494, 7
    %v4496 = vsub.s32 %v4493, %v4495
    %v4497 = vrot.slane %v4388, %v4496
    %vm4498 = vcmask 261312
    %v4499 = vsel %vm4498, %v4497, %v4492
    %v4500 = vadd.s32 %v4474, 4294967264
    %v4501 = vlaneseq
    %v4502 = vshrl.u32 %v4501, 7
    %v4503 = vsub.s32 %v4500, %v4502
    %v4504 = vrot.slane %v4391, %v4503
    %vm4505 = vcmask 326912
    %v4506 = vsel %vm4505, %v4504, %v4499
    %v4507 = vadd.s32 %v4474, 4294967256
    %v4508 = vlaneseq
    %v4509 = vshrl.u32 %v4508, 7
    %v4510 = vsub.s32 %v4507, %v4509
    %v4511 = vrot.slane %v4394, %v4510
    %vm4512 = vcmask 392512
    %v4513 = vsel %vm4512, %v4511, %v4506
    %v4514 = vadd.s32 %v4474, 4294967248
    %v4515 = vlaneseq
    %v4516 = vshrl.u32 %v4515, 7
    %v4517 = vsub.s32 %v4514, %v4516
    %v4518 = vrot.slane %v4397, %v4517
    %vm4519 = vcmask 458112
    %v4520 = vsel %vm4519, %v4518, %v4513
    %v4521 = vadd.s32 %v4474, 4294967240
    %v4522 = vlaneseq
    %v4523 = vshrl.u32 %v4522, 7
    %v4524 = vsub.s32 %v4521, %v4523
    %v4525 = vrot.slane %v4400, %v4524
    %vm4526 = vcmask 523712
    %v4527 = vsel %vm4526, %v4525, %v4520
    %v4528 = vadd.s32 %v4474, 4294967232
    %v4529 = vlaneseq
    %v4530 = vshrl.u32 %v4529, 7
    %v4531 = vsub.s32 %v4528, %v4530
    %v4532 = vrot.slane %v4403, %v4531
    %vm4533 = vcmask 589312
    %v4534 = vsel %vm4533, %v4532, %v4527
    %v4535 = vadd.s32 %v4474, 4294967224
    %v4536 = vlaneseq
    %v4537 = vshrl.u32 %v4536, 7
    %v4538 = vsub.s32 %v4535, %v4537
    %v4539 = vrot.slane %v4406, %v4538
    %vm4540 = vcmask 654912
    %v4541 = vsel %vm4540, %v4539, %v4534
    %v4542 = vadd.s32 %v4474, 4294967216
    %v4543 = vlaneseq
    %v4544 = vshrl.u32 %v4543, 7
    %v4545 = vsub.s32 %v4542, %v4544
    %v4546 = vrot.slane %v4409, %v4545
    %vm4547 = vcmask 720512
    %v4548 = vsel %vm4547, %v4546, %v4541
    %v4549 = vadd.s32 %v4474, 4294967208
    %v4550 = vlaneseq
    %v4551 = vshrl.u32 %v4550, 7
    %v4552 = vsub.s32 %v4549, %v4551
    %v4553 = vrot.slane %v4412, %v4552
    %vm4554 = vcmask 786112
    %v4555 = vsel %vm4554, %v4553, %v4548
    %v4556 = vadd.s32 %v4474, 4294967200
    %v4557 = vlaneseq
    %v4558 = vshrl.u32 %v4557, 7
    %v4559 = vsub.s32 %v4556, %v4558
    %v4560 = vrot.slane %v4415, %v4559
    %vm4561 = vcmask 851712
    %v4562 = vsel %vm4561, %v4560, %v4555
    %v4563 = vadd.s32 %v4474, 4294967192
    %v4564 = vlaneseq
    %v4565 = vshrl.u32 %v4564, 7
    %v4566 = vsub.s32 %v4563, %v4565
    %v4567 = vrot.slane %v4418, %v4566
    %vm4568 = vcmask 917312
    %v4569 = vsel %vm4568, %v4567, %v4562
    %v4570 = vadd.s32 %v4474, 4294967184
    %v4571 = vlaneseq
    %v4572 = vshrl.u32 %v4571, 7
    %v4573 = vsub.s32 %v4570, %v4572
    %v4574 = vrot.slane %v4421, %v4573
    %vm4575 = vcmask 982912
    %v4576 = vsel %vm4575, %v4574, %v4569
    %v4577 = vadd.s32 %v4474, 4294967176
    %v4578 = vlaneseq
    %v4579 = vshrl.u32 %v4578, 7
    %v4580 = vsub.s32 %v4577, %v4579
    %v4581 = vrot.slane %v4424, %v4580
    %vm4582 = vcmask 1048512
    %v4583 = vsel %vm4582, %v4581, %v4576
    %v4584 = vlaneseq
    %v4585 = vshrl.u32 %v4584, 7
    %v4586 = vsub.s32 %v4474, %v4585
    %v4587 = vrot.slane %v4427, %v4586
    %v4588 = vlaneseq
    %v4589 = vshrl.u32 %v4588, 7
    %v4590 = vsub.s32 %v4479, %v4589
    %v4591 = vrot.slane %v4430, %v4590
    %v4592 = vsel %vm4484, %v4591, %v4587
    %v4593 = vlaneseq
    %v4594 = vshrl.u32 %v4593, 7
    %v4595 = vsub.s32 %v4486, %v4594
    %v4596 = vrot.slane %v4433, %v4595
    %v4597 = vsel %vm4491, %v4596, %v4592
    %v4598 = vlaneseq
    %v4599 = vshrl.u32 %v4598, 7
    %v4600 = vsub.s32 %v4493, %v4599
    %v4601 = vrot.slane %v4436, %v4600
    %v4602 = vsel %vm4498, %v4601, %v4597
    %v4603 = vlaneseq
    %v4604 = vshrl.u32 %v4603, 7
    %v4605 = vsub.s32 %v4500, %v4604
    %v4606 = vrot.slane %v4439, %v4605
    %v4607 = vsel %vm4505, %v4606, %v4602
    %v4608 = vlaneseq
    %v4609 = vshrl.u32 %v4608, 7
    %v4610 = vsub.s32 %v4507, %v4609
    %v4611 = vrot.slane %v4442, %v4610
    %v4612 = vsel %vm4512, %v4611, %v4607
    %v4613 = vlaneseq
    %v4614 = vshrl.u32 %v4613, 7
    %v4615 = vsub.s32 %v4514, %v4614
    %v4616 = vrot.slane %v4445, %v4615
    %v4617 = vsel %vm4519, %v4616, %v4612
    %v4618 = vlaneseq
    %v4619 = vshrl.u32 %v4618, 7
    %v4620 = vsub.s32 %v4521, %v4619
    %v4621 = vrot.slane %v4448, %v4620
    %v4622 = vsel %vm4526, %v4621, %v4617
    %v4623 = vlaneseq
    %v4624 = vshrl.u32 %v4623, 7
    %v4625 = vsub.s32 %v4528, %v4624
    %v4626 = vrot.slane %v4451, %v4625
    %v4627 = vsel %vm4533, %v4626, %v4622
    %v4628 = vlaneseq
    %v4629 = vshrl.u32 %v4628, 7
    %v4630 = vsub.s32 %v4535, %v4629
    %v4631 = vrot.slane %v4454, %v4630
    %v4632 = vsel %vm4540, %v4631, %v4627
    %v4633 = vlaneseq
    %v4634 = vshrl.u32 %v4633, 7
    %v4635 = vsub.s32 %v4542, %v4634
    %v4636 = vrot.slane %v4457, %v4635
    %v4637 = vsel %vm4547, %v4636, %v4632
    %v4638 = vlaneseq
    %v4639 = vshrl.u32 %v4638, 7
    %v4640 = vsub.s32 %v4549, %v4639
    %v4641 = vrot.slane %v4460, %v4640
    %v4642 = vsel %vm4554, %v4641, %v4637
    %v4643 = vlaneseq
    %v4644 = vshrl.u32 %v4643, 7
    %v4645 = vsub.s32 %v4556, %v4644
    %v4646 = vrot.slane %v4463, %v4645
    %v4647 = vsel %vm4561, %v4646, %v4642
    %v4648 = vlaneseq
    %v4649 = vshrl.u32 %v4648, 7
    %v4650 = vsub.s32 %v4563, %v4649
    %v4651 = vrot.slane %v4466, %v4650
    %v4652 = vsel %vm4568, %v4651, %v4647
    %v4653 = vlaneseq
    %v4654 = vshrl.u32 %v4653, 7
    %v4655 = vsub.s32 %v4570, %v4654
    %v4656 = vrot.slane %v4469, %v4655
    %v4657 = vsel %vm4575, %v4656, %v4652
    %v4658 = vlaneseq
    %v4659 = vshrl.u32 %v4658, 7
    %v4660 = vsub.s32 %v4577, %v4659
    %v4661 = vrot.slane %v4472, %v4660
    %v4662 = vsel %vm4582, %v4661, %v4657
    %v4663 = vcombine.low %v4583, %v4662
    %v4665 = vunpack.c.l.s4 1966171168
    %v4666 = vunpack.c.0.s8 %v4665
    %v4667 = vlaneseq
    %v4668 = vshrl.u32 %v4667, 7
    %v4669 = vsub.s32 %v4666, %v4668
    %v4670 = vrot.slane %v4663, %v4669
    %v4672 = vunpack.c.l.s4 1966171168
    %v4673 = vunpack.c.0.s8 %v4672
    %v4674 = vlaneseq
    %v4675 = vshrl.u32 %v4674, 7
    %v4676 = vsub.s32 %v4673, %v4675
    %v4677 = vrot.slane %v4670, %v4676
    %v4679 = vlaneseq
    %vm4680 = vcmp.ge.s32.totalorder %v4679, 0
    %vm4681 = vcmp.lt.s32.totalorder %v4679, 256
    %vm4682 = vmand %vm4680, %vm4681
    %4683 = vst.msk [vmem:[#allocation5] sm:$0x3] %vm4682, %v4677
    // Predicated region
    $region22: #{tpu_custom_call.1} parent=1 // pred_check
      _
    $region23: #{tpu_custom_call.1} parent=1 // pred_check_branch
      %4685 = sbr.rel (0) target = $region25
    $region24: #{tpu_custom_call.1} parent=1 // pred_region
      %s4687 = ssub.s32 32, 32
      %4688 = vsyncadd [#allocation4], %s4687
      %s4690 = sshll.u32 [#allocation5], 4
      %s4691 = int_to_ptr.vmem [resolvable:$true] %s4690
      %4693 = dma.vmem_to_hbm [thread:$0]  %s4691, 32, %s4, [#allocation4]
    $region25: #{tpu_custom_call.1} parent=1 // pred_fallthru
      _
    // Predicated region
    $region26: #{tpu_custom_call.1} parent=1 // pred_check
      _
    $region27: #{tpu_custom_call.1} parent=1 // pred_check_branch
      %4695 = sbr.rel (0) target = $region29
    $region28: #{tpu_custom_call.1} parent=1 // pred_region
      %4696 = dma.done [#allocation4], 32
    $region29: #{tpu_custom_call.1} parent=1 // pred_fallthru
      _
    %4697 = vsyncpa [#allocation3], 1
    %4698 = vsyncpa [#allocation4], 1

</llo_original>
